<compile_context>
chip_gen: v5e
topology: v5e:2x2
jax: 0.10.0
libtpu: 0.0.40
codegen_flags: <defaults>
</compile_context>

<pallas_src>
import functools

import jax
import jax.numpy as jnp
from jax.experimental import pallas as pl
from jax.experimental.pallas import tpu as pltpu


def _round_up(x, m):
    return (x + m - 1) // m * m


# ----------------------------------------------------------------------------
# Kernel 1: row-tiled matmul (used for the im2col'd 7x7 / stride-2 stem conv).
# ----------------------------------------------------------------------------
def _matmul_kernel(p_ref, w_ref, o_ref):
    o_ref[...] = jnp.dot(p_ref[...], w_ref[...],
                         preferred_element_type=jnp.float32).astype(o_ref.dtype)


def conv7x7_s2(x, w, *, compute_dtype=jnp.float32):
    """x: [B, H, W, 3]; w: [7, 7, 3, 64] (HWIO); stride 2, pad 3, no bias."""
    B, H, W, Cin = x.shape
    K = w.shape[0]
    Cout = w.shape[-1]
    stride, pad = 2, 3
    Ho = (H + 2 * pad - K) // stride + 1
    Wo = (W + 2 * pad - K) // stride + 1

    xp = jnp.pad(x, ((0, 0), (pad, pad), (pad, pad), (0, 0)))
    # im2col: feature index = (dy*K + dx)*Cin + c -> matches w.reshape(K*K*Cin, Cout).
    cols = []
    for dy in range(K):
        for dx in range(K):
            cols.append(xp[:, dy:dy + stride * Ho:stride,
                            dx:dx + stride * Wo:stride, :])
    patches = jnp.concatenate(cols, axis=-1).reshape(B * Ho * Wo, K * K * Cin)
    wcol = w.reshape(K * K * Cin, Cout)

    M, Kdim = patches.shape
    TM = 256 if M >= 256 else _round_up(M, 8)     # row tile; weights stay resident
    Mpad = _round_up(M, TM)
    if Mpad != M:
        patches = jnp.pad(patches, ((0, Mpad - M), (0, 0)))
    patches = patches.astype(compute_dtype)
    wcol = wcol.astype(compute_dtype)

    cost = pl.CostEstimate(
        flops=2 * M * Kdim * Cout, transcendentals=0,
        bytes_accessed=4 * (M * Kdim + Kdim * Cout + M * Cout))

    out = pl.pallas_call(
        _matmul_kernel,
        out_shape=jax.ShapeDtypeStruct((Mpad, Cout), x.dtype),
        grid_spec=pltpu.PrefetchScalarGridSpec(
            num_scalar_prefetch=0,
            grid=(Mpad // TM,),
            in_specs=[
                pl.BlockSpec((TM, Kdim), lambda i: (i, 0)),
                pl.BlockSpec((Kdim, Cout), lambda i: (0, 0)),   # weights resident
            ],
            out_specs=pl.BlockSpec((TM, Cout), lambda i: (i, 0)),
        ),
        compiler_params=pltpu.CompilerParams(
            dimension_semantics=("parallel",)),
        cost_estimate=cost,
    )(patches, wcol)
    return out[:M].reshape(B, Ho, Wo, Cout)


# ----------------------------------------------------------------------------
# Kernel 2: 3x3 conv (stride 1, pad 1) + folded-BN affine + optional residual
#           + optional ReLU.  Conv is done as 9 shifted-window matmuls per image.
# ----------------------------------------------------------------------------
def _conv3x3_block_kernel(*refs, H, W, relu, add_residual):
    if add_residual:
        xp_ref, w_ref, s_ref, b_ref, r_ref, o_ref = refs
    else:
        xp_ref, w_ref, s_ref, b_ref, o_ref = refs
        r_ref = None
    C = xp_ref.shape[-1]
    Co = o_ref.shape[-1]
    acc = jnp.zeros((H * W, Co), dtype=jnp.float32)
    for t in range(9):                                  # unrolled: 9 MXU matmuls, f32 acc
        dy, dx = t // 3, t % 3
        patch = xp_ref[dy:dy + H, dx:dx + W, :]         # [H, W, C] shifted window
        acc = acc + jnp.dot(patch.reshape(H * W, C), w_ref[t],
                            preferred_element_type=jnp.float32)
    y = acc * s_ref[...] + b_ref[...]                   # folded BatchNorm (inference)
    if add_residual:
        y = y + r_ref[...].astype(jnp.float32)
    if relu:
        y = jnp.maximum(y, 0.0)
    o_ref[...] = y.astype(o_ref.dtype)


def conv3x3_bn_act(x, w, scale, bias, *, relu=True, residual=None,
                   compute_dtype=jnp.float32):
    """x: [B, H, W, C]; w: [3, 3, C, Co] (HWIO); scale/bias: [Co] (folded BN)."""
    B, H, W, C = x.shape
    Co = w.shape[-1]
    HW = H * W

    xp = jnp.pad(x, ((0, 0), (1, 1), (1, 1), (0, 0))).astype(compute_dtype)
    Hp, Wp = H + 2, W + 2
    w9 = w.reshape(9, C, Co).astype(compute_dtype)       # tap index t = dy*3 + dx
    s2 = scale.reshape(1, Co).astype(jnp.float32)
    b2 = bias.reshape(1, Co).astype(jnp.float32)

    in_specs = [
        pl.BlockSpec((None, Hp, Wp, C), lambda b: (b, 0, 0, 0)),  # one image / step
        pl.BlockSpec((9, C, Co), lambda b: (0, 0, 0)),            # weights resident
        pl.BlockSpec((1, Co), lambda b: (0, 0)),
        pl.BlockSpec((1, Co), lambda b: (0, 0)),
    ]
    args = [xp, w9, s2, b2]
    if residual is not None:
        in_specs.append(pl.BlockSpec((None, HW, Co), lambda b: (b, 0, 0)))
        args.append(residual.reshape(B, HW, Co))

    kernel = functools.partial(_conv3x3_block_kernel, H=H, W=W, relu=relu,
                               add_residual=residual is not None)

    n_act = 2 if residual is not None else 1
    cost = pl.CostEstimate(
        flops=2 * B * HW * 9 * C * Co, transcendentals=0,
        bytes_accessed=4 * (B * Hp * Wp * C + 9 * C * Co + (n_act + 1) * B * HW * Co))

    out = pl.pallas_call(
        kernel,
        out_shape=jax.ShapeDtypeStruct((B, HW, Co), x.dtype),
        grid_spec=pltpu.PrefetchScalarGridSpec(
            num_scalar_prefetch=0,
            grid=(B,),
            in_specs=in_specs,
            out_specs=pl.BlockSpec((None, HW, Co), lambda b: (b, 0, 0)),
        ),
        compiler_params=pltpu.CompilerParams(
            dimension_semantics=("parallel",)),
        cost_estimate=cost,
    )(*args)
    # TODO(synk): for very large feature maps, additionally tile H into row strips
    # (with a 1-row halo) to bound the per-step VMEM footprint.
    return out.reshape(B, H, W, Co)


# ----------------------------------------------------------------------------
# Module wrapper: ResNet_Encoder.forward == conv1 -> BasicBlock -> BasicBlock
# ----------------------------------------------------------------------------
def fold_bn(gamma, beta, mean, var, eps=1e-5):
    scale = gamma / jnp.sqrt(var + eps)
    return scale, beta - mean * scale


def basic_block(x, p, prefix, *, compute_dtype=jnp.float32):
    s1, b1 = fold_bn(p[f"{prefix}_bn1_g"], p[f"{prefix}_bn1_b"],
                     p[f"{prefix}_bn1_m"], p[f"{prefix}_bn1_v"])
    s2, b2 = fold_bn(p[f"{prefix}_bn2_g"], p[f"{prefix}_bn2_b"],
                     p[f"{prefix}_bn2_m"], p[f"{prefix}_bn2_v"])
    h = conv3x3_bn_act(x, p[f"{prefix}_conv1_w"], s1, b1, relu=True,
                       residual=None, compute_dtype=compute_dtype)
    return conv3x3_bn_act(h, p[f"{prefix}_conv2_w"], s2, b2, relu=True,
                          residual=x, compute_dtype=compute_dtype)


@jax.jit
def resnet_encoder_forward(x, params):
    # forward() of the reference module: conv1 then layer1 (two BasicBlocks).
    y = conv7x7_s2(x, params["conv1_w"])
    y = basic_block(y, params, "b1")
    y = basic_block(y, params, "b2")
    return y


# ----------------------------------------------------------------------------
# Deterministic init + pure-JAX reference for the self-test
# ----------------------------------------------------------------------------
def init_params(key):
    keys = iter(jax.random.split(key, 21))
    p = {"conv1_w": jax.random.normal(next(keys), (7, 7, 3, 64), jnp.float32)
                    * (2.0 / (7 * 7 * 3)) ** 0.5}
    for blk in ("b1", "b2"):
        for conv in ("conv1", "conv2"):
            p[f"{blk}_{conv}_w"] = (jax.random.normal(next(keys), (3, 3, 64, 64),
                                                      jnp.float32)
                                    * (2.0 / (3 * 3 * 64)) ** 0.5)
        for bn in ("bn1", "bn2"):
            p[f"{blk}_{bn}_g"] = jax.random.uniform(next(keys), (64,), jnp.float32, 0.5, 1.5)
            p[f"{blk}_{bn}_b"] = jax.random.normal(next(keys), (64,), jnp.float32) * 0.1
            p[f"{blk}_{bn}_m"] = jax.random.normal(next(keys), (64,), jnp.float32) * 0.1
            p[f"{blk}_{bn}_v"] = jax.random.uniform(next(keys), (64,), jnp.float32, 0.5, 1.5)
    return p


def _ref_conv(x, w, stride, pad):
    return jax.lax.conv_general_dilated(
        x, w, window_strides=(stride, stride),
        padding=((pad, pad), (pad, pad)),
        dimension_numbers=("NHWC", "HWIO", "NHWC"),
        precision=jax.lax.Precision.HIGHEST)


def _ref_bn(x, g, b, m, v, eps=1e-5):
    return (x - m) / jnp.sqrt(v + eps) * g + b


def reference_forward(x, p):
    def block(x, prefix):
        h = _ref_conv(x, p[f"{prefix}_conv1_w"], 1, 1)
        h = jax.nn.relu(_ref_bn(h, p[f"{prefix}_bn1_g"], p[f"{prefix}_bn1_b"],
                                p[f"{prefix}_bn1_m"], p[f"{prefix}_bn1_v"]))
        h = _ref_conv(h, p[f"{prefix}_conv2_w"], 1, 1)
        h = _ref_bn(h, p[f"{prefix}_bn2_g"], p[f"{prefix}_bn2_b"],
                    p[f"{prefix}_bn2_m"], p[f"{prefix}_bn2_v"])
        return jax.nn.relu(h + x)

    y = _ref_conv(x, p["conv1_w"], 2, 3)
    y = block(y, "b1")
    y = block(y, "b2")
    return y


if __name__ == "__main__":
    key = jax.random.PRNGKey(0)
    kx, kp = jax.random.split(key)

    # Small NHWC input (equivalent torch NCHW shape: [2, 3, 16, 16]).
    x = jax.random.normal(kx, (2, 16, 16, 3), jnp.float32)
    params = init_params(kp)

    out = resnet_encoder_forward(x, params)
    out = jax.block_until_ready(out)

    ref = reference_forward(x, params)
    assert out.shape == (2, 8, 8, 64), out.shape
    assert jnp.allclose(out, ref, atol=3e-2, rtol=3e-2), (
        float(jnp.max(jnp.abs(out - ref))))

    print("KERNEL_OK")
</pallas_src>

<mosaic_0001>
module attributes {stable_mosaic.version = 11 : i64} {
  func.func @_matmul_kernel(%arg0: i32, %arg1: memref<128x147xf32, #tpu.memory_space<vmem>>, %arg2: memref<147x64xf32, #tpu.memory_space<vmem>>, %arg3: memref<128x64xf32, #tpu.memory_space<vmem>>) attributes {dimension_semantics = [#tpu.dimension_semantics<parallel>], iteration_bounds = array<i64: 1>, scalar_prefetch = 0 : i64, scratch_operands = 0 : i64, tpu.core_type = #tpu.core_type<tc>, window_params = [{transform_indices = @transform_0, window_bounds = array<i64: 128, 147>}, {pipeline_mode = #tpu.pipeline_mode<synchronous>, transform_indices = @transform_1, window_bounds = array<i64: 147, 64>}, {transform_indices = @transform_2, window_bounds = array<i64: 128, 64>}]} {
    %c0 = arith.constant 0 : index
    %c0_0 = arith.constant 0 : index
    %0 = vector.load %arg1[%c0, %c0_0] : memref<128x147xf32, #tpu.memory_space<vmem>>, vector<128x147xf32>
    %c0_1 = arith.constant 0 : index
    %c0_2 = arith.constant 0 : index
    %1 = vector.load %arg2[%c0_1, %c0_2] : memref<147x64xf32, #tpu.memory_space<vmem>>, vector<147x64xf32>
    %cst = arith.constant dense<0.000000e+00> : vector<128x64xf32>
    %2 = tpu.matmul %0, %1, %cst {dimension_numbers = #tpu.dot_dimension_numbers<[1], [0], [0], [1], [0, 0, 1, 1], [], []>} : vector<128x147xf32>, vector<147x64xf32>, vector<128x64xf32> -> vector<128x64xf32>
    %c0_3 = arith.constant 0 : index
    %c0_4 = arith.constant 0 : index
    %3 = vector.load %arg3[%c0_3, %c0_4] : memref<128x64xf32, #tpu.memory_space<vmem>>, vector<128x64xf32>
    tpu.vector_store %arg3[%c0_3, %c0_4], %2 {strides = array<i32>} : memref<128x64xf32, #tpu.memory_space<vmem>>, vector<128x64xf32>,
    return
  }
  func.func @transform_0(%arg0: i32) -> (i32, i32) {
    %c0_i32 = arith.constant 0 : i32
    %c0_i32_0 = arith.constant 0 : i32
    return %arg0, %c0_i32 : i32, i32
  }
  func.func @transform_1(%arg0: i32) -> (i32, i32) {
    %c0_i32 = arith.constant 0 : i32
    %c0_i32_0 = arith.constant 0 : i32
    %c0_i32_1 = arith.constant 0 : i32
    return %c0_i32, %c0_i32_0 : i32, i32
  }
  func.func @transform_2(%arg0: i32) -> (i32, i32) {
    %c0_i32 = arith.constant 0 : i32
    %c0_i32_0 = arith.constant 0 : i32
    return %arg0, %c0_i32 : i32, i32
  }
}

module attributes {stable_mosaic.version = 11 : i64} {
  func.func @_conv3x3_block_kernel(%arg0: i32, %arg1: memref<1x10x10x64xf32, #tpu.memory_space<vmem>>, %arg2: memref<9x64x64xf32, #tpu.memory_space<vmem>>, %arg3: memref<1x64xf32, #tpu.memory_space<vmem>>, %arg4: memref<1x64xf32, #tpu.memory_space<vmem>>, %arg5: memref<1x64x64xf32, #tpu.memory_space<vmem>>) attributes {dimension_semantics = [#tpu.dimension_semantics<parallel>], iteration_bounds = array<i64: 2>, scalar_prefetch = 0 : i64, scratch_operands = 0 : i64, tpu.core_type = #tpu.core_type<tc>, window_params = [{transform_indices = @transform_0, window_bounds = array<i64: 1, 10, 10, 64>}, {pipeline_mode = #tpu.pipeline_mode<synchronous>, transform_indices = @transform_1, window_bounds = array<i64: 9, 64, 64>}, {pipeline_mode = #tpu.pipeline_mode<synchronous>, transform_indices = @transform_2, window_bounds = array<i64: 1, 64>}, {pipeline_mode = #tpu.pipeline_mode<synchronous>, transform_indices = @transform_3, window_bounds = array<i64: 1, 64>}, {transform_indices = @transform_4, window_bounds = array<i64: 1, 64, 64>}]} {
    %cst = arith.constant 0.000000e+00 : f32
    %0 = vector.broadcast %cst : f32 to vector<64x64xf32>
    %c0 = arith.constant 0 : index
    %c0_0 = arith.constant 0 : index
    %c0_1 = arith.constant 0 : index
    %c0_2 = arith.constant 0 : index
    %1 = vector.load %arg1[%c0, %c0_0, %c0_1, %c0_2] : memref<1x10x10x64xf32, #tpu.memory_space<vmem>>, vector<1x8x8x64xf32>
    %2 = vector.shape_cast %1 : vector<1x8x8x64xf32> to vector<8x8x64xf32>
    %3 = vector.shape_cast %2 : vector<8x8x64xf32> to vector<64x64xf32>
    %c0_3 = arith.constant 0 : index
    %c0_4 = arith.constant 0 : index
    %c0_5 = arith.constant 0 : index
    %4 = vector.load %arg2[%c0_3, %c0_4, %c0_5] : memref<9x64x64xf32, #tpu.memory_space<vmem>>, vector<1x64x64xf32>
    %5 = vector.shape_cast %4 : vector<1x64x64xf32> to vector<64x64xf32>
    %cst_6 = arith.constant dense<0.000000e+00> : vector<64x64xf32>
    %6 = tpu.matmul %3, %5, %cst_6 {dimension_numbers = #tpu.dot_dimension_numbers<[1], [0], [0], [1], [0, 0, 1, 1], [], []>} : vector<64x64xf32>, vector<64x64xf32>, vector<64x64xf32> -> vector<64x64xf32>
    %7 = arith.addf %0, %6 : vector<64x64xf32>
    %c0_7 = arith.constant 0 : index
    %c0_8 = arith.constant 0 : index
    %c1 = arith.constant 1 : index
    %c0_9 = arith.constant 0 : index
    %8 = vector.load %arg1[%c0_7, %c0_8, %c1, %c0_9] : memref<1x10x10x64xf32, #tpu.memory_space<vmem>>, vector<1x8x8x64xf32>
    %9 = vector.shape_cast %8 : vector<1x8x8x64xf32> to vector<8x8x64xf32>
    %10 = vector.shape_cast %9 : vector<8x8x64xf32> to vector<64x64xf32>
    %c1_10 = arith.constant 1 : index
    %c0_11 = arith.constant 0 : index
    %c0_12 = arith.constant 0 : index
    %11 = vector.load %arg2[%c1_10, %c0_11, %c0_12] : memref<9x64x64xf32, #tpu.memory_space<vmem>>, vector<1x64x64xf32>
    %12 = vector.shape_cast %11 : vector<1x64x64xf32> to vector<64x64xf32>
    %cst_13 = arith.constant dense<0.000000e+00> : vector<64x64xf32>
    %13 = tpu.matmul %10, %12, %cst_13 {dimension_numbers = #tpu.dot_dimension_numbers<[1], [0], [0], [1], [0, 0, 1, 1], [], []>} : vector<64x64xf32>, vector<64x64xf32>, vector<64x64xf32> -> vector<64x64xf32>
    %14 = arith.addf %7, %13 : vector<64x64xf32>
    %c0_14 = arith.constant 0 : index
    %c0_15 = arith.constant 0 : index
    %c2 = arith.constant 2 : index
    %c0_16 = arith.constant 0 : index
    %15 = vector.load %arg1[%c0_14, %c0_15, %c2, %c0_16] : memref<1x10x10x64xf32, #tpu.memory_space<vmem>>, vector<1x8x8x64xf32>
    %16 = vector.shape_cast %15 : vector<1x8x8x64xf32> to vector<8x8x64xf32>
    %17 = vector.shape_cast %16 : vector<8x8x64xf32> to vector<64x64xf32>
    %c2_17 = arith.constant 2 : index
    %c0_18 = arith.constant 0 : index
    %c0_19 = arith.constant 0 : index
    %18 = vector.load %arg2[%c2_17, %c0_18, %c0_19] : memref<9x64x64xf32, #tpu.memory_space<vmem>>, vector<1x64x64xf32>
    %19 = vector.shape_cast %18 : vector<1x64x64xf32> to vector<64x64xf32>
    %cst_20 = arith.constant dense<0.000000e+00> : vector<64x64xf32>
    %20 = tpu.matmul %17, %19, %cst_20 {dimension_numbers = #tpu.dot_dimension_numbers<[1], [0], [0], [1], [0, 0, 1, 1], [], []>} : vector<64x64xf32>, vector<64x64xf32>, vector<64x64xf32> -> vector<64x64xf32>
    %21 = arith.addf %14, %20 : vector<64x64xf32>
    %c0_21 = arith.constant 0 : index
    %c1_22 = arith.constant 1 : index
    %c0_23 = arith.constant 0 : index
    %c0_24 = arith.constant 0 : index
    %22 = vector.load %arg1[%c0_21, %c1_22, %c0_23, %c0_24] : memref<1x10x10x64xf32, #tpu.memory_space<vmem>>, vector<1x8x8x64xf32>
    %23 = vector.shape_cast %22 : vector<1x8x8x64xf32> to vector<8x8x64xf32>
    %24 = vector.shape_cast %23 : vector<8x8x64xf32> to vector<64x64xf32>
    %c3 = arith.constant 3 : index
    %c0_25 = arith.constant 0 : index
    %c0_26 = arith.constant 0 : index
    %25 = vector.load %arg2[%c3, %c0_25, %c0_26] : memref<9x64x64xf32, #tpu.memory_space<vmem>>, vector<1x64x64xf32>
    %26 = vector.shape_cast %25 : vector<1x64x64xf32> to vector<64x64xf32>
    %cst_27 = arith.constant dense<0.000000e+00> : vector<64x64xf32>
    %27 = tpu.matmul %24, %26, %cst_27 {dimension_numbers = #tpu.dot_dimension_numbers<[1], [0], [0], [1], [0, 0, 1, 1], [], []>} : vector<64x64xf32>, vector<64x64xf32>, vector<64x64xf32> -> vector<64x64xf32>
    %28 = arith.addf %21, %27 : vector<64x64xf32>
    %c0_28 = arith.constant 0 : index
    %c1_29 = arith.constant 1 : index
    %c1_30 = arith.constant 1 : index
    %c0_31 = arith.constant 0 : index
    %29 = vector.load %arg1[%c0_28, %c1_29, %c1_30, %c0_31] : memref<1x10x10x64xf32, #tpu.memory_space<vmem>>, vector<1x8x8x64xf32>
    %30 = vector.shape_cast %29 : vector<1x8x8x64xf32> to vector<8x8x64xf32>
    %31 = vector.shape_cast %30 : vector<8x8x64xf32> to vector<64x64xf32>
    %c4 = arith.constant 4 : index
    %c0_32 = arith.constant 0 : index
    %c0_33 = arith.constant 0 : index
    %32 = vector.load %arg2[%c4, %c0_32, %c0_33] : memref<9x64x64xf32, #tpu.memory_space<vmem>>, vector<1x64x64xf32>
    %33 = vector.shape_cast %32 : vector<1x64x64xf32> to vector<64x64xf32>
    %cst_34 = arith.constant dense<0.000000e+00> : vector<64x64xf32>
    %34 = tpu.matmul %31, %33, %cst_34 {dimension_numbers = #tpu.dot_dimension_numbers<[1], [0], [0], [1], [0, 0, 1, 1], [], []>} : vector<64x64xf32>, vector<64x64xf32>, vector<64x64xf32> -> vector<64x64xf32>
    %35 = arith.addf %28, %34 : vector<64x64xf32>
    %c0_35 = arith.constant 0 : index
    %c1_36 = arith.constant 1 : index
    %c2_37 = arith.constant 2 : index
    %c0_38 = arith.constant 0 : index
    %36 = vector.load %arg1[%c0_35, %c1_36, %c2_37, %c0_38] : memref<1x10x10x64xf32, #tpu.memory_space<vmem>>, vector<1x8x8x64xf32>
    %37 = vector.shape_cast %36 : vector<1x8x8x64xf32> to vector<8x8x64xf32>
    %38 = vector.shape_cast %37 : vector<8x8x64xf32> to vector<64x64xf32>
    %c5 = arith.constant 5 : index
    %c0_39 = arith.constant 0 : index
    %c0_40 = arith.constant 0 : index
    %39 = vector.load %arg2[%c5, %c0_39, %c0_40] : memref<9x64x64xf32, #tpu.memory_space<vmem>>, vector<1x64x64xf32>
    %40 = vector.shape_cast %39 : vector<1x64x64xf32> to vector<64x64xf32>
    %cst_41 = arith.constant dense<0.000000e+00> : vector<64x64xf32>
    %41 = tpu.matmul %38, %40, %cst_41 {dimension_numbers = #tpu.dot_dimension_numbers<[1], [0], [0], [1], [0, 0, 1, 1], [], []>} : vector<64x64xf32>, vector<64x64xf32>, vector<64x64xf32> -> vector<64x64xf32>
    %42 = arith.addf %35, %41 : vector<64x64xf32>
    %c0_42 = arith.constant 0 : index
    %c2_43 = arith.constant 2 : index
    %c0_44 = arith.constant 0 : index
    %c0_45 = arith.constant 0 : index
    %43 = vector.load %arg1[%c0_42, %c2_43, %c0_44, %c0_45] : memref<1x10x10x64xf32, #tpu.memory_space<vmem>>, vector<1x8x8x64xf32>
    %44 = vector.shape_cast %43 : vector<1x8x8x64xf32> to vector<8x8x64xf32>
    %45 = vector.shape_cast %44 : vector<8x8x64xf32> to vector<64x64xf32>
    %c6 = arith.constant 6 : index
    %c0_46 = arith.constant 0 : index
    %c0_47 = arith.constant 0 : index
    %46 = vector.load %arg2[%c6, %c0_46, %c0_47] : memref<9x64x64xf32, #tpu.memory_space<vmem>>, vector<1x64x64xf32>
    %47 = vector.shape_cast %46 : vector<1x64x64xf32> to vector<64x64xf32>
    %cst_48 = arith.constant dense<0.000000e+00> : vector<64x64xf32>
    %48 = tpu.matmul %45, %47, %cst_48 {dimension_numbers = #tpu.dot_dimension_numbers<[1], [0], [0], [1], [0, 0, 1, 1], [], []>} : vector<64x64xf32>, vector<64x64xf32>, vector<64x64xf32> -> vector<64x64xf32>
    %49 = arith.addf %42, %48 : vector<64x64xf32>
    %c0_49 = arith.constant 0 : index
    %c2_50 = arith.constant 2 : index
    %c1_51 = arith.constant 1 : index
    %c0_52 = arith.constant 0 : index
    %50 = vector.load %arg1[%c0_49, %c2_50, %c1_51, %c0_52] : memref<1x10x10x64xf32, #tpu.memory_space<vmem>>, vector<1x8x8x64xf32>
    %51 = vector.shape_cast %50 : vector<1x8x8x64xf32> to vector<8x8x64xf32>
    %52 = vector.shape_cast %51 : vector<8x8x64xf32> to vector<64x64xf32>
    %c7 = arith.constant 7 : index
    %c0_53 = arith.constant 0 : index
    %c0_54 = arith.constant 0 : index
    %53 = vector.load %arg2[%c7, %c0_53, %c0_54] : memref<9x64x64xf32, #tpu.memory_space<vmem>>, vector<1x64x64xf32>
    %54 = vector.shape_cast %53 : vector<1x64x64xf32> to vector<64x64xf32>
    %cst_55 = arith.constant dense<0.000000e+00> : vector<64x64xf32>
    %55 = tpu.matmul %52, %54, %cst_55 {dimension_numbers = #tpu.dot_dimension_numbers<[1], [0], [0], [1], [0, 0, 1, 1], [], []>} : vector<64x64xf32>, vector<64x64xf32>, vector<64x64xf32> -> vector<64x64xf32>
    %56 = arith.addf %49, %55 : vector<64x64xf32>
    %c0_56 = arith.constant 0 : index
    %c2_57 = arith.constant 2 : index
    %c2_58 = arith.constant 2 : index
    %c0_59 = arith.constant 0 : index
    %57 = vector.load %arg1[%c0_56, %c2_57, %c2_58, %c0_59] : memref<1x10x10x64xf32, #tpu.memory_space<vmem>>, vector<1x8x8x64xf32>
    %58 = vector.shape_cast %57 : vector<1x8x8x64xf32> to vector<8x8x64xf32>
    %59 = vector.shape_cast %58 : vector<8x8x64xf32> to vector<64x64xf32>
    %c8 = arith.constant 8 : index
    %c0_60 = arith.constant 0 : index
    %c0_61 = arith.constant 0 : index
    %60 = vector.load %arg2[%c8, %c0_60, %c0_61] : memref<9x64x64xf32, #tpu.memory_space<vmem>>, vector<1x64x64xf32>
    %61 = vector.shape_cast %60 : vector<1x64x64xf32> to vector<64x64xf32>
    %cst_62 = arith.constant dense<0.000000e+00> : vector<64x64xf32>
    %62 = tpu.matmul %59, %61, %cst_62 {dimension_numbers = #tpu.dot_dimension_numbers<[1], [0], [0], [1], [0, 0, 1, 1], [], []>} : vector<64x64xf32>, vector<64x64xf32>, vector<64x64xf32> -> vector<64x64xf32>
    %63 = arith.addf %56, %62 : vector<64x64xf32>
    %c0_63 = arith.constant 0 : index
    %c0_64 = arith.constant 0 : index
    %64 = vector.load %arg3[%c0_63, %c0_64] : memref<1x64xf32, #tpu.memory_space<vmem>>, vector<1x64xf32>
    %65 = vector.broadcast %64 : vector<1x64xf32> to vector<64x64xf32>
    %66 = arith.mulf %63, %65 : vector<64x64xf32>
    %c0_65 = arith.constant 0 : index
    %c0_66 = arith.constant 0 : index
    %67 = vector.load %arg4[%c0_65, %c0_66] : memref<1x64xf32, #tpu.memory_space<vmem>>, vector<1x64xf32>
    %68 = vector.broadcast %67 : vector<1x64xf32> to vector<64x64xf32>
    %69 = arith.addf %66, %68 : vector<64x64xf32>
    %cst_67 = arith.constant 0.000000e+00 : f32
    %70 = vector.broadcast %cst_67 : f32 to vector<64x64xf32>
    %71 = arith.maximumf %69, %70 : vector<64x64xf32>
    %c0_68 = arith.constant 0 : index
    %c0_69 = arith.constant 0 : index
    %c0_70 = arith.constant 0 : index
    %72 = vector.load %arg5[%c0_68, %c0_69, %c0_70] : memref<1x64x64xf32, #tpu.memory_space<vmem>>, vector<1x64x64xf32>
    %73 = vector.shape_cast %72 : vector<1x64x64xf32> to vector<64x64xf32>
    %74 = vector.shape_cast %71 : vector<64x64xf32> to vector<1x64x64xf32>
    tpu.vector_store %arg5[%c0_68, %c0_69, %c0_70], %74 {strides = array<i32>} : memref<1x64x64xf32, #tpu.memory_space<vmem>>, vector<1x64x64xf32>,
    return
  }
  func.func @transform_0(%arg0: i32) -> (i32, i32, i32, i32) {
    %c0_i32 = arith.constant 0 : i32
    %c0_i32_0 = arith.constant 0 : i32
    %c0_i32_1 = arith.constant 0 : i32
    %c0_i32_2 = arith.constant 0 : i32
    return %arg0, %c0_i32, %c0_i32_0, %c0_i32_1 : i32, i32, i32, i32
  }
  func.func @transform_1(%arg0: i32) -> (i32, i32, i32) {
    %c0_i32 = arith.constant 0 : i32
    %c0_i32_0 = arith.constant 0 : i32
    %c0_i32_1 = arith.constant 0 : i32
    %c0_i32_2 = arith.constant 0 : i32
    return %c0_i32, %c0_i32_0, %c0_i32_1 : i32, i32, i32
  }
  func.func @transform_2(%arg0: i32) -> (i32, i32) {
    %c0_i32 = arith.constant 0 : i32
    %c0_i32_0 = arith.constant 0 : i32
    %c0_i32_1 = arith.constant 0 : i32
    return %c0_i32, %c0_i32_0 : i32, i32
  }
  func.func @transform_3(%arg0: i32) -> (i32, i32) {
    %c0_i32 = arith.constant 0 : i32
    %c0_i32_0 = arith.constant 0 : i32
    %c0_i32_1 = arith.constant 0 : i32
    return %c0_i32, %c0_i32_0 : i32, i32
  }
  func.func @transform_4(%arg0: i32) -> (i32, i32, i32) {
    %c0_i32 = arith.constant 0 : i32
    %c0_i32_0 = arith.constant 0 : i32
    %c0_i32_1 = arith.constant 0 : i32
    return %arg0, %c0_i32, %c0_i32_0 : i32, i32, i32
  }
}

module attributes {stable_mosaic.version = 11 : i64} {
  func.func @_conv3x3_block_kernel(%arg0: i32, %arg1: memref<1x10x10x64xf32, #tpu.memory_space<vmem>>, %arg2: memref<9x64x64xf32, #tpu.memory_space<vmem>>, %arg3: memref<1x64xf32, #tpu.memory_space<vmem>>, %arg4: memref<1x64xf32, #tpu.memory_space<vmem>>, %arg5: memref<1x64x64xf32, #tpu.memory_space<vmem>>, %arg6: memref<1x64x64xf32, #tpu.memory_space<vmem>>) attributes {dimension_semantics = [#tpu.dimension_semantics<parallel>], iteration_bounds = array<i64: 2>, scalar_prefetch = 0 : i64, scratch_operands = 0 : i64, tpu.core_type = #tpu.core_type<tc>, window_params = [{transform_indices = @transform_0, window_bounds = array<i64: 1, 10, 10, 64>}, {pipeline_mode = #tpu.pipeline_mode<synchronous>, transform_indices = @transform_1, window_bounds = array<i64: 9, 64, 64>}, {pipeline_mode = #tpu.pipeline_mode<synchronous>, transform_indices = @transform_2, window_bounds = array<i64: 1, 64>}, {pipeline_mode = #tpu.pipeline_mode<synchronous>, transform_indices = @transform_3, window_bounds = array<i64: 1, 64>}, {transform_indices = @transform_4, window_bounds = array<i64: 1, 64, 64>}, {transform_indices = @transform_5, window_bounds = array<i64: 1, 64, 64>}]} {
    %cst = arith.constant 0.000000e+00 : f32
    %0 = vector.broadcast %cst : f32 to vector<64x64xf32>
    %c0 = arith.constant 0 : index
    %c0_0 = arith.constant 0 : index
    %c0_1 = arith.constant 0 : index
    %c0_2 = arith.constant 0 : index
    %1 = vector.load %arg1[%c0, %c0_0, %c0_1, %c0_2] : memref<1x10x10x64xf32, #tpu.memory_space<vmem>>, vector<1x8x8x64xf32>
    %2 = vector.shape_cast %1 : vector<1x8x8x64xf32> to vector<8x8x64xf32>
    %3 = vector.shape_cast %2 : vector<8x8x64xf32> to vector<64x64xf32>
    %c0_3 = arith.constant 0 : index
    %c0_4 = arith.constant 0 : index
    %c0_5 = arith.constant 0 : index
    %4 = vector.load %arg2[%c0_3, %c0_4, %c0_5] : memref<9x64x64xf32, #tpu.memory_space<vmem>>, vector<1x64x64xf32>
    %5 = vector.shape_cast %4 : vector<1x64x64xf32> to vector<64x64xf32>
    %cst_6 = arith.constant dense<0.000000e+00> : vector<64x64xf32>
    %6 = tpu.matmul %3, %5, %cst_6 {dimension_numbers = #tpu.dot_dimension_numbers<[1], [0], [0], [1], [0, 0, 1, 1], [], []>} : vector<64x64xf32>, vector<64x64xf32>, vector<64x64xf32> -> vector<64x64xf32>
    %7 = arith.addf %0, %6 : vector<64x64xf32>
    %c0_7 = arith.constant 0 : index
    %c0_8 = arith.constant 0 : index
    %c1 = arith.constant 1 : index
    %c0_9 = arith.constant 0 : index
    %8 = vector.load %arg1[%c0_7, %c0_8, %c1, %c0_9] : memref<1x10x10x64xf32, #tpu.memory_space<vmem>>, vector<1x8x8x64xf32>
    %9 = vector.shape_cast %8 : vector<1x8x8x64xf32> to vector<8x8x64xf32>
    %10 = vector.shape_cast %9 : vector<8x8x64xf32> to vector<64x64xf32>
    %c1_10 = arith.constant 1 : index
    %c0_11 = arith.constant 0 : index
    %c0_12 = arith.constant 0 : index
    %11 = vector.load %arg2[%c1_10, %c0_11, %c0_12] : memref<9x64x64xf32, #tpu.memory_space<vmem>>, vector<1x64x64xf32>
    %12 = vector.shape_cast %11 : vector<1x64x64xf32> to vector<64x64xf32>
    %cst_13 = arith.constant dense<0.000000e+00> : vector<64x64xf32>
    %13 = tpu.matmul %10, %12, %cst_13 {dimension_numbers = #tpu.dot_dimension_numbers<[1], [0], [0], [1], [0, 0, 1, 1], [], []>} : vector<64x64xf32>, vector<64x64xf32>, vector<64x64xf32> -> vector<64x64xf32>
    %14 = arith.addf %7, %13 : vector<64x64xf32>
    %c0_14 = arith.constant 0 : index
    %c0_15 = arith.constant 0 : index
    %c2 = arith.constant 2 : index
    %c0_16 = arith.constant 0 : index
    %15 = vector.load %arg1[%c0_14, %c0_15, %c2, %c0_16] : memref<1x10x10x64xf32, #tpu.memory_space<vmem>>, vector<1x8x8x64xf32>
    %16 = vector.shape_cast %15 : vector<1x8x8x64xf32> to vector<8x8x64xf32>
    %17 = vector.shape_cast %16 : vector<8x8x64xf32> to vector<64x64xf32>
    %c2_17 = arith.constant 2 : index
    %c0_18 = arith.constant 0 : index
    %c0_19 = arith.constant 0 : index
    %18 = vector.load %arg2[%c2_17, %c0_18, %c0_19] : memref<9x64x64xf32, #tpu.memory_space<vmem>>, vector<1x64x64xf32>
    %19 = vector.shape_cast %18 : vector<1x64x64xf32> to vector<64x64xf32>
    %cst_20 = arith.constant dense<0.000000e+00> : vector<64x64xf32>
    %20 = tpu.matmul %17, %19, %cst_20 {dimension_numbers = #tpu.dot_dimension_numbers<[1], [0], [0], [1], [0, 0, 1, 1], [], []>} : vector<64x64xf32>, vector<64x64xf32>, vector<64x64xf32> -> vector<64x64xf32>
    %21 = arith.addf %14, %20 : vector<64x64xf32>
    %c0_21 = arith.constant 0 : index
    %c1_22 = arith.constant 1 : index
    %c0_23 = arith.constant 0 : index
    %c0_24 = arith.constant 0 : index
    %22 = vector.load %arg1[%c0_21, %c1_22, %c0_23, %c0_24] : memref<1x10x10x64xf32, #tpu.memory_space<vmem>>, vector<1x8x8x64xf32>
    %23 = vector.shape_cast %22 : vector<1x8x8x64xf32> to vector<8x8x64xf32>
    %24 = vector.shape_cast %23 : vector<8x8x64xf32> to vector<64x64xf32>
    %c3 = arith.constant 3 : index
    %c0_25 = arith.constant 0 : index
    %c0_26 = arith.constant 0 : index
    %25 = vector.load %arg2[%c3, %c0_25, %c0_26] : memref<9x64x64xf32, #tpu.memory_space<vmem>>, vector<1x64x64xf32>
    %26 = vector.shape_cast %25 : vector<1x64x64xf32> to vector<64x64xf32>
    %cst_27 = arith.constant dense<0.000000e+00> : vector<64x64xf32>
    %27 = tpu.matmul %24, %26, %cst_27 {dimension_numbers = #tpu.dot_dimension_numbers<[1], [0], [0], [1], [0, 0, 1, 1], [], []>} : vector<64x64xf32>, vector<64x64xf32>, vector<64x64xf32> -> vector<64x64xf32>
    %28 = arith.addf %21, %27 : vector<64x64xf32>
    %c0_28 = arith.constant 0 : index
    %c1_29 = arith.constant 1 : index
    %c1_30 = arith.constant 1 : index
    %c0_31 = arith.constant 0 : index
    %29 = vector.load %arg1[%c0_28, %c1_29, %c1_30, %c0_31] : memref<1x10x10x64xf32, #tpu.memory_space<vmem>>, vector<1x8x8x64xf32>
    %30 = vector.shape_cast %29 : vector<1x8x8x64xf32> to vector<8x8x64xf32>
    %31 = vector.shape_cast %30 : vector<8x8x64xf32> to vector<64x64xf32>
    %c4 = arith.constant 4 : index
    %c0_32 = arith.constant 0 : index
    %c0_33 = arith.constant 0 : index
    %32 = vector.load %arg2[%c4, %c0_32, %c0_33] : memref<9x64x64xf32, #tpu.memory_space<vmem>>, vector<1x64x64xf32>
    %33 = vector.shape_cast %32 : vector<1x64x64xf32> to vector<64x64xf32>
    %cst_34 = arith.constant dense<0.000000e+00> : vector<64x64xf32>
    %34 = tpu.matmul %31, %33, %cst_34 {dimension_numbers = #tpu.dot_dimension_numbers<[1], [0], [0], [1], [0, 0, 1, 1], [], []>} : vector<64x64xf32>, vector<64x64xf32>, vector<64x64xf32> -> vector<64x64xf32>
    %35 = arith.addf %28, %34 : vector<64x64xf32>
    %c0_35 = arith.constant 0 : index
    %c1_36 = arith.constant 1 : index
    %c2_37 = arith.constant 2 : index
    %c0_38 = arith.constant 0 : index
    %36 = vector.load %arg1[%c0_35, %c1_36, %c2_37, %c0_38] : memref<1x10x10x64xf32, #tpu.memory_space<vmem>>, vector<1x8x8x64xf32>
    %37 = vector.shape_cast %36 : vector<1x8x8x64xf32> to vector<8x8x64xf32>
    %38 = vector.shape_cast %37 : vector<8x8x64xf32> to vector<64x64xf32>
    %c5 = arith.constant 5 : index
    %c0_39 = arith.constant 0 : index
    %c0_40 = arith.constant 0 : index
    %39 = vector.load %arg2[%c5, %c0_39, %c0_40] : memref<9x64x64xf32, #tpu.memory_space<vmem>>, vector<1x64x64xf32>
    %40 = vector.shape_cast %39 : vector<1x64x64xf32> to vector<64x64xf32>
    %cst_41 = arith.constant dense<0.000000e+00> : vector<64x64xf32>
    %41 = tpu.matmul %38, %40, %cst_41 {dimension_numbers = #tpu.dot_dimension_numbers<[1], [0], [0], [1], [0, 0, 1, 1], [], []>} : vector<64x64xf32>, vector<64x64xf32>, vector<64x64xf32> -> vector<64x64xf32>
    %42 = arith.addf %35, %41 : vector<64x64xf32>
    %c0_42 = arith.constant 0 : index
    %c2_43 = arith.constant 2 : index
    %c0_44 = arith.constant 0 : index
    %c0_45 = arith.constant 0 : index
    %43 = vector.load %arg1[%c0_42, %c2_43, %c0_44, %c0_45] : memref<1x10x10x64xf32, #tpu.memory_space<vmem>>, vector<1x8x8x64xf32>
    %44 = vector.shape_cast %43 : vector<1x8x8x64xf32> to vector<8x8x64xf32>
    %45 = vector.shape_cast %44 : vector<8x8x64xf32> to vector<64x64xf32>
    %c6 = arith.constant 6 : index
    %c0_46 = arith.constant 0 : index
    %c0_47 = arith.constant 0 : index
    %46 = vector.load %arg2[%c6, %c0_46, %c0_47] : memref<9x64x64xf32, #tpu.memory_space<vmem>>, vector<1x64x64xf32>
    %47 = vector.shape_cast %46 : vector<1x64x64xf32> to vector<64x64xf32>
    %cst_48 = arith.constant dense<0.000000e+00> : vector<64x64xf32>
    %48 = tpu.matmul %45, %47, %cst_48 {dimension_numbers = #tpu.dot_dimension_numbers<[1], [0], [0], [1], [0, 0, 1, 1], [], []>} : vector<64x64xf32>, vector<64x64xf32>, vector<64x64xf32> -> vector<64x64xf32>
    %49 = arith.addf %42, %48 : vector<64x64xf32>
    %c0_49 = arith.constant 0 : index
    %c2_50 = arith.constant 2 : index
    %c1_51 = arith.constant 1 : index
    %c0_52 = arith.constant 0 : index
    %50 = vector.load %arg1[%c0_49, %c2_50, %c1_51, %c0_52] : memref<1x10x10x64xf32, #tpu.memory_space<vmem>>, vector<1x8x8x64xf32>
    %51 = vector.shape_cast %50 : vector<1x8x8x64xf32> to vector<8x8x64xf32>
    %52 = vector.shape_cast %51 : vector<8x8x64xf32> to vector<64x64xf32>
    %c7 = arith.constant 7 : index
    %c0_53 = arith.constant 0 : index
    %c0_54 = arith.constant 0 : index
    %53 = vector.load %arg2[%c7, %c0_53, %c0_54] : memref<9x64x64xf32, #tpu.memory_space<vmem>>, vector<1x64x64xf32>
    %54 = vector.shape_cast %53 : vector<1x64x64xf32> to vector<64x64xf32>
    %cst_55 = arith.constant dense<0.000000e+00> : vector<64x64xf32>
    %55 = tpu.matmul %52, %54, %cst_55 {dimension_numbers = #tpu.dot_dimension_numbers<[1], [0], [0], [1], [0, 0, 1, 1], [], []>} : vector<64x64xf32>, vector<64x64xf32>, vector<64x64xf32> -> vector<64x64xf32>
    %56 = arith.addf %49, %55 : vector<64x64xf32>
    %c0_56 = arith.constant 0 : index
    %c2_57 = arith.constant 2 : index
    %c2_58 = arith.constant 2 : index
    %c0_59 = arith.constant 0 : index
    %57 = vector.load %arg1[%c0_56, %c2_57, %c2_58, %c0_59] : memref<1x10x10x64xf32, #tpu.memory_space<vmem>>, vector<1x8x8x64xf32>
    %58 = vector.shape_cast %57 : vector<1x8x8x64xf32> to vector<8x8x64xf32>
    %59 = vector.shape_cast %58 : vector<8x8x64xf32> to vector<64x64xf32>
    %c8 = arith.constant 8 : index
    %c0_60 = arith.constant 0 : index
    %c0_61 = arith.constant 0 : index
    %60 = vector.load %arg2[%c8, %c0_60, %c0_61] : memref<9x64x64xf32, #tpu.memory_space<vmem>>, vector<1x64x64xf32>
    %61 = vector.shape_cast %60 : vector<1x64x64xf32> to vector<64x64xf32>
    %cst_62 = arith.constant dense<0.000000e+00> : vector<64x64xf32>
    %62 = tpu.matmul %59, %61, %cst_62 {dimension_numbers = #tpu.dot_dimension_numbers<[1], [0], [0], [1], [0, 0, 1, 1], [], []>} : vector<64x64xf32>, vector<64x64xf32>, vector<64x64xf32> -> vector<64x64xf32>
    %63 = arith.addf %56, %62 : vector<64x64xf32>
    %c0_63 = arith.constant 0 : index
    %c0_64 = arith.constant 0 : index
    %64 = vector.load %arg3[%c0_63, %c0_64] : memref<1x64xf32, #tpu.memory_space<vmem>>, vector<1x64xf32>
    %65 = vector.broadcast %64 : vector<1x64xf32> to vector<64x64xf32>
    %66 = arith.mulf %63, %65 : vector<64x64xf32>
    %c0_65 = arith.constant 0 : index
    %c0_66 = arith.constant 0 : index
    %67 = vector.load %arg4[%c0_65, %c0_66] : memref<1x64xf32, #tpu.memory_space<vmem>>, vector<1x64xf32>
    %68 = vector.broadcast %67 : vector<1x64xf32> to vector<64x64xf32>
    %69 = arith.addf %66, %68 : vector<64x64xf32>
    %c0_67 = arith.constant 0 : index
    %c0_68 = arith.constant 0 : index
    %c0_69 = arith.constant 0 : index
    %70 = vector.load %arg5[%c0_67, %c0_68, %c0_69] : memref<1x64x64xf32, #tpu.memory_space<vmem>>, vector<1x64x64xf32>
    %71 = vector.shape_cast %70 : vector<1x64x64xf32> to vector<64x64xf32>
    %72 = arith.addf %69, %71 : vector<64x64xf32>
    %cst_70 = arith.constant 0.000000e+00 : f32
    %73 = vector.broadcast %cst_70 : f32 to vector<64x64xf32>
    %74 = arith.maximumf %72, %73 : vector<64x64xf32>
    %c0_71 = arith.constant 0 : index
    %c0_72 = arith.constant 0 : index
    %c0_73 = arith.constant 0 : index
    %75 = vector.load %arg6[%c0_71, %c0_72, %c0_73] : memref<1x64x64xf32, #tpu.memory_space<vmem>>, vector<1x64x64xf32>
    %76 = vector.shape_cast %75 : vector<1x64x64xf32> to vector<64x64xf32>
    %77 = vector.shape_cast %74 : vector<64x64xf32> to vector<1x64x64xf32>
    tpu.vector_store %arg6[%c0_71, %c0_72, %c0_73], %77 {strides = array<i32>} : memref<1x64x64xf32, #tpu.memory_space<vmem>>, vector<1x64x64xf32>,
    return
  }
  func.func @transform_0(%arg0: i32) -> (i32, i32, i32, i32) {
    %c0_i32 = arith.constant 0 : i32
    %c0_i32_0 = arith.constant 0 : i32
    %c0_i32_1 = arith.constant 0 : i32
    %c0_i32_2 = arith.constant 0 : i32
    return %arg0, %c0_i32, %c0_i32_0, %c0_i32_1 : i32, i32, i32, i32
  }
  func.func @transform_1(%arg0: i32) -> (i32, i32, i32) {
    %c0_i32 = arith.constant 0 : i32
    %c0_i32_0 = arith.constant 0 : i32
    %c0_i32_1 = arith.constant 0 : i32
    %c0_i32_2 = arith.constant 0 : i32
    return %c0_i32, %c0_i32_0, %c0_i32_1 : i32, i32, i32
  }
  func.func @transform_2(%arg0: i32) -> (i32, i32) {
    %c0_i32 = arith.constant 0 : i32
    %c0_i32_0 = arith.constant 0 : i32
    %c0_i32_1 = arith.constant 0 : i32
    return %c0_i32, %c0_i32_0 : i32, i32
  }
  func.func @transform_3(%arg0: i32) -> (i32, i32) {
    %c0_i32 = arith.constant 0 : i32
    %c0_i32_0 = arith.constant 0 : i32
    %c0_i32_1 = arith.constant 0 : i32
    return %c0_i32, %c0_i32_0 : i32, i32
  }
  func.func @transform_4(%arg0: i32) -> (i32, i32, i32) {
    %c0_i32 = arith.constant 0 : i32
    %c0_i32_0 = arith.constant 0 : i32
    %c0_i32_1 = arith.constant 0 : i32
    return %arg0, %c0_i32, %c0_i32_0 : i32, i32, i32
  }
  func.func @transform_5(%arg0: i32) -> (i32, i32, i32) {
    %c0_i32 = arith.constant 0 : i32
    %c0_i32_0 = arith.constant 0 : i32
    %c0_i32_1 = arith.constant 0 : i32
    return %arg0, %c0_i32, %c0_i32_0 : i32, i32, i32
  }
}

module attributes {stable_mosaic.version = 11 : i64} {
  func.func @_conv3x3_block_kernel(%arg0: i32, %arg1: memref<1x10x10x64xf32, #tpu.memory_space<vmem>>, %arg2: memref<9x64x64xf32, #tpu.memory_space<vmem>>, %arg3: memref<1x64xf32, #tpu.memory_space<vmem>>, %arg4: memref<1x64xf32, #tpu.memory_space<vmem>>, %arg5: memref<1x64x64xf32, #tpu.memory_space<vmem>>, %arg6: memref<1x64x64xf32, #tpu.memory_space<vmem>>) attributes {dimension_semantics = [#tpu.dimension_semantics<parallel>], iteration_bounds = array<i64: 2>, scalar_prefetch = 0 : i64, scratch_operands = 0 : i64, tpu.core_type = #tpu.core_type<tc>, window_params = [{transform_indices = @transform_0, window_bounds = array<i64: 1, 10, 10, 64>}, {pipeline_mode = #tpu.pipeline_mode<synchronous>, transform_indices = @transform_1, window_bounds = array<i64: 9, 64, 64>}, {pipeline_mode = #tpu.pipeline_mode<synchronous>, transform_indices = @transform_2, window_bounds = array<i64: 1, 64>}, {pipeline_mode = #tpu.pipeline_mode<synchronous>, transform_indices = @transform_3, window_bounds = array<i64: 1, 64>}, {transform_indices = @transform_4, window_bounds = array<i64: 1, 64, 64>}, {transform_indices = @transform_5, window_bounds = array<i64: 1, 64, 64>}]} {
    %cst = arith.constant 0.000000e+00 : f32
    %0 = vector.broadcast %cst : f32 to vector<64x64xf32>
    %c0 = arith.constant 0 : index
    %c0_0 = arith.constant 0 : index
    %c0_1 = arith.constant 0 : index
    %c0_2 = arith.constant 0 : index
    %1 = vector.load %arg1[%c0, %c0_0, %c0_1, %c0_2] : memref<1x10x10x64xf32, #tpu.memory_space<vmem>>, vector<1x8x8x64xf32>
    %2 = vector.shape_cast %1 : vector<1x8x8x64xf32> to vector<8x8x64xf32>
    %3 = vector.shape_cast %2 : vector<8x8x64xf32> to vector<64x64xf32>
    %c0_3 = arith.constant 0 : index
    %c0_4 = arith.constant 0 : index
    %c0_5 = arith.constant 0 : index
    %4 = vector.load %arg2[%c0_3, %c0_4, %c0_5] : memref<9x64x64xf32, #tpu.memory_space<vmem>>, vector<1x64x64xf32>
    %5 = vector.shape_cast %4 : vector<1x64x64xf32> to vector<64x64xf32>
    %cst_6 = arith.constant dense<0.000000e+00> : vector<64x64xf32>
    %6 = tpu.matmul %3, %5, %cst_6 {dimension_numbers = #tpu.dot_dimension_numbers<[1], [0], [0], [1], [0, 0, 1, 1], [], []>} : vector<64x64xf32>, vector<64x64xf32>, vector<64x64xf32> -> vector<64x64xf32>
    %7 = arith.addf %0, %6 : vector<64x64xf32>
    %c0_7 = arith.constant 0 : index
    %c0_8 = arith.constant 0 : index
    %c1 = arith.constant 1 : index
    %c0_9 = arith.constant 0 : index
    %8 = vector.load %arg1[%c0_7, %c0_8, %c1, %c0_9] : memref<1x10x10x64xf32, #tpu.memory_space<vmem>>, vector<1x8x8x64xf32>
    %9 = vector.shape_cast %8 : vector<1x8x8x64xf32> to vector<8x8x64xf32>
    %10 = vector.shape_cast %9 : vector<8x8x64xf32> to vector<64x64xf32>
    %c1_10 = arith.constant 1 : index
    %c0_11 = arith.constant 0 : index
    %c0_12 = arith.constant 0 : index
    %11 = vector.load %arg2[%c1_10, %c0_11, %c0_12] : memref<9x64x64xf32, #tpu.memory_space<vmem>>, vector<1x64x64xf32>
    %12 = vector.shape_cast %11 : vector<1x64x64xf32> to vector<64x64xf32>
    %cst_13 = arith.constant dense<0.000000e+00> : vector<64x64xf32>
    %13 = tpu.matmul %10, %12, %cst_13 {dimension_numbers = #tpu.dot_dimension_numbers<[1], [0], [0], [1], [0, 0, 1, 1], [], []>} : vector<64x64xf32>, vector<64x64xf32>, vector<64x64xf32> -> vector<64x64xf32>
    %14 = arith.addf %7, %13 : vector<64x64xf32>
    %c0_14 = arith.constant 0 : index
    %c0_15 = arith.constant 0 : index
    %c2 = arith.constant 2 : index
    %c0_16 = arith.constant 0 : index
    %15 = vector.load %arg1[%c0_14, %c0_15, %c2, %c0_16] : memref<1x10x10x64xf32, #tpu.memory_space<vmem>>, vector<1x8x8x64xf32>
    %16 = vector.shape_cast %15 : vector<1x8x8x64xf32> to vector<8x8x64xf32>
    %17 = vector.shape_cast %16 : vector<8x8x64xf32> to vector<64x64xf32>
    %c2_17 = arith.constant 2 : index
    %c0_18 = arith.constant 0 : index
    %c0_19 = arith.constant 0 : index
    %18 = vector.load %arg2[%c2_17, %c0_18, %c0_19] : memref<9x64x64xf32, #tpu.memory_space<vmem>>, vector<1x64x64xf32>
    %19 = vector.shape_cast %18 : vector<1x64x64xf32> to vector<64x64xf32>
    %cst_20 = arith.constant dense<0.000000e+00> : vector<64x64xf32>
    %20 = tpu.matmul %17, %19, %cst_20 {dimension_numbers = #tpu.dot_dimension_numbers<[1], [0], [0], [1], [0, 0, 1, 1], [], []>} : vector<64x64xf32>, vector<64x64xf32>, vector<64x64xf32> -> vector<64x64xf32>
    %21 = arith.addf %14, %20 : vector<64x64xf32>
    %c0_21 = arith.constant 0 : index
    %c1_22 = arith.constant 1 : index
    %c0_23 = arith.constant 0 : index
    %c0_24 = arith.constant 0 : index
    %22 = vector.load %arg1[%c0_21, %c1_22, %c0_23, %c0_24] : memref<1x10x10x64xf32, #tpu.memory_space<vmem>>, vector<1x8x8x64xf32>
    %23 = vector.shape_cast %22 : vector<1x8x8x64xf32> to vector<8x8x64xf32>
    %24 = vector.shape_cast %23 : vector<8x8x64xf32> to vector<64x64xf32>
    %c3 = arith.constant 3 : index
    %c0_25 = arith.constant 0 : index
    %c0_26 = arith.constant 0 : index
    %25 = vector.load %arg2[%c3, %c0_25, %c0_26] : memref<9x64x64xf32, #tpu.memory_space<vmem>>, vector<1x64x64xf32>
    %26 = vector.shape_cast %25 : vector<1x64x64xf32> to vector<64x64xf32>
    %cst_27 = arith.constant dense<0.000000e+00> : vector<64x64xf32>
    %27 = tpu.matmul %24, %26, %cst_27 {dimension_numbers = #tpu.dot_dimension_numbers<[1], [0], [0], [1], [0, 0, 1, 1], [], []>} : vector<64x64xf32>, vector<64x64xf32>, vector<64x64xf32> -> vector<64x64xf32>
    %28 = arith.addf %21, %27 : vector<64x64xf32>
    %c0_28 = arith.constant 0 : index
    %c1_29 = arith.constant 1 : index
    %c1_30 = arith.constant 1 : index
    %c0_31 = arith.constant 0 : index
    %29 = vector.load %arg1[%c0_28, %c1_29, %c1_30, %c0_31] : memref<1x10x10x64xf32, #tpu.memory_space<vmem>>, vector<1x8x8x64xf32>
    %30 = vector.shape_cast %29 : vector<1x8x8x64xf32> to vector<8x8x64xf32>
    %31 = vector.shape_cast %30 : vector<8x8x64xf32> to vector<64x64xf32>
    %c4 = arith.constant 4 : index
    %c0_32 = arith.constant 0 : index
    %c0_33 = arith.constant 0 : index
    %32 = vector.load %arg2[%c4, %c0_32, %c0_33] : memref<9x64x64xf32, #tpu.memory_space<vmem>>, vector<1x64x64xf32>
    %33 = vector.shape_cast %32 : vector<1x64x64xf32> to vector<64x64xf32>
    %cst_34 = arith.constant dense<0.000000e+00> : vector<64x64xf32>
    %34 = tpu.matmul %31, %33, %cst_34 {dimension_numbers = #tpu.dot_dimension_numbers<[1], [0], [0], [1], [0, 0, 1, 1], [], []>} : vector<64x64xf32>, vector<64x64xf32>, vector<64x64xf32> -> vector<64x64xf32>
    %35 = arith.addf %28, %34 : vector<64x64xf32>
    %c0_35 = arith.constant 0 : index
    %c1_36 = arith.constant 1 : index
    %c2_37 = arith.constant 2 : index
    %c0_38 = arith.constant 0 : index
    %36 = vector.load %arg1[%c0_35, %c1_36, %c2_37, %c0_38] : memref<1x10x10x64xf32, #tpu.memory_space<vmem>>, vector<1x8x8x64xf32>
    %37 = vector.shape_cast %36 : vector<1x8x8x64xf32> to vector<8x8x64xf32>
    %38 = vector.shape_cast %37 : vector<8x8x64xf32> to vector<64x64xf32>
    %c5 = arith.constant 5 : index
    %c0_39 = arith.constant 0 : index
    %c0_40 = arith.constant 0 : index
    %39 = vector.load %arg2[%c5, %c0_39, %c0_40] : memref<9x64x64xf32, #tpu.memory_space<vmem>>, vector<1x64x64xf32>
    %40 = vector.shape_cast %39 : vector<1x64x64xf32> to vector<64x64xf32>
    %cst_41 = arith.constant dense<0.000000e+00> : vector<64x64xf32>
    %41 = tpu.matmul %38, %40, %cst_41 {dimension_numbers = #tpu.dot_dimension_numbers<[1], [0], [0], [1], [0, 0, 1, 1], [], []>} : vector<64x64xf32>, vector<64x64xf32>, vector<64x64xf32> -> vector<64x64xf32>
    %42 = arith.addf %35, %41 : vector<64x64xf32>
    %c0_42 = arith.constant 0 : index
    %c2_43 = arith.constant 2 : index
    %c0_44 = arith.constant 0 : index
    %c0_45 = arith.constant 0 : index
    %43 = vector.load %arg1[%c0_42, %c2_43, %c0_44, %c0_45] : memref<1x10x10x64xf32, #tpu.memory_space<vmem>>, vector<1x8x8x64xf32>
    %44 = vector.shape_cast %43 : vector<1x8x8x64xf32> to vector<8x8x64xf32>
    %45 = vector.shape_cast %44 : vector<8x8x64xf32> to vector<64x64xf32>
    %c6 = arith.constant 6 : index
    %c0_46 = arith.constant 0 : index
    %c0_47 = arith.constant 0 : index
    %46 = vector.load %arg2[%c6, %c0_46, %c0_47] : memref<9x64x64xf32, #tpu.memory_space<vmem>>, vector<1x64x64xf32>
    %47 = vector.shape_cast %46 : vector<1x64x64xf32> to vector<64x64xf32>
    %cst_48 = arith.constant dense<0.000000e+00> : vector<64x64xf32>
    %48 = tpu.matmul %45, %47, %cst_48 {dimension_numbers = #tpu.dot_dimension_numbers<[1], [0], [0], [1], [0, 0, 1, 1], [], []>} : vector<64x64xf32>, vector<64x64xf32>, vector<64x64xf32> -> vector<64x64xf32>
    %49 = arith.addf %42, %48 : vector<64x64xf32>
    %c0_49 = arith.constant 0 : index
    %c2_50 = arith.constant 2 : index
    %c1_51 = arith.constant 1 : index
    %c0_52 = arith.constant 0 : index
    %50 = vector.load %arg1[%c0_49, %c2_50, %c1_51, %c0_52] : memref<1x10x10x64xf32, #tpu.memory_space<vmem>>, vector<1x8x8x64xf32>
    %51 = vector.shape_cast %50 : vector<1x8x8x64xf32> to vector<8x8x64xf32>
    %52 = vector.shape_cast %51 : vector<8x8x64xf32> to vector<64x64xf32>
    %c7 = arith.constant 7 : index
    %c0_53 = arith.constant 0 : index
    %c0_54 = arith.constant 0 : index
    %53 = vector.load %arg2[%c7, %c0_53, %c0_54] : memref<9x64x64xf32, #tpu.memory_space<vmem>>, vector<1x64x64xf32>
    %54 = vector.shape_cast %53 : vector<1x64x64xf32> to vector<64x64xf32>
    %cst_55 = arith.constant dense<0.000000e+00> : vector<64x64xf32>
    %55 = tpu.matmul %52, %54, %cst_55 {dimension_numbers = #tpu.dot_dimension_numbers<[1], [0], [0], [1], [0, 0, 1, 1], [], []>} : vector<64x64xf32>, vector<64x64xf32>, vector<64x64xf32> -> vector<64x64xf32>
    %56 = arith.addf %49, %55 : vector<64x64xf32>
    %c0_56 = arith.constant 0 : index
    %c2_57 = arith.constant 2 : index
    %c2_58 = arith.constant 2 : index
    %c0_59 = arith.constant 0 : index
    %57 = vector.load %arg1[%c0_56, %c2_57, %c2_58, %c0_59] : memref<1x10x10x64xf32, #tpu.memory_space<vmem>>, vector<1x8x8x64xf32>
    %58 = vector.shape_cast %57 : vector<1x8x8x64xf32> to vector<8x8x64xf32>
    %59 = vector.shape_cast %58 : vector<8x8x64xf32> to vector<64x64xf32>
    %c8 = arith.constant 8 : index
    %c0_60 = arith.constant 0 : index
    %c0_61 = arith.constant 0 : index
    %60 = vector.load %arg2[%c8, %c0_60, %c0_61] : memref<9x64x64xf32, #tpu.memory_space<vmem>>, vector<1x64x64xf32>
    %61 = vector.shape_cast %60 : vector<1x64x64xf32> to vector<64x64xf32>
    %cst_62 = arith.constant dense<0.000000e+00> : vector<64x64xf32>
    %62 = tpu.matmul %59, %61, %cst_62 {dimension_numbers = #tpu.dot_dimension_numbers<[1], [0], [0], [1], [0, 0, 1, 1], [], []>} : vector<64x64xf32>, vector<64x64xf32>, vector<64x64xf32> -> vector<64x64xf32>
    %63 = arith.addf %56, %62 : vector<64x64xf32>
    %c0_63 = arith.constant 0 : index
    %c0_64 = arith.constant 0 : index
    %64 = vector.load %arg3[%c0_63, %c0_64] : memref<1x64xf32, #tpu.memory_space<vmem>>, vector<1x64xf32>
    %65 = vector.broadcast %64 : vector<1x64xf32> to vector<64x64xf32>
    %66 = arith.mulf %63, %65 : vector<64x64xf32>
    %c0_65 = arith.constant 0 : index
    %c0_66 = arith.constant 0 : index
    %67 = vector.load %arg4[%c0_65, %c0_66] : memref<1x64xf32, #tpu.memory_space<vmem>>, vector<1x64xf32>
    %68 = vector.broadcast %67 : vector<1x64xf32> to vector<64x64xf32>
    %69 = arith.addf %66, %68 : vector<64x64xf32>
    %c0_67 = arith.constant 0 : index
    %c0_68 = arith.constant 0 : index
    %c0_69 = arith.constant 0 : index
    %70 = vector.load %arg5[%c0_67, %c0_68, %c0_69] : memref<1x64x64xf32, #tpu.memory_space<vmem>>, vector<1x64x64xf32>
    %71 = vector.shape_cast %70 : vector<1x64x64xf32> to vector<64x64xf32>
    %72 = arith.addf %69, %71 : vector<64x64xf32>
    %cst_70 = arith.constant 0.000000e+00 : f32
    %73 = vector.broadcast %cst_70 : f32 to vector<64x64xf32>
    %74 = arith.maximumf %72, %73 : vector<64x64xf32>
    %c0_71 = arith.constant 0 : index
    %c0_72 = arith.constant 0 : index
    %c0_73 = arith.constant 0 : index
    %75 = vector.load %arg6[%c0_71, %c0_72, %c0_73] : memref<1x64x64xf32, #tpu.memory_space<vmem>>, vector<1x64x64xf32>
    %76 = vector.shape_cast %75 : vector<1x64x64xf32> to vector<64x64xf32>
    %77 = vector.shape_cast %74 : vector<64x64xf32> to vector<1x64x64xf32>
    tpu.vector_store %arg6[%c0_71, %c0_72, %c0_73], %77 {strides = array<i32>} : memref<1x64x64xf32, #tpu.memory_space<vmem>>, vector<1x64x64xf32>,
    return
  }
  func.func @transform_0(%arg0: i32) -> (i32, i32, i32, i32) {
    %c0_i32 = arith.constant 0 : i32
    %c0_i32_0 = arith.constant 0 : i32
    %c0_i32_1 = arith.constant 0 : i32
    %c0_i32_2 = arith.constant 0 : i32
    return %arg0, %c0_i32, %c0_i32_0, %c0_i32_1 : i32, i32, i32, i32
  }
  func.func @transform_1(%arg0: i32) -> (i32, i32, i32) {
    %c0_i32 = arith.constant 0 : i32
    %c0_i32_0 = arith.constant 0 : i32
    %c0_i32_1 = arith.constant 0 : i32
    %c0_i32_2 = arith.constant 0 : i32
    return %c0_i32, %c0_i32_0, %c0_i32_1 : i32, i32, i32
  }
  func.func @transform_2(%arg0: i32) -> (i32, i32) {
    %c0_i32 = arith.constant 0 : i32
    %c0_i32_0 = arith.constant 0 : i32
    %c0_i32_1 = arith.constant 0 : i32
    return %c0_i32, %c0_i32_0 : i32, i32
  }
  func.func @transform_3(%arg0: i32) -> (i32, i32) {
    %c0_i32 = arith.constant 0 : i32
    %c0_i32_0 = arith.constant 0 : i32
    %c0_i32_1 = arith.constant 0 : i32
    return %c0_i32, %c0_i32_0 : i32, i32
  }
  func.func @transform_4(%arg0: i32) -> (i32, i32, i32) {
    %c0_i32 = arith.constant 0 : i32
    %c0_i32_0 = arith.constant 0 : i32
    %c0_i32_1 = arith.constant 0 : i32
    return %arg0, %c0_i32, %c0_i32_0 : i32, i32, i32
  }
  func.func @transform_5(%arg0: i32) -> (i32, i32, i32) {
    %c0_i32 = arith.constant 0 : i32
    %c0_i32_0 = arith.constant 0 : i32
    %c0_i32_1 = arith.constant 0 : i32
    return %arg0, %c0_i32, %c0_i32_0 : i32, i32, i32
  }
}

</mosaic_0001>

<llo_original>
// kernel: resnet_encoder_forward.5
$region0: #{resnet_encoder_forward.5}
  #allocation0 [shape = 'u32[]', space=smem, size = 0x4, offset = 0x4, fixed_abs, tag = 'smem constant byte address 0x4 - core index']
  #allocation1 [shape = 'u32[72,128]{1,0:T(1,128)}', space=vmem, size = 0x9000, scoped, tag = 'internal scratch']
  %s0 = inlined_call_operand.vmem [shape: f32[128,147], index: 0, kind: input, shape index: {}]
  %s1 = inlined_call_operand.vmem [shape: f32[147,64], index: 1, kind: input, shape index: {}]
  %s2 = inlined_call_operand.vmem [shape: f32[128,64], index: 2, kind: output, shape index: {}]
  %s3 = sld [smem:[#allocation0]]
  $region18: #{resnet_encoder_forward.5} parent=0
    _
  %s5 = ssub.s32 1, %s3
  %s6 = scalar_select 0, %s5, %s3
  // Predicated region
  $region2: #{resnet_encoder_forward.5} parent=0 // pred_check
    _
  $region3: #{resnet_encoder_forward.5} parent=0 // pred_check_branch
    %8 = sbr.rel (0) target = $region5
  $region4: #{resnet_encoder_forward.5} parent=0 // pred_region
    _
  $region5: #{resnet_encoder_forward.5} parent=0 // pred_fallthru
    _
  // Predicated region
  $region6: #{resnet_encoder_forward.5} parent=0 // pred_check
    _
  $region7: #{resnet_encoder_forward.5} parent=0 // pred_check_branch
    %10 = sbr.rel (0) target = $region9
  $region8: #{resnet_encoder_forward.5} parent=0 // pred_region
    _
  $region9: #{resnet_encoder_forward.5} parent=0 // pred_fallthru
    _
  %v11 = vld [vmem:[%s0] sm:$0xff]
  %v12 = vld [vmem:[%s0 + $0x8] sm:$0xff]
  %v13 = vld [vmem:[%s0 + $0x10] sm:$0xff]
  %v14 = vld [vmem:[%s0 + $0x18] sm:$0xff]
  %v15 = vld [vmem:[%s0 + $0x20] sm:$0xff]
  %v16 = vld [vmem:[%s0 + $0x28] sm:$0xff]
  %v17 = vld [vmem:[%s0 + $0x30] sm:$0xff]
  %v18 = vld [vmem:[%s0 + $0x38] sm:$0xff]
  %v19 = vld [vmem:[%s0 + $0x40] sm:$0xff]
  %v20 = vld [vmem:[%s0 + $0x48] sm:$0xff]
  %v21 = vld [vmem:[%s0 + $0x50] sm:$0xff]
  %v22 = vld [vmem:[%s0 + $0x58] sm:$0xff]
  %v23 = vld [vmem:[%s0 + $0x60] sm:$0xff]
  %v24 = vld [vmem:[%s0 + $0x68] sm:$0xff]
  %v25 = vld [vmem:[%s0 + $0x70] sm:$0xff]
  %v26 = vld [vmem:[%s0 + $0x78] sm:$0xff]
  %v27 = vld [vmem:[%s0 + $0x80] sm:$0xff]
  %v28 = vld [vmem:[%s0 + $0x88] sm:$0xff]
  %v29 = vld [vmem:[%s0 + $0x90] sm:$0xff]
  %v30 = vld [vmem:[%s0 + $0x98] sm:$0xff]
  %v31 = vld [vmem:[%s0 + $0xa0] sm:$0xff]
  %v32 = vld [vmem:[%s0 + $0xa8] sm:$0xff]
  %v33 = vld [vmem:[%s0 + $0xb0] sm:$0xff]
  %v34 = vld [vmem:[%s0 + $0xb8] sm:$0xff]
  %v35 = vld [vmem:[%s0 + $0xc0] sm:$0xff]
  %v36 = vld [vmem:[%s0 + $0xc8] sm:$0xff]
  %v37 = vld [vmem:[%s0 + $0xd0] sm:$0xff]
  %v38 = vld [vmem:[%s0 + $0xd8] sm:$0xff]
  %v39 = vld [vmem:[%s0 + $0xe0] sm:$0xff]
  %v40 = vld [vmem:[%s0 + $0xe8] sm:$0xff]
  %v41 = vld [vmem:[%s0 + $0xf0] sm:$0xff]
  %v42 = vld [vmem:[%s0 + $0xf8] sm:$0xff]
  %v43 = vld [vmem:[%s1] sm:$0xff]
  %v44 = vld [vmem:[%s1 + $0x8] sm:$0xff]
  %v45 = vld [vmem:[%s1 + $0x10] sm:$0xff]
  %v46 = vld [vmem:[%s1 + $0x18] sm:$0xff]
  %v47 = vld [vmem:[%s1 + $0x20] sm:$0xff]
  %v48 = vld [vmem:[%s1 + $0x28] sm:$0xff]
  %v49 = vld [vmem:[%s1 + $0x30] sm:$0xff]
  %v50 = vld [vmem:[%s1 + $0x38] sm:$0xff]
  %v51 = vld [vmem:[%s1 + $0x40] sm:$0xff]
  %v52 = vld [vmem:[%s1 + $0x48] sm:$0xff]
  %v53 = vld [vmem:[%s1 + $0x50] sm:$0xff]
  %v54 = vld [vmem:[%s1 + $0x58] sm:$0xff]
  %v55 = vld [vmem:[%s1 + $0x60] sm:$0xff]
  %v56 = vld [vmem:[%s1 + $0x68] sm:$0xff]
  %v57 = vld [vmem:[%s1 + $0x70] sm:$0xff]
  %v58 = vld [vmem:[%s1 + $0x78] sm:$0xff]
  %v59 = vld [vmem:[%s1 + $0x80] sm:$0xff]
  %v60 = vld [vmem:[%s1 + $0x88] sm:$0xff]
  %v61 = vld [vmem:[%s1 + $0x90] sm:$0x7]
  %vm62 = vcmask 154624
  %v64 = vsel %vm62, %v12, 0
  %v67 = vsel %vm62, %v14, 0
  %v70 = vsel %vm62, %v16, 0
  %v73 = vsel %vm62, %v18, 0
  %v76 = vsel %vm62, %v20, 0
  %v79 = vsel %vm62, %v22, 0
  %v82 = vsel %vm62, %v24, 0
  %v85 = vsel %vm62, %v26, 0
  %v88 = vsel %vm62, %v28, 0
  %v91 = vsel %vm62, %v30, 0
  %v94 = vsel %vm62, %v32, 0
  %v97 = vsel %vm62, %v34, 0
  %v100 = vsel %vm62, %v36, 0
  %v103 = vsel %vm62, %v38, 0
  %v106 = vsel %vm62, %v40, 0
  %v109 = vsel %vm62, %v42, 0
  %vm111 = vcmask 1042432
  %v113 = vsel %vm111, %v61, 0
  %115 = vmatpush.msra.mxu0 %v58
  %116 = vmatpush.msra.mxu0 %v57
  %117 = vmatpush.msra.mxu0 %v56
  %118 = vmatpush.msra.mxu0 %v55
  %119 = vmatpush.msra.mxu0 %v54
  %120 = vmatpush.msra.mxu0 %v53
  %121 = vmatpush.msra.mxu0 %v52
  %122 = vmatpush.msra.mxu0 %v51
  %123 = vmatpush.msra.mxu0 %v50
  %124 = vmatpush.msra.mxu0 %v49
  %125 = vmatpush.msra.mxu0 %v48
  %126 = vmatpush.msra.mxu0 %v47
  %127 = vmatpush.msra.mxu0 %v46
  %128 = vmatpush.msra.mxu0 %v45
  %129 = vmatpush.msra.mxu0 %v44
  %130 = vmatpush.msra.mxu0 %v43
  %131 = vmatmul.f32.gmra.mxu0 %v11
  %v132 = vpop.f32.mrf.mxu0
  %v133 = vadd.f32 0.0, %v132
  %134 = vmatmul.f32.gmra.mxu0 %v13
  %v135 = vpop.f32.mrf.mxu0
  %v136 = vadd.f32 0.0, %v135
  %137 = vmatmul.f32.gmra.mxu0 %v15
  %v138 = vpop.f32.mrf.mxu0
  %v139 = vadd.f32 0.0, %v138
  %140 = vmatmul.f32.gmra.mxu0 %v17
  %v141 = vpop.f32.mrf.mxu0
  %v142 = vadd.f32 0.0, %v141
  %143 = vmatmul.f32.gmra.mxu0 %v19
  %v144 = vpop.f32.mrf.mxu0
  %v145 = vadd.f32 0.0, %v144
  %146 = vmatmul.f32.gmra.mxu0 %v21
  %v147 = vpop.f32.mrf.mxu0
  %v148 = vadd.f32 0.0, %v147
  %149 = vmatmul.f32.gmra.mxu0 %v23
  %v150 = vpop.f32.mrf.mxu0
  %v151 = vadd.f32 0.0, %v150
  %152 = vmatmul.f32.gmra.mxu0 %v25
  %v153 = vpop.f32.mrf.mxu0
  %v154 = vadd.f32 0.0, %v153
  %155 = vmatmul.f32.gmra.mxu0 %v27
  %v156 = vpop.f32.mrf.mxu0
  %v157 = vadd.f32 0.0, %v156
  %158 = vmatmul.f32.gmra.mxu0 %v29
  %v159 = vpop.f32.mrf.mxu0
  %v160 = vadd.f32 0.0, %v159
  %161 = vmatmul.f32.gmra.mxu0 %v31
  %v162 = vpop.f32.mrf.mxu0
  %v163 = vadd.f32 0.0, %v162
  %164 = vmatmul.f32.gmra.mxu0 %v33
  %v165 = vpop.f32.mrf.mxu0
  %v166 = vadd.f32 0.0, %v165
  %167 = vmatmul.f32.gmra.mxu0 %v35
  %v168 = vpop.f32.mrf.mxu0
  %v169 = vadd.f32 0.0, %v168
  %170 = vmatmul.f32.gmra.mxu0 %v37
  %v171 = vpop.f32.mrf.mxu0
  %v172 = vadd.f32 0.0, %v171
  %173 = vmatmul.f32.gmra.mxu0 %v39
  %v174 = vpop.f32.mrf.mxu0
  %v175 = vadd.f32 0.0, %v174
  %176 = vmatmul.f32.gmra.mxu0 %v41
  %v177 = vpop.f32.mrf.mxu0
  %v178 = vadd.f32 0.0, %v177
  %179 = vdwg.mxu0
  %180 = vmatpush.msra.mxu0 0.0
  %181 = vmatpush.msra.mxu0 0.0
  %182 = vmatpush.msra.mxu0 0.0
  %183 = vmatpush.msra.mxu0 0.0
  %184 = vmatpush.msra.mxu0 0.0
  %185 = vmatpush.msra.mxu0 0.0
  %186 = vmatpush.msra.mxu0 0.0
  %187 = vmatpush.msra.mxu0 0.0
  %188 = vmatpush.msra.mxu0 0.0
  %189 = vmatpush.msra.mxu0 0.0
  %190 = vmatpush.msra.mxu0 0.0
  %191 = vmatpush.msra.mxu0 0.0
  %192 = vmatpush.msra.mxu0 0.0
  %193 = vmatpush.msra.mxu0 %v113
  %194 = vmatpush.msra.mxu0 %v60
  %195 = vmatpush.msra.mxu0 %v59
  %196 = vmatmul.f32.gmra.mxu0 %v64
  %v197 = vpop.f32.mrf.mxu0
  %v198 = vadd.f32 %v133, %v197
  %199 = vmatmul.f32.gmra.mxu0 %v67
  %v200 = vpop.f32.mrf.mxu0
  %v201 = vadd.f32 %v136, %v200
  %202 = vmatmul.f32.gmra.mxu0 %v70
  %v203 = vpop.f32.mrf.mxu0
  %v204 = vadd.f32 %v139, %v203
  %205 = vmatmul.f32.gmra.mxu0 %v73
  %v206 = vpop.f32.mrf.mxu0
  %v207 = vadd.f32 %v142, %v206
  %208 = vmatmul.f32.gmra.mxu0 %v76
  %v209 = vpop.f32.mrf.mxu0
  %v210 = vadd.f32 %v145, %v209
  %211 = vmatmul.f32.gmra.mxu0 %v79
  %v212 = vpop.f32.mrf.mxu0
  %v213 = vadd.f32 %v148, %v212
  %214 = vmatmul.f32.gmra.mxu0 %v82
  %v215 = vpop.f32.mrf.mxu0
  %v216 = vadd.f32 %v151, %v215
  %217 = vmatmul.f32.gmra.mxu0 %v85
  %v218 = vpop.f32.mrf.mxu0
  %v219 = vadd.f32 %v154, %v218
  %220 = vmatmul.f32.gmra.mxu0 %v88
  %v221 = vpop.f32.mrf.mxu0
  %v222 = vadd.f32 %v157, %v221
  %223 = vmatmul.f32.gmra.mxu0 %v91
  %v224 = vpop.f32.mrf.mxu0
  %v225 = vadd.f32 %v160, %v224
  %226 = vmatmul.f32.gmra.mxu0 %v94
  %v227 = vpop.f32.mrf.mxu0
  %v228 = vadd.f32 %v163, %v227
  %229 = vmatmul.f32.gmra.mxu0 %v97
  %v230 = vpop.f32.mrf.mxu0
  %v231 = vadd.f32 %v166, %v230
  %232 = vmatmul.f32.gmra.mxu0 %v100
  %v233 = vpop.f32.mrf.mxu0
  %v234 = vadd.f32 %v169, %v233
  %235 = vmatmul.f32.gmra.mxu0 %v103
  %v236 = vpop.f32.mrf.mxu0
  %v237 = vadd.f32 %v172, %v236
  %238 = vmatmul.f32.gmra.mxu0 %v106
  %v239 = vpop.f32.mrf.mxu0
  %v240 = vadd.f32 %v175, %v239
  %241 = vmatmul.f32.gmra.mxu0 %v109
  %v242 = vpop.f32.mrf.mxu0
  %v243 = vadd.f32 %v178, %v242
  %244 = vdwg.mxu0
  %vm245 = vcmask 523264
  %246 = vst.msk [vmem:[%s2] sm:$0xff] %vm245, %v198
  %247 = vst.msk [vmem:[%s2 + $0x8] sm:$0xff] %vm245, %v201
  %248 = vst.msk [vmem:[%s2 + $0x10] sm:$0xff] %vm245, %v204
  %249 = vst.msk [vmem:[%s2 + $0x18] sm:$0xff] %vm245, %v207
  %250 = vst.msk [vmem:[%s2 + $0x20] sm:$0xff] %vm245, %v210
  %251 = vst.msk [vmem:[%s2 + $0x28] sm:$0xff] %vm245, %v213
  %252 = vst.msk [vmem:[%s2 + $0x30] sm:$0xff] %vm245, %v216
  %253 = vst.msk [vmem:[%s2 + $0x38] sm:$0xff] %vm245, %v219
  %254 = vst.msk [vmem:[%s2 + $0x40] sm:$0xff] %vm245, %v222
  %255 = vst.msk [vmem:[%s2 + $0x48] sm:$0xff] %vm245, %v225
  %256 = vst.msk [vmem:[%s2 + $0x50] sm:$0xff] %vm245, %v228
  %257 = vst.msk [vmem:[%s2 + $0x58] sm:$0xff] %vm245, %v231
  %258 = vst.msk [vmem:[%s2 + $0x60] sm:$0xff] %vm245, %v234
  %259 = vst.msk [vmem:[%s2 + $0x68] sm:$0xff] %vm245, %v237
  %260 = vst.msk [vmem:[%s2 + $0x70] sm:$0xff] %vm245, %v240
  %261 = vst.msk [vmem:[%s2 + $0x78] sm:$0xff] %vm245, %v243
  // Predicated region
  $region10: #{resnet_encoder_forward.5} parent=0 // pred_check
    _
  $region11: #{resnet_encoder_forward.5} parent=0 // pred_check_branch
    %263 = sbr.rel (0) target = $region13
  $region12: #{resnet_encoder_forward.5} parent=0 // pred_region
    _
  $region13: #{resnet_encoder_forward.5} parent=0 // pred_fallthru
    _
  // Predicated region
  $region14: #{resnet_encoder_forward.5} parent=0 // pred_check
    _
  $region15: #{resnet_encoder_forward.5} parent=0 // pred_check_branch
    %265 = sbr.rel (0) target = $region17
  $region16: #{resnet_encoder_forward.5} parent=0 // pred_region
    _
  $region17: #{resnet_encoder_forward.5} parent=0 // pred_fallthru
    _

// kernel: resnet_encoder_forward.6
$region0: #{resnet_encoder_forward.6}
  #allocation0 [shape = 'u32[]', space=smem, size = 0x4, offset = 0x4, fixed_abs, tag = 'smem constant byte address 0x4 - core index']
  #allocation1 [shape = 'u32[72,128]{1,0:T(1,128)}', space=vmem, size = 0x9000, scoped, tag = 'internal scratch']
  %s0 = inlined_call_operand.vmem [shape: f32[2,10,10,64], index: 0, kind: input, shape index: {}]
  %s1 = inlined_call_operand.vmem [shape: f32[9,64,64], index: 1, kind: input, shape index: {}]
  %s2 = inlined_call_operand.vmem [shape: f32[1,64], index: 2, kind: input, shape index: {}]
  %s3 = inlined_call_operand.vmem [shape: f32[1,64], index: 3, kind: input, shape index: {}]
  %s4 = inlined_call_operand.vmem [shape: f32[2,64,64], index: 4, kind: output, shape index: {}]
  %s5 = sld [smem:[#allocation0]]
  $region49: #{resnet_encoder_forward.6} parent=0
    _
  %s7 = ssub.s32 1, %s5
  %s8 = scalar_select 0, %s7, %s5
  loop: start=0, step=1, limit=4
  $region2: #{resnet_encoder_forward.6} parent=0 // loop_pre_header
    _
  $region3: #{resnet_encoder_forward.6} parent=0 // loop_header
    %s10 = sphi 0, %s14
    %p11 = scmp.ge.s32.totalorder %s10, 4
    %s20 = sphi 0, %s22
    %s23 = sphi 0, %s20
    %s24 = sphi 0, %s23
    %s40 = sphi 0, %s24
    %s44 = sphi 0, %s44
    %s46 = sphi 0, %s44
    %s47 = sphi 0, %s46
    %s61 = sphi 0, %s47
    %s65 = sphi 0, %s65
    %s67 = sphi 0, %s65
    %s68 = sphi 0, %s67
    %s82 = sphi 0, %s68
    %s86 = sphi 0, %s86
    %s88 = sphi 0, %s86
    %s89 = sphi 0, %s88
    %s103 = sphi 0, %s89
    %s109 = sphi 0, %s111
    %s112 = sphi 0, %s109
    %s113 = sphi 0, %s112
    %s129 = sphi 0, %s113
  $region4: #{resnet_encoder_forward.6} parent=0 // loop_header_branch
    %13 = sbr.rel (%p11) target = $region8
  $region5: #{resnet_encoder_forward.6} parent=0 // loop_body
    %s15 = ssub.s32 %s10, 1
    %s16 = ssub.s32 %s10, 2
    %s17 = sadd.s32 %s10, 1
    %s18 = ssub.s32 %s10, %s17
    %p19 = scmp.eq.s32.totalorder %s18, 0
    %s21 = sadd.s32 %s20, 1
    %s22 = scalar_select %p19, %s20, %s21
    %p25 = pneg %p19
    %p26 = scmp.eq.s32.totalorder %s10, 1
    %p27 = por %p25, %p26
    %p28 = scmp.ne.s32.totalorder %s20, %s23
    %p29 = scmp.eq.s32.totalorder %s10, 0
    %p30 = por %p28, %p29
    %p31 = scmp.ne.s32.totalorder %s20, %s23
    %p32 = scmp.eq.s32.totalorder %s15, 1
    %p33 = por %p31, %p32
    %p34 = scmp.ne.s32.totalorder %s23, %s24
    %p35 = scmp.eq.s32.totalorder %s15, 0
    %p36 = por %p34, %p35
    %p37 = scmp.ne.s32.totalorder %s23, %s24
    %p38 = scmp.eq.s32.totalorder %s16, 1
    %p39 = por %p37, %p38
    %p41 = scmp.ne.s32.totalorder %s24, %s40
    %p42 = scmp.eq.s32.totalorder %s16, 0
    %p43 = por %p41, %p42
    %s45 = sadd.s32 %s44, 1
    %p48 = scmp.eq.s32.totalorder %s10, 1
    %p49 = scmp.ne.s32.totalorder %s44, %s46
    %p50 = scmp.eq.s32.totalorder %s10, 0
    %p51 = por %p49, %p50
    %p52 = scmp.ne.s32.totalorder %s44, %s46
    %p53 = scmp.eq.s32.totalorder %s15, 1
    %p54 = por %p52, %p53
    %p55 = scmp.ne.s32.totalorder %s46, %s47
    %p56 = scmp.eq.s32.totalorder %s15, 0
    %p57 = por %p55, %p56
    %p58 = scmp.ne.s32.totalorder %s46, %s47
    %p59 = scmp.eq.s32.totalorder %s16, 1
    %p60 = por %p58, %p59
    %p62 = scmp.ne.s32.totalorder %s47, %s61
    %p63 = scmp.eq.s32.totalorder %s16, 0
    %p64 = por %p62, %p63
    %s66 = sadd.s32 %s65, 1
    %p69 = scmp.eq.s32.totalorder %s10, 1
    %p70 = scmp.ne.s32.totalorder %s65, %s67
    %p71 = scmp.eq.s32.totalorder %s10, 0
    %p72 = por %p70, %p71
    %p73 = scmp.ne.s32.totalorder %s65, %s67
    %p74 = scmp.eq.s32.totalorder %s15, 1
    %p75 = por %p73, %p74
    %p76 = scmp.ne.s32.totalorder %s67, %s68
    %p77 = scmp.eq.s32.totalorder %s15, 0
    %p78 = por %p76, %p77
    %p79 = scmp.ne.s32.totalorder %s67, %s68
    %p80 = scmp.eq.s32.totalorder %s16, 1
    %p81 = por %p79, %p80
    %p83 = scmp.ne.s32.totalorder %s68, %s82
    %p84 = scmp.eq.s32.totalorder %s16, 0
    %p85 = por %p83, %p84
    %s87 = sadd.s32 %s86, 1
    %p90 = scmp.eq.s32.totalorder %s10, 1
    %p91 = scmp.ne.s32.totalorder %s86, %s88
    %p92 = scmp.eq.s32.totalorder %s10, 0
    %p93 = por %p91, %p92
    %p94 = scmp.ne.s32.totalorder %s86, %s88
    %p95 = scmp.eq.s32.totalorder %s15, 1
    %p96 = por %p94, %p95
    %p97 = scmp.ne.s32.totalorder %s88, %s89
    %p98 = scmp.eq.s32.totalorder %s15, 0
    %p99 = por %p97, %p98
    %p100 = scmp.ne.s32.totalorder %s88, %s89
    %p101 = scmp.eq.s32.totalorder %s16, 1
    %p102 = por %p100, %p101
    %p104 = scmp.ne.s32.totalorder %s89, %s103
    %p105 = scmp.eq.s32.totalorder %s16, 0
    %p106 = por %p104, %p105
    %s107 = ssub.s32 %s10, %s17
    %p108 = scmp.eq.s32.totalorder %s107, 0
    %s110 = sadd.s32 %s109, 1
    %s111 = scalar_select %p108, %s109, %s110
    %p114 = pneg %p108
    %p115 = scmp.eq.s32.totalorder %s10, 1
    %p116 = por %p114, %p115
    %p117 = scmp.ne.s32.totalorder %s109, %s112
    %p118 = scmp.eq.s32.totalorder %s10, 0
    %p119 = por %p117, %p118
    %p120 = scmp.ne.s32.totalorder %s109, %s112
    %p121 = scmp.eq.s32.totalorder %s15, 1
    %p122 = por %p120, %p121
    %p123 = scmp.ne.s32.totalorder %s112, %s113
    %p124 = scmp.eq.s32.totalorder %s15, 0
    %p125 = por %p123, %p124
    %p126 = scmp.ne.s32.totalorder %s112, %s113
    %p127 = scmp.eq.s32.totalorder %s16, 1
    %p128 = por %p126, %p127
    %p130 = scmp.ne.s32.totalorder %s113, %s129
    %p131 = scmp.eq.s32.totalorder %s16, 0
    %p132 = por %p130, %p131
    %p133 = scmp.le.s32.totalorder 1, %s10
    %p134 = scmp.lt.s32.totalorder %s10, 3
    %p135 = pnand %p133, %p134
    %p136 = pneg %p135
    // Predicated region
    $region9: #{resnet_encoder_forward.6} parent=5 // pred_check
      _
    $region10: #{resnet_encoder_forward.6} parent=5 // pred_check_branch
      %138 = sbr.rel (%p135) target = $region12
    $region11: #{resnet_encoder_forward.6} parent=5 // pred_region
      %s139 = ssub.s32 %s10, 1
      // Predicated region
      $region13: #{resnet_encoder_forward.6} parent=11 // pred_check
        %p140 = pneg %p57
      $region14: #{resnet_encoder_forward.6} parent=11 // pred_check_branch
        %142 = sbr.rel (%p140) target = $region16
      $region15: #{resnet_encoder_forward.6} parent=11 // pred_region
        _
      $region16: #{resnet_encoder_forward.6} parent=11 // pred_fallthru
        _
      // Predicated region
      $region17: #{resnet_encoder_forward.6} parent=11 // pred_check
        %p143 = pneg %p78
      $region18: #{resnet_encoder_forward.6} parent=11 // pred_check_branch
        %145 = sbr.rel (%p143) target = $region20
      $region19: #{resnet_encoder_forward.6} parent=11 // pred_region
        _
      $region20: #{resnet_encoder_forward.6} parent=11 // pred_fallthru
        _
      // Predicated region
      $region21: #{resnet_encoder_forward.6} parent=11 // pred_check
        %p146 = pneg %p99
      $region22: #{resnet_encoder_forward.6} parent=11 // pred_check_branch
        %148 = sbr.rel (%p146) target = $region24
      $region23: #{resnet_encoder_forward.6} parent=11 // pred_region
        _
      $region24: #{resnet_encoder_forward.6} parent=11 // pred_fallthru
        _
    $region12: #{resnet_encoder_forward.6} parent=5 // pred_fallthru
      _
    %p149 = scmp.lt.s32.totalorder %s10, 2
    // Predicated region
    $region25: #{resnet_encoder_forward.6} parent=5 // pred_check
      %p150 = pneg %p149
    $region26: #{resnet_encoder_forward.6} parent=5 // pred_check_branch
      %152 = sbr.rel (%p150) target = $region28
    $region27: #{resnet_encoder_forward.6} parent=5 // pred_region
      // Predicated region
      $region29: #{resnet_encoder_forward.6} parent=27 // pred_check
        %p153 = pneg %p30
      $region30: #{resnet_encoder_forward.6} parent=27 // pred_check_branch
        %155 = sbr.rel (%p153) target = $region32
      $region31: #{resnet_encoder_forward.6} parent=27 // pred_region
        %p156 = scmp.lt.s32.totalorder %s10, 1
        %s157 = scalar_select %p156, %s10, 1
        %s158 = smul.addr %s157, 20
        %s159 = smul.addr %s158, 8
        %s160 = scalar_lea.vmem %s0, %s159
      $region32: #{resnet_encoder_forward.6} parent=27 // pred_fallthru
        _
    $region28: #{resnet_encoder_forward.6} parent=5 // pred_fallthru
      _
    %p161 = scmp.le.s32.totalorder 1, %s10
    %p162 = scmp.lt.s32.totalorder %s10, 3
    %p163 = pnand %p161, %p162
    %p164 = pneg %p163
    // Predicated region
    $region33: #{resnet_encoder_forward.6} parent=5 // pred_check
      _
    $region34: #{resnet_encoder_forward.6} parent=5 // pred_check_branch
      %166 = sbr.rel (%p163) target = $region36
    $region35: #{resnet_encoder_forward.6} parent=5 // pred_region
      %s167 = ssub.s32 %s10, 1
      %p168 = scmp.lt.s32.totalorder %s15, 1
      %s169 = scalar_select %p168, %s15, 1
      %s170 = smul.addr %s169, 20
      %s171 = smul.addr %s170, 8
      %s172 = scalar_lea.vmem %s0, %s171
      %p173 = pneg %p36
      %p174 = pneg %p33
      %p175 = pneg %p57
      %p176 = pneg %p54
      %p177 = pneg %p78
      %p178 = pneg %p75
      %p179 = pneg %p99
      %p180 = pneg %p96
      %p181 = pneg %p125
      %p182 = pneg %p122
      %p183 = scmp.lt.s32.totalorder %s15, 1
      %s184 = scalar_select %p183, %s15, 1
      %s185 = smul.addr %s184, 8
      %s186 = smul.addr %s185, 8
      %s187 = scalar_lea.vmem %s4, %s186
      %p188 = scmp.lt.s32.totalorder %s15, 1
      %s189 = scalar_select %p188, %s15, 1
      %s190 = smul.addr %s189, 20
      %s191 = smul.addr %s190, 8
      %s192 = scalar_lea.vmem %s0, %s191
      %p193 = scmp.lt.s32.totalorder %s15, 1
      %s194 = scalar_select %p193, %s15, 1
      %s195 = smul.addr %s194, 8
      %s196 = smul.addr %s195, 8
      %s197 = scalar_lea.vmem %s4, %s196
      %v198 = vld [vmem:[%s192] sm:$0xff]
      %v199 = vld [vmem:[%s192 + $0x10] sm:$0xff]
      %v200 = vld [vmem:[%s192 + $0x20] sm:$0xff]
      %v201 = vld [vmem:[%s192 + $0x30] sm:$0xff]
      %v202 = vld [vmem:[%s192 + $0x40] sm:$0xff]
      %v203 = vld [vmem:[%s192 + $0x50] sm:$0xff]
      %v204 = vld [vmem:[%s192 + $0x60] sm:$0xff]
      %v205 = vld [vmem:[%s192 + $0x70] sm:$0xff]
      %v206 = vld [vmem:[%s1] sm:$0xff]
      %v207 = vld [vmem:[%s1 + $0x8] sm:$0xff]
      %v208 = vld [vmem:[%s1 + $0x10] sm:$0xff]
      %v209 = vld [vmem:[%s1 + $0x18] sm:$0xff]
      %v210 = vld [vmem:[%s1 + $0x20] sm:$0xff]
      %v211 = vld [vmem:[%s1 + $0x28] sm:$0xff]
      %v212 = vld [vmem:[%s1 + $0x30] sm:$0xff]
      %v213 = vld [vmem:[%s1 + $0x38] sm:$0xff]
      %v214 = vld [vmem:[%s192 + $0x1] sm:$0xff]
      %v215 = vld [vmem:[%s192 + $0x11] sm:$0xff]
      %v216 = vld [vmem:[%s192 + $0x21] sm:$0xff]
      %v217 = vld [vmem:[%s192 + $0x31] sm:$0xff]
      %v218 = vld [vmem:[%s192 + $0x41] sm:$0xff]
      %v219 = vld [vmem:[%s192 + $0x51] sm:$0xff]
      %v220 = vld [vmem:[%s192 + $0x61] sm:$0xff]
      %v221 = vld [vmem:[%s192 + $0x71] sm:$0xff]
      %s222 = scalar_lea.vmem %s1, 64
      %v223 = vld [vmem:[%s222] sm:$0xff]
      %v224 = vld [vmem:[%s222 + $0x8] sm:$0xff]
      %v225 = vld [vmem:[%s222 + $0x10] sm:$0xff]
      %v226 = vld [vmem:[%s222 + $0x18] sm:$0xff]
      %v227 = vld [vmem:[%s222 + $0x20] sm:$0xff]
      %v228 = vld [vmem:[%s222 + $0x28] sm:$0xff]
      %v229 = vld [vmem:[%s222 + $0x30] sm:$0xff]
      %v230 = vld [vmem:[%s222 + $0x38] sm:$0xff]
      %vm231 = vcmask 523264
      %v233 = vsel %vm231, %v214, 0
      %v236 = vsel %vm231, %v215, 0
      %v239 = vsel %vm231, %v216, 0
      %v242 = vsel %vm231, %v217, 0
      %v245 = vsel %vm231, %v218, 0
      %v248 = vsel %vm231, %v219, 0
      %v251 = vsel %vm231, %v220, 0
      %v254 = vsel %vm231, %v221, 0
      %256 = vmatpush.msra.mxu0 0.0
      %257 = vmatpush.msra.mxu0 0.0
      %258 = vmatpush.msra.mxu0 0.0
      %259 = vmatpush.msra.mxu0 0.0
      %260 = vmatpush.msra.mxu0 0.0
      %261 = vmatpush.msra.mxu0 0.0
      %262 = vmatpush.msra.mxu0 0.0
      %263 = vmatpush.msra.mxu0 0.0
      %264 = vmatpush.msra.mxu0 %v230
      %265 = vmatpush.msra.mxu0 %v229
      %266 = vmatpush.msra.mxu0 %v228
      %267 = vmatpush.msra.mxu0 %v227
      %268 = vmatpush.msra.mxu0 %v226
      %269 = vmatpush.msra.mxu0 %v225
      %270 = vmatpush.msra.mxu0 %v224
      %271 = vmatpush.msra.mxu0 %v223
      %272 = vmatmul.f32.gmra.mxu0 %v233
      %v273 = vpop.f32.mrf.mxu0
      %v274 = vadd.f32 0.0, %v273
      %275 = vmatmul.f32.gmra.mxu0 %v236
      %v276 = vpop.f32.mrf.mxu0
      %v277 = vadd.f32 0.0, %v276
      %278 = vmatmul.f32.gmra.mxu0 %v239
      %v279 = vpop.f32.mrf.mxu0
      %v280 = vadd.f32 0.0, %v279
      %281 = vmatmul.f32.gmra.mxu0 %v242
      %v282 = vpop.f32.mrf.mxu0
      %v283 = vadd.f32 0.0, %v282
      %284 = vmatmul.f32.gmra.mxu0 %v245
      %v285 = vpop.f32.mrf.mxu0
      %v286 = vadd.f32 0.0, %v285
      %287 = vmatmul.f32.gmra.mxu0 %v248
      %v288 = vpop.f32.mrf.mxu0
      %v289 = vadd.f32 0.0, %v288
      %290 = vmatmul.f32.gmra.mxu0 %v251
      %v291 = vpop.f32.mrf.mxu0
      %v292 = vadd.f32 0.0, %v291
      %293 = vmatmul.f32.gmra.mxu0 %v254
      %v294 = vpop.f32.mrf.mxu0
      %v295 = vadd.f32 0.0, %v294
      %296 = vdwg.mxu0
      %v298 = vsel %vm231, %v198, 0
      %v301 = vsel %vm231, %v199, 0
      %v304 = vsel %vm231, %v200, 0
      %v307 = vsel %vm231, %v201, 0
      %v310 = vsel %vm231, %v202, 0
      %v313 = vsel %vm231, %v203, 0
      %v316 = vsel %vm231, %v204, 0
      %v319 = vsel %vm231, %v205, 0
      %321 = vmatpush.msra.mxu0 0.0
      %322 = vmatpush.msra.mxu0 0.0
      %323 = vmatpush.msra.mxu0 0.0
      %324 = vmatpush.msra.mxu0 0.0
      %325 = vmatpush.msra.mxu0 0.0
      %326 = vmatpush.msra.mxu0 0.0
      %327 = vmatpush.msra.mxu0 0.0
      %328 = vmatpush.msra.mxu0 0.0
      %329 = vmatpush.msra.mxu0 %v213
      %330 = vmatpush.msra.mxu0 %v212
      %331 = vmatpush.msra.mxu0 %v211
      %332 = vmatpush.msra.mxu0 %v210
      %333 = vmatpush.msra.mxu0 %v209
      %334 = vmatpush.msra.mxu0 %v208
      %335 = vmatpush.msra.mxu0 %v207
      %336 = vmatpush.msra.mxu0 %v206
      %337 = vmatmul.f32.gmra.mxu0 %v298
      %v338 = vpop.f32.mrf.mxu0
      %v339 = vadd.f32 %v274, %v338
      %340 = vmatmul.f32.gmra.mxu0 %v301
      %v341 = vpop.f32.mrf.mxu0
      %v342 = vadd.f32 %v277, %v341
      %343 = vmatmul.f32.gmra.mxu0 %v304
      %v344 = vpop.f32.mrf.mxu0
      %v345 = vadd.f32 %v280, %v344
      %346 = vmatmul.f32.gmra.mxu0 %v307
      %v347 = vpop.f32.mrf.mxu0
      %v348 = vadd.f32 %v283, %v347
      %349 = vmatmul.f32.gmra.mxu0 %v310
      %v350 = vpop.f32.mrf.mxu0
      %v351 = vadd.f32 %v286, %v350
      %352 = vmatmul.f32.gmra.mxu0 %v313
      %v353 = vpop.f32.mrf.mxu0
      %v354 = vadd.f32 %v289, %v353
      %355 = vmatmul.f32.gmra.mxu0 %v316
      %v356 = vpop.f32.mrf.mxu0
      %v357 = vadd.f32 %v292, %v356
      %358 = vmatmul.f32.gmra.mxu0 %v319
      %v359 = vpop.f32.mrf.mxu0
      %v360 = vadd.f32 %v295, %v359
      %361 = vdwg.mxu0
      %v362 = vld [vmem:[%s192 + $0x2] sm:$0xff]
      %v363 = vld [vmem:[%s192 + $0x12] sm:$0xff]
      %v364 = vld [vmem:[%s192 + $0x22] sm:$0xff]
      %v365 = vld [vmem:[%s192 + $0x32] sm:$0xff]
      %v366 = vld [vmem:[%s192 + $0x42] sm:$0xff]
      %v367 = vld [vmem:[%s192 + $0x52] sm:$0xff]
      %v368 = vld [vmem:[%s192 + $0x62] sm:$0xff]
      %v369 = vld [vmem:[%s192 + $0x72] sm:$0xff]
      %s370 = scalar_lea.vmem %s1, 128
      %v371 = vld [vmem:[%s370] sm:$0xff]
      %v372 = vld [vmem:[%s370 + $0x8] sm:$0xff]
      %v373 = vld [vmem:[%s370 + $0x10] sm:$0xff]
      %v374 = vld [vmem:[%s370 + $0x18] sm:$0xff]
      %v375 = vld [vmem:[%s370 + $0x20] sm:$0xff]
      %v376 = vld [vmem:[%s370 + $0x28] sm:$0xff]
      %v377 = vld [vmem:[%s370 + $0x30] sm:$0xff]
      %v378 = vld [vmem:[%s370 + $0x38] sm:$0xff]
      %v380 = vsel %vm231, %v362, 0
      %v383 = vsel %vm231, %v363, 0
      %v386 = vsel %vm231, %v364, 0
      %v389 = vsel %vm231, %v365, 0
      %v392 = vsel %vm231, %v366, 0
      %v395 = vsel %vm231, %v367, 0
      %v398 = vsel %vm231, %v368, 0
      %v401 = vsel %vm231, %v369, 0
      %403 = vmatpush.msra.mxu0 0.0
      %404 = vmatpush.msra.mxu0 0.0
      %405 = vmatpush.msra.mxu0 0.0
      %406 = vmatpush.msra.mxu0 0.0
      %407 = vmatpush.msra.mxu0 0.0
      %408 = vmatpush.msra.mxu0 0.0
      %409 = vmatpush.msra.mxu0 0.0
      %410 = vmatpush.msra.mxu0 0.0
      %411 = vmatpush.msra.mxu0 %v378
      %412 = vmatpush.msra.mxu0 %v377
      %413 = vmatpush.msra.mxu0 %v376
      %414 = vmatpush.msra.mxu0 %v375
      %415 = vmatpush.msra.mxu0 %v374
      %416 = vmatpush.msra.mxu0 %v373
      %417 = vmatpush.msra.mxu0 %v372
      %418 = vmatpush.msra.mxu0 %v371
      %419 = vmatmul.f32.gmra.mxu0 %v380
      %v420 = vpop.f32.mrf.mxu0
      %v421 = vadd.f32 0.0, %v420
      %422 = vmatmul.f32.gmra.mxu0 %v383
      %v423 = vpop.f32.mrf.mxu0
      %v424 = vadd.f32 0.0, %v423
      %425 = vmatmul.f32.gmra.mxu0 %v386
      %v426 = vpop.f32.mrf.mxu0
      %v427 = vadd.f32 0.0, %v426
      %428 = vmatmul.f32.gmra.mxu0 %v389
      %v429 = vpop.f32.mrf.mxu0
      %v430 = vadd.f32 0.0, %v429
      %431 = vmatmul.f32.gmra.mxu0 %v392
      %v432 = vpop.f32.mrf.mxu0
      %v433 = vadd.f32 0.0, %v432
      %434 = vmatmul.f32.gmra.mxu0 %v395
      %v435 = vpop.f32.mrf.mxu0
      %v436 = vadd.f32 0.0, %v435
      %437 = vmatmul.f32.gmra.mxu0 %v398
      %v438 = vpop.f32.mrf.mxu0
      %v439 = vadd.f32 0.0, %v438
      %440 = vmatmul.f32.gmra.mxu0 %v401
      %v441 = vpop.f32.mrf.mxu0
      %v442 = vadd.f32 0.0, %v441
      %443 = vdwg.mxu0
      %v444 = vadd.f32 %v339, %v421
      %v445 = vadd.f32 %v342, %v424
      %v446 = vadd.f32 %v345, %v427
      %v447 = vadd.f32 %v348, %v430
      %v448 = vadd.f32 %v351, %v433
      %v449 = vadd.f32 %v354, %v436
      %v450 = vadd.f32 %v357, %v439
      %v451 = vadd.f32 %v360, %v442
      %s452 = scalar_lea.vmem %s192, 16
      %v453 = vld [vmem:[%s452] sm:$0xff]
      %v454 = vld [vmem:[%s452 + $0x10] sm:$0xff]
      %v455 = vld [vmem:[%s452 + $0x20] sm:$0xff]
      %v456 = vld [vmem:[%s452 + $0x30] sm:$0xff]
      %v457 = vld [vmem:[%s452 + $0x40] sm:$0xff]
      %v458 = vld [vmem:[%s452 + $0x50] sm:$0xff]
      %v459 = vld [vmem:[%s452 + $0x60] sm:$0xff]
      %v460 = vld [vmem:[%s452 + $0x70] sm:$0xff]
      %s461 = scalar_lea.vmem %s1, 192
      %v462 = vld [vmem:[%s461] sm:$0xff]
      %v463 = vld [vmem:[%s461 + $0x8] sm:$0xff]
      %v464 = vld [vmem:[%s461 + $0x10] sm:$0xff]
      %v465 = vld [vmem:[%s461 + $0x18] sm:$0xff]
      %v466 = vld [vmem:[%s461 + $0x20] sm:$0xff]
      %v467 = vld [vmem:[%s461 + $0x28] sm:$0xff]
      %v468 = vld [vmem:[%s461 + $0x30] sm:$0xff]
      %v469 = vld [vmem:[%s461 + $0x38] sm:$0xff]
      %v471 = vsel %vm231, %v453, 0
      %v474 = vsel %vm231, %v454, 0
      %v477 = vsel %vm231, %v455, 0
      %v480 = vsel %vm231, %v456, 0
      %v483 = vsel %vm231, %v457, 0
      %v486 = vsel %vm231, %v458, 0
      %v489 = vsel %vm231, %v459, 0
      %v492 = vsel %vm231, %v460, 0
      %494 = vmatpush.msra.mxu0 0.0
      %495 = vmatpush.msra.mxu0 0.0
      %496 = vmatpush.msra.mxu0 0.0
      %497 = vmatpush.msra.mxu0 0.0
      %498 = vmatpush.msra.mxu0 0.0
      %499 = vmatpush.msra.mxu0 0.0
      %500 = vmatpush.msra.mxu0 0.0
      %501 = vmatpush.msra.mxu0 0.0
      %502 = vmatpush.msra.mxu0 %v469
      %503 = vmatpush.msra.mxu0 %v468
      %504 = vmatpush.msra.mxu0 %v467
      %505 = vmatpush.msra.mxu0 %v466
      %506 = vmatpush.msra.mxu0 %v465
      %507 = vmatpush.msra.mxu0 %v464
      %508 = vmatpush.msra.mxu0 %v463
      %509 = vmatpush.msra.mxu0 %v462
      %510 = vmatmul.f32.gmra.mxu0 %v471
      %v511 = vpop.f32.mrf.mxu0
      %v512 = vadd.f32 0.0, %v511
      %513 = vmatmul.f32.gmra.mxu0 %v474
      %v514 = vpop.f32.mrf.mxu0
      %v515 = vadd.f32 0.0, %v514
      %516 = vmatmul.f32.gmra.mxu0 %v477
      %v517 = vpop.f32.mrf.mxu0
      %v518 = vadd.f32 0.0, %v517
      %519 = vmatmul.f32.gmra.mxu0 %v480
      %v520 = vpop.f32.mrf.mxu0
      %v521 = vadd.f32 0.0, %v520
      %522 = vmatmul.f32.gmra.mxu0 %v483
      %v523 = vpop.f32.mrf.mxu0
      %v524 = vadd.f32 0.0, %v523
      %525 = vmatmul.f32.gmra.mxu0 %v486
      %v526 = vpop.f32.mrf.mxu0
      %v527 = vadd.f32 0.0, %v526
      %528 = vmatmul.f32.gmra.mxu0 %v489
      %v529 = vpop.f32.mrf.mxu0
      %v530 = vadd.f32 0.0, %v529
      %531 = vmatmul.f32.gmra.mxu0 %v492
      %v532 = vpop.f32.mrf.mxu0
      %v533 = vadd.f32 0.0, %v532
      %534 = vdwg.mxu0
      %v535 = vadd.f32 %v444, %v512
      %v536 = vadd.f32 %v445, %v515
      %v537 = vadd.f32 %v446, %v518
      %v538 = vadd.f32 %v447, %v521
      %v539 = vadd.f32 %v448, %v524
      %v540 = vadd.f32 %v449, %v527
      %v541 = vadd.f32 %v450, %v530
      %v542 = vadd.f32 %v451, %v533
      %v543 = vld [vmem:[%s452 + $0x1] sm:$0xff]
      %v544 = vld [vmem:[%s452 + $0x11] sm:$0xff]
      %v545 = vld [vmem:[%s452 + $0x21] sm:$0xff]
      %v546 = vld [vmem:[%s452 + $0x31] sm:$0xff]
      %v547 = vld [vmem:[%s452 + $0x41] sm:$0xff]
      %v548 = vld [vmem:[%s452 + $0x51] sm:$0xff]
      %v549 = vld [vmem:[%s452 + $0x61] sm:$0xff]
      %v550 = vld [vmem:[%s452 + $0x71] sm:$0xff]
      %s551 = scalar_lea.vmem %s1, 256
      %v552 = vld [vmem:[%s551] sm:$0xff]
      %v553 = vld [vmem:[%s551 + $0x8] sm:$0xff]
      %v554 = vld [vmem:[%s551 + $0x10] sm:$0xff]
      %v555 = vld [vmem:[%s551 + $0x18] sm:$0xff]
      %v556 = vld [vmem:[%s551 + $0x20] sm:$0xff]
      %v557 = vld [vmem:[%s551 + $0x28] sm:$0xff]
      %v558 = vld [vmem:[%s551 + $0x30] sm:$0xff]
      %v559 = vld [vmem:[%s551 + $0x38] sm:$0xff]
      %v561 = vsel %vm231, %v543, 0
      %v564 = vsel %vm231, %v544, 0
      %v567 = vsel %vm231, %v545, 0
      %v570 = vsel %vm231, %v546, 0
      %v573 = vsel %vm231, %v547, 0
      %v576 = vsel %vm231, %v548, 0
      %v579 = vsel %vm231, %v549, 0
      %v582 = vsel %vm231, %v550, 0
      %584 = vmatpush.msra.mxu0 0.0
      %585 = vmatpush.msra.mxu0 0.0
      %586 = vmatpush.msra.mxu0 0.0
      %587 = vmatpush.msra.mxu0 0.0
      %588 = vmatpush.msra.mxu0 0.0
      %589 = vmatpush.msra.mxu0 0.0
      %590 = vmatpush.msra.mxu0 0.0
      %591 = vmatpush.msra.mxu0 0.0
      %592 = vmatpush.msra.mxu0 %v559
      %593 = vmatpush.msra.mxu0 %v558
      %594 = vmatpush.msra.mxu0 %v557
      %595 = vmatpush.msra.mxu0 %v556
      %596 = vmatpush.msra.mxu0 %v555
      %597 = vmatpush.msra.mxu0 %v554
      %598 = vmatpush.msra.mxu0 %v553
      %599 = vmatpush.msra.mxu0 %v552
      %600 = vmatmul.f32.gmra.mxu0 %v561
      %v601 = vpop.f32.mrf.mxu0
      %v602 = vadd.f32 0.0, %v601
      %603 = vmatmul.f32.gmra.mxu0 %v564
      %v604 = vpop.f32.mrf.mxu0
      %v605 = vadd.f32 0.0, %v604
      %606 = vmatmul.f32.gmra.mxu0 %v567
      %v607 = vpop.f32.mrf.mxu0
      %v608 = vadd.f32 0.0, %v607
      %609 = vmatmul.f32.gmra.mxu0 %v570
      %v610 = vpop.f32.mrf.mxu0
      %v611 = vadd.f32 0.0, %v610
      %612 = vmatmul.f32.gmra.mxu0 %v573
      %v613 = vpop.f32.mrf.mxu0
      %v614 = vadd.f32 0.0, %v613
      %615 = vmatmul.f32.gmra.mxu0 %v576
      %v616 = vpop.f32.mrf.mxu0
      %v617 = vadd.f32 0.0, %v616
      %618 = vmatmul.f32.gmra.mxu0 %v579
      %v619 = vpop.f32.mrf.mxu0
      %v620 = vadd.f32 0.0, %v619
      %621 = vmatmul.f32.gmra.mxu0 %v582
      %v622 = vpop.f32.mrf.mxu0
      %v623 = vadd.f32 0.0, %v622
      %624 = vdwg.mxu0
      %v625 = vadd.f32 %v535, %v602
      %v626 = vadd.f32 %v536, %v605
      %v627 = vadd.f32 %v537, %v608
      %v628 = vadd.f32 %v538, %v611
      %v629 = vadd.f32 %v539, %v614
      %v630 = vadd.f32 %v540, %v617
      %v631 = vadd.f32 %v541, %v620
      %v632 = vadd.f32 %v542, %v623
      %v633 = vld [vmem:[%s452 + $0x2] sm:$0xff]
      %v634 = vld [vmem:[%s452 + $0x12] sm:$0xff]
      %v635 = vld [vmem:[%s452 + $0x22] sm:$0xff]
      %v636 = vld [vmem:[%s452 + $0x32] sm:$0xff]
      %v637 = vld [vmem:[%s452 + $0x42] sm:$0xff]
      %v638 = vld [vmem:[%s452 + $0x52] sm:$0xff]
      %v639 = vld [vmem:[%s452 + $0x62] sm:$0xff]
      %v640 = vld [vmem:[%s452 + $0x72] sm:$0xff]
      %s641 = scalar_lea.vmem %s1, 320
      %v642 = vld [vmem:[%s641] sm:$0xff]
      %v643 = vld [vmem:[%s641 + $0x8] sm:$0xff]
      %v644 = vld [vmem:[%s641 + $0x10] sm:$0xff]
      %v645 = vld [vmem:[%s641 + $0x18] sm:$0xff]
      %v646 = vld [vmem:[%s641 + $0x20] sm:$0xff]
      %v647 = vld [vmem:[%s641 + $0x28] sm:$0xff]
      %v648 = vld [vmem:[%s641 + $0x30] sm:$0xff]
      %v649 = vld [vmem:[%s641 + $0x38] sm:$0xff]
      %v651 = vsel %vm231, %v633, 0
      %v654 = vsel %vm231, %v634, 0
      %v657 = vsel %vm231, %v635, 0
      %v660 = vsel %vm231, %v636, 0
      %v663 = vsel %vm231, %v637, 0
      %v666 = vsel %vm231, %v638, 0
      %v669 = vsel %vm231, %v639, 0
      %v672 = vsel %vm231, %v640, 0
      %674 = vmatpush.msra.mxu0 0.0
      %675 = vmatpush.msra.mxu0 0.0
      %676 = vmatpush.msra.mxu0 0.0
      %677 = vmatpush.msra.mxu0 0.0
      %678 = vmatpush.msra.mxu0 0.0
      %679 = vmatpush.msra.mxu0 0.0
      %680 = vmatpush.msra.mxu0 0.0
      %681 = vmatpush.msra.mxu0 0.0
      %682 = vmatpush.msra.mxu0 %v649
      %683 = vmatpush.msra.mxu0 %v648
      %684 = vmatpush.msra.mxu0 %v647
      %685 = vmatpush.msra.mxu0 %v646
      %686 = vmatpush.msra.mxu0 %v645
      %687 = vmatpush.msra.mxu0 %v644
      %688 = vmatpush.msra.mxu0 %v643
      %689 = vmatpush.msra.mxu0 %v642
      %690 = vmatmul.f32.gmra.mxu0 %v651
      %v691 = vpop.f32.mrf.mxu0
      %v692 = vadd.f32 0.0, %v691
      %693 = vmatmul.f32.gmra.mxu0 %v654
      %v694 = vpop.f32.mrf.mxu0
      %v695 = vadd.f32 0.0, %v694
      %696 = vmatmul.f32.gmra.mxu0 %v657
      %v697 = vpop.f32.mrf.mxu0
      %v698 = vadd.f32 0.0, %v697
      %699 = vmatmul.f32.gmra.mxu0 %v660
      %v700 = vpop.f32.mrf.mxu0
      %v701 = vadd.f32 0.0, %v700
      %702 = vmatmul.f32.gmra.mxu0 %v663
      %v703 = vpop.f32.mrf.mxu0
      %v704 = vadd.f32 0.0, %v703
      %705 = vmatmul.f32.gmra.mxu0 %v666
      %v706 = vpop.f32.mrf.mxu0
      %v707 = vadd.f32 0.0, %v706
      %708 = vmatmul.f32.gmra.mxu0 %v669
      %v709 = vpop.f32.mrf.mxu0
      %v710 = vadd.f32 0.0, %v709
      %711 = vmatmul.f32.gmra.mxu0 %v672
      %v712 = vpop.f32.mrf.mxu0
      %v713 = vadd.f32 0.0, %v712
      %714 = vdwg.mxu0
      %v715 = vadd.f32 %v625, %v692
      %v716 = vadd.f32 %v626, %v695
      %v717 = vadd.f32 %v627, %v698
      %v718 = vadd.f32 %v628, %v701
      %v719 = vadd.f32 %v629, %v704
      %v720 = vadd.f32 %v630, %v707
      %v721 = vadd.f32 %v631, %v710
      %v722 = vadd.f32 %v632, %v713
      %s723 = scalar_lea.vmem %s192, 32
      %v724 = vld [vmem:[%s723] sm:$0xff]
      %v725 = vld [vmem:[%s723 + $0x10] sm:$0xff]
      %v726 = vld [vmem:[%s723 + $0x20] sm:$0xff]
      %v727 = vld [vmem:[%s723 + $0x30] sm:$0xff]
      %v728 = vld [vmem:[%s723 + $0x40] sm:$0xff]
      %v729 = vld [vmem:[%s723 + $0x50] sm:$0xff]
      %v730 = vld [vmem:[%s723 + $0x60] sm:$0xff]
      %v731 = vld [vmem:[%s723 + $0x70] sm:$0xff]
      %s732 = scalar_lea.vmem %s1, 384
      %v733 = vld [vmem:[%s732] sm:$0xff]
      %v734 = vld [vmem:[%s732 + $0x8] sm:$0xff]
      %v735 = vld [vmem:[%s732 + $0x10] sm:$0xff]
      %v736 = vld [vmem:[%s732 + $0x18] sm:$0xff]
      %v737 = vld [vmem:[%s732 + $0x20] sm:$0xff]
      %v738 = vld [vmem:[%s732 + $0x28] sm:$0xff]
      %v739 = vld [vmem:[%s732 + $0x30] sm:$0xff]
      %v740 = vld [vmem:[%s732 + $0x38] sm:$0xff]
      %v742 = vsel %vm231, %v724, 0
      %v745 = vsel %vm231, %v725, 0
      %v748 = vsel %vm231, %v726, 0
      %v751 = vsel %vm231, %v727, 0
      %v754 = vsel %vm231, %v728, 0
      %v757 = vsel %vm231, %v729, 0
      %v760 = vsel %vm231, %v730, 0
      %v763 = vsel %vm231, %v731, 0
      %765 = vmatpush.msra.mxu0 0.0
      %766 = vmatpush.msra.mxu0 0.0
      %767 = vmatpush.msra.mxu0 0.0
      %768 = vmatpush.msra.mxu0 0.0
      %769 = vmatpush.msra.mxu0 0.0
      %770 = vmatpush.msra.mxu0 0.0
      %771 = vmatpush.msra.mxu0 0.0
      %772 = vmatpush.msra.mxu0 0.0
      %773 = vmatpush.msra.mxu0 %v740
      %774 = vmatpush.msra.mxu0 %v739
      %775 = vmatpush.msra.mxu0 %v738
      %776 = vmatpush.msra.mxu0 %v737
      %777 = vmatpush.msra.mxu0 %v736
      %778 = vmatpush.msra.mxu0 %v735
      %779 = vmatpush.msra.mxu0 %v734
      %780 = vmatpush.msra.mxu0 %v733
      %781 = vmatmul.f32.gmra.mxu0 %v742
      %v782 = vpop.f32.mrf.mxu0
      %v783 = vadd.f32 0.0, %v782
      %784 = vmatmul.f32.gmra.mxu0 %v745
      %v785 = vpop.f32.mrf.mxu0
      %v786 = vadd.f32 0.0, %v785
      %787 = vmatmul.f32.gmra.mxu0 %v748
      %v788 = vpop.f32.mrf.mxu0
      %v789 = vadd.f32 0.0, %v788
      %790 = vmatmul.f32.gmra.mxu0 %v751
      %v791 = vpop.f32.mrf.mxu0
      %v792 = vadd.f32 0.0, %v791
      %793 = vmatmul.f32.gmra.mxu0 %v754
      %v794 = vpop.f32.mrf.mxu0
      %v795 = vadd.f32 0.0, %v794
      %796 = vmatmul.f32.gmra.mxu0 %v757
      %v797 = vpop.f32.mrf.mxu0
      %v798 = vadd.f32 0.0, %v797
      %799 = vmatmul.f32.gmra.mxu0 %v760
      %v800 = vpop.f32.mrf.mxu0
      %v801 = vadd.f32 0.0, %v800
      %802 = vmatmul.f32.gmra.mxu0 %v763
      %v803 = vpop.f32.mrf.mxu0
      %v804 = vadd.f32 0.0, %v803
      %805 = vdwg.mxu0
      %v806 = vadd.f32 %v715, %v783
      %v807 = vadd.f32 %v716, %v786
      %v808 = vadd.f32 %v717, %v789
      %v809 = vadd.f32 %v718, %v792
      %v810 = vadd.f32 %v719, %v795
      %v811 = vadd.f32 %v720, %v798
      %v812 = vadd.f32 %v721, %v801
      %v813 = vadd.f32 %v722, %v804
      %v814 = vld [vmem:[%s723 + $0x1] sm:$0xff]
      %v815 = vld [vmem:[%s723 + $0x11] sm:$0xff]
      %v816 = vld [vmem:[%s723 + $0x21] sm:$0xff]
      %v817 = vld [vmem:[%s723 + $0x31] sm:$0xff]
      %v818 = vld [vmem:[%s723 + $0x41] sm:$0xff]
      %v819 = vld [vmem:[%s723 + $0x51] sm:$0xff]
      %v820 = vld [vmem:[%s723 + $0x61] sm:$0xff]
      %v821 = vld [vmem:[%s723 + $0x71] sm:$0xff]
      %s822 = scalar_lea.vmem %s1, 448
      %v823 = vld [vmem:[%s822] sm:$0xff]
      %v824 = vld [vmem:[%s822 + $0x8] sm:$0xff]
      %v825 = vld [vmem:[%s822 + $0x10] sm:$0xff]
      %v826 = vld [vmem:[%s822 + $0x18] sm:$0xff]
      %v827 = vld [vmem:[%s822 + $0x20] sm:$0xff]
      %v828 = vld [vmem:[%s822 + $0x28] sm:$0xff]
      %v829 = vld [vmem:[%s822 + $0x30] sm:$0xff]
      %v830 = vld [vmem:[%s822 + $0x38] sm:$0xff]
      %v832 = vsel %vm231, %v814, 0
      %v835 = vsel %vm231, %v815, 0
      %v838 = vsel %vm231, %v816, 0
      %v841 = vsel %vm231, %v817, 0
      %v844 = vsel %vm231, %v818, 0
      %v847 = vsel %vm231, %v819, 0
      %v850 = vsel %vm231, %v820, 0
      %v853 = vsel %vm231, %v821, 0
      %855 = vmatpush.msra.mxu0 0.0
      %856 = vmatpush.msra.mxu0 0.0
      %857 = vmatpush.msra.mxu0 0.0
      %858 = vmatpush.msra.mxu0 0.0
      %859 = vmatpush.msra.mxu0 0.0
      %860 = vmatpush.msra.mxu0 0.0
      %861 = vmatpush.msra.mxu0 0.0
      %862 = vmatpush.msra.mxu0 0.0
      %863 = vmatpush.msra.mxu0 %v830
      %864 = vmatpush.msra.mxu0 %v829
      %865 = vmatpush.msra.mxu0 %v828
      %866 = vmatpush.msra.mxu0 %v827
      %867 = vmatpush.msra.mxu0 %v826
      %868 = vmatpush.msra.mxu0 %v825
      %869 = vmatpush.msra.mxu0 %v824
      %870 = vmatpush.msra.mxu0 %v823
      %871 = vmatmul.f32.gmra.mxu0 %v832
      %v872 = vpop.f32.mrf.mxu0
      %v873 = vadd.f32 0.0, %v872
      %874 = vmatmul.f32.gmra.mxu0 %v835
      %v875 = vpop.f32.mrf.mxu0
      %v876 = vadd.f32 0.0, %v875
      %877 = vmatmul.f32.gmra.mxu0 %v838
      %v878 = vpop.f32.mrf.mxu0
      %v879 = vadd.f32 0.0, %v878
      %880 = vmatmul.f32.gmra.mxu0 %v841
      %v881 = vpop.f32.mrf.mxu0
      %v882 = vadd.f32 0.0, %v881
      %883 = vmatmul.f32.gmra.mxu0 %v844
      %v884 = vpop.f32.mrf.mxu0
      %v885 = vadd.f32 0.0, %v884
      %886 = vmatmul.f32.gmra.mxu0 %v847
      %v887 = vpop.f32.mrf.mxu0
      %v888 = vadd.f32 0.0, %v887
      %889 = vmatmul.f32.gmra.mxu0 %v850
      %v890 = vpop.f32.mrf.mxu0
      %v891 = vadd.f32 0.0, %v890
      %892 = vmatmul.f32.gmra.mxu0 %v853
      %v893 = vpop.f32.mrf.mxu0
      %v894 = vadd.f32 0.0, %v893
      %895 = vdwg.mxu0
      %v896 = vadd.f32 %v806, %v873
      %v897 = vadd.f32 %v807, %v876
      %v898 = vadd.f32 %v808, %v879
      %v899 = vadd.f32 %v809, %v882
      %v900 = vadd.f32 %v810, %v885
      %v901 = vadd.f32 %v811, %v888
      %v902 = vadd.f32 %v812, %v891
      %v903 = vadd.f32 %v813, %v894
      %v904 = vld [vmem:[%s723 + $0x2] sm:$0xff]
      %v905 = vld [vmem:[%s723 + $0x12] sm:$0xff]
      %v906 = vld [vmem:[%s723 + $0x22] sm:$0xff]
      %v907 = vld [vmem:[%s723 + $0x32] sm:$0xff]
      %v908 = vld [vmem:[%s723 + $0x42] sm:$0xff]
      %v909 = vld [vmem:[%s723 + $0x52] sm:$0xff]
      %v910 = vld [vmem:[%s723 + $0x62] sm:$0xff]
      %v911 = vld [vmem:[%s723 + $0x72] sm:$0xff]
      %s912 = scalar_lea.vmem %s1, 512
      %v913 = vld [vmem:[%s912] sm:$0xff]
      %v914 = vld [vmem:[%s912 + $0x8] sm:$0xff]
      %v915 = vld [vmem:[%s912 + $0x10] sm:$0xff]
      %v916 = vld [vmem:[%s912 + $0x18] sm:$0xff]
      %v917 = vld [vmem:[%s912 + $0x20] sm:$0xff]
      %v918 = vld [vmem:[%s912 + $0x28] sm:$0xff]
      %v919 = vld [vmem:[%s912 + $0x30] sm:$0xff]
      %v920 = vld [vmem:[%s912 + $0x38] sm:$0xff]
      %v922 = vsel %vm231, %v904, 0
      %v925 = vsel %vm231, %v905, 0
      %v928 = vsel %vm231, %v906, 0
      %v931 = vsel %vm231, %v907, 0
      %v934 = vsel %vm231, %v908, 0
      %v937 = vsel %vm231, %v909, 0
      %v940 = vsel %vm231, %v910, 0
      %v943 = vsel %vm231, %v911, 0
      %945 = vmatpush.msra.mxu0 0.0
      %946 = vmatpush.msra.mxu0 0.0
      %947 = vmatpush.msra.mxu0 0.0
      %948 = vmatpush.msra.mxu0 0.0
      %949 = vmatpush.msra.mxu0 0.0
      %950 = vmatpush.msra.mxu0 0.0
      %951 = vmatpush.msra.mxu0 0.0
      %952 = vmatpush.msra.mxu0 0.0
      %953 = vmatpush.msra.mxu0 %v920
      %954 = vmatpush.msra.mxu0 %v919
      %955 = vmatpush.msra.mxu0 %v918
      %956 = vmatpush.msra.mxu0 %v917
      %957 = vmatpush.msra.mxu0 %v916
      %958 = vmatpush.msra.mxu0 %v915
      %959 = vmatpush.msra.mxu0 %v914
      %960 = vmatpush.msra.mxu0 %v913
      %961 = vmatmul.f32.gmra.mxu0 %v922
      %v962 = vpop.f32.mrf.mxu0
      %v963 = vadd.f32 0.0, %v962
      %964 = vmatmul.f32.gmra.mxu0 %v925
      %v965 = vpop.f32.mrf.mxu0
      %v966 = vadd.f32 0.0, %v965
      %967 = vmatmul.f32.gmra.mxu0 %v928
      %v968 = vpop.f32.mrf.mxu0
      %v969 = vadd.f32 0.0, %v968
      %970 = vmatmul.f32.gmra.mxu0 %v931
      %v971 = vpop.f32.mrf.mxu0
      %v972 = vadd.f32 0.0, %v971
      %973 = vmatmul.f32.gmra.mxu0 %v934
      %v974 = vpop.f32.mrf.mxu0
      %v975 = vadd.f32 0.0, %v974
      %976 = vmatmul.f32.gmra.mxu0 %v937
      %v977 = vpop.f32.mrf.mxu0
      %v978 = vadd.f32 0.0, %v977
      %979 = vmatmul.f32.gmra.mxu0 %v940
      %v980 = vpop.f32.mrf.mxu0
      %v981 = vadd.f32 0.0, %v980
      %982 = vmatmul.f32.gmra.mxu0 %v943
      %v983 = vpop.f32.mrf.mxu0
      %v984 = vadd.f32 0.0, %v983
      %985 = vdwg.mxu0
      %v986 = vadd.f32 %v896, %v963
      %v987 = vadd.f32 %v897, %v966
      %v988 = vadd.f32 %v898, %v969
      %v989 = vadd.f32 %v899, %v972
      %v990 = vadd.f32 %v900, %v975
      %v991 = vadd.f32 %v901, %v978
      %v992 = vadd.f32 %v902, %v981
      %v993 = vadd.f32 %v903, %v984
      %v994 = vld [vmem:[%s2] sm:$0x1]
      %v996 = vperm.slane %v994, 0
      %v998 = vmul.f32 %v986, %v996
      %v999 = vmul.f32 %v987, %v996
      %v1000 = vmul.f32 %v988, %v996
      %v1001 = vmul.f32 %v989, %v996
      %v1002 = vmul.f32 %v990, %v996
      %v1003 = vmul.f32 %v991, %v996
      %v1004 = vmul.f32 %v992, %v996
      %v1005 = vmul.f32 %v993, %v996
      %v1006 = vld [vmem:[%s3] sm:$0x1]
      %v1008 = vperm.slane %v1006, 0
      %v1010 = vadd.f32 %v998, %v1008
      %v1011 = vadd.f32 %v999, %v1008
      %v1012 = vadd.f32 %v1000, %v1008
      %v1013 = vadd.f32 %v1001, %v1008
      %v1014 = vadd.f32 %v1002, %v1008
      %v1015 = vadd.f32 %v1003, %v1008
      %v1016 = vadd.f32 %v1004, %v1008
      %v1017 = vadd.f32 %v1005, %v1008
      %v1018 = vmax.f32 %v1010, 0.0
      %v1019 = vmax.f32 %v1011, 0.0
      %v1020 = vmax.f32 %v1012, 0.0
      %v1021 = vmax.f32 %v1013, 0.0
      %v1022 = vmax.f32 %v1014, 0.0
      %v1023 = vmax.f32 %v1015, 0.0
      %v1024 = vmax.f32 %v1016, 0.0
      %v1025 = vmax.f32 %v1017, 0.0
      %1026 = vst.msk [vmem:[%s197] sm:$0xff] %vm231, %v1018
      %1027 = vst.msk [vmem:[%s197 + $0x8] sm:$0xff] %vm231, %v1019
      %1028 = vst.msk [vmem:[%s197 + $0x10] sm:$0xff] %vm231, %v1020
      %1029 = vst.msk [vmem:[%s197 + $0x18] sm:$0xff] %vm231, %v1021
      %1030 = vst.msk [vmem:[%s197 + $0x20] sm:$0xff] %vm231, %v1022
      %1031 = vst.msk [vmem:[%s197 + $0x28] sm:$0xff] %vm231, %v1023
      %1032 = vst.msk [vmem:[%s197 + $0x30] sm:$0xff] %vm231, %v1024
      %1033 = vst.msk [vmem:[%s197 + $0x38] sm:$0xff] %vm231, %v1025
      %p1034 = scmp.lt.s32.totalorder %s15, 1
      %s1035 = scalar_select %p1034, %s15, 1
      %s1036 = smul.addr %s1035, 8
      %s1037 = smul.addr %s1036, 8
      %s1038 = scalar_lea.vmem %s4, %s1037
      // Predicated region
      $region37: #{resnet_encoder_forward.6} parent=35 // pred_check
        %p1039 = pneg %p122
      $region38: #{resnet_encoder_forward.6} parent=35 // pred_check_branch
        %1041 = sbr.rel (%p1039) target = $region40
      $region39: #{resnet_encoder_forward.6} parent=35 // pred_region
        _
      $region40: #{resnet_encoder_forward.6} parent=35 // pred_fallthru
        _
    $region36: #{resnet_encoder_forward.6} parent=5 // pred_fallthru
      _
    %p1042 = scmp.le.s32.totalorder 2, %s10
    // Predicated region
    $region41: #{resnet_encoder_forward.6} parent=5 // pred_check
      %p1043 = pneg %p1042
    $region42: #{resnet_encoder_forward.6} parent=5 // pred_check_branch
      %1045 = sbr.rel (%p1043) target = $region44
    $region43: #{resnet_encoder_forward.6} parent=5 // pred_region
      %s1046 = ssub.s32 %s10, 2
      // Predicated region
      $region45: #{resnet_encoder_forward.6} parent=43 // pred_check
        %p1047 = pneg %p128
      $region46: #{resnet_encoder_forward.6} parent=43 // pred_check_branch
        %1049 = sbr.rel (%p1047) target = $region48
      $region47: #{resnet_encoder_forward.6} parent=43 // pred_region
        %p1050 = scmp.lt.s32.totalorder %s16, 1
        %s1051 = scalar_select %p1050, %s16, 1
        %s1052 = smul.addr %s1051, 8
        %s1053 = smul.addr %s1052, 8
        %s1054 = scalar_lea.vmem %s4, %s1053
      $region48: #{resnet_encoder_forward.6} parent=43 // pred_fallthru
        _
    $region44: #{resnet_encoder_forward.6} parent=5 // pred_fallthru
      _
  $region6: #{resnet_encoder_forward.6} parent=0 // loop_footer
    %s14 = sadd.s32 1, %s10
  $region7: #{resnet_encoder_forward.6} parent=0 // loop_footer_branch
    %9 = sbr.rel target = $region3
  $region8: #{resnet_encoder_forward.6} parent=0 // loop_exit
    _

// kernel: resnet_encoder_forward.7
$region0: #{resnet_encoder_forward.7}
  #allocation0 [shape = 'u32[]', space=smem, size = 0x4, offset = 0x4, fixed_abs, tag = 'smem constant byte address 0x4 - core index']
  #allocation1 [shape = 'u32[72,128]{1,0:T(1,128)}', space=vmem, size = 0x9000, scoped, tag = 'internal scratch']
  %s0 = inlined_call_operand.vmem [shape: f32[2,10,10,64], index: 0, kind: input, shape index: {}]
  %s1 = inlined_call_operand.vmem [shape: f32[9,64,64], index: 1, kind: input, shape index: {}]
  %s2 = inlined_call_operand.vmem [shape: f32[1,64], index: 2, kind: input, shape index: {}]
  %s3 = inlined_call_operand.vmem [shape: f32[1,64], index: 3, kind: input, shape index: {}]
  %s4 = inlined_call_operand.vmem [shape: f32[2,64,64], index: 4, kind: input, shape index: {}]
  %s5 = inlined_call_operand.vmem [shape: f32[2,64,64], index: 5, kind: output, shape index: {}]
  %s6 = sld [smem:[#allocation0]]
  $region53: #{resnet_encoder_forward.7} parent=0
    _
  %s8 = ssub.s32 1, %s6
  %s9 = scalar_select 0, %s8, %s6
  loop: start=0, step=1, limit=4
  $region2: #{resnet_encoder_forward.7} parent=0 // loop_pre_header
    _
  $region3: #{resnet_encoder_forward.7} parent=0 // loop_header
    %s11 = sphi 0, %s15
    %p12 = scmp.ge.s32.totalorder %s11, 4
    %s21 = sphi 0, %s23
    %s24 = sphi 0, %s21
    %s25 = sphi 0, %s24
    %s41 = sphi 0, %s25
    %s45 = sphi 0, %s45
    %s47 = sphi 0, %s45
    %s48 = sphi 0, %s47
    %s62 = sphi 0, %s48
    %s66 = sphi 0, %s66
    %s68 = sphi 0, %s66
    %s69 = sphi 0, %s68
    %s83 = sphi 0, %s69
    %s87 = sphi 0, %s87
    %s89 = sphi 0, %s87
    %s90 = sphi 0, %s89
    %s104 = sphi 0, %s90
    %s110 = sphi 0, %s112
    %s113 = sphi 0, %s110
    %s114 = sphi 0, %s113
    %s130 = sphi 0, %s114
    %s136 = sphi 0, %s138
    %s139 = sphi 0, %s136
    %s140 = sphi 0, %s139
    %s156 = sphi 0, %s140
  $region4: #{resnet_encoder_forward.7} parent=0 // loop_header_branch
    %14 = sbr.rel (%p12) target = $region8
  $region5: #{resnet_encoder_forward.7} parent=0 // loop_body
    %s16 = ssub.s32 %s11, 1
    %s17 = ssub.s32 %s11, 2
    %s18 = sadd.s32 %s11, 1
    %s19 = ssub.s32 %s11, %s18
    %p20 = scmp.eq.s32.totalorder %s19, 0
    %s22 = sadd.s32 %s21, 1
    %s23 = scalar_select %p20, %s21, %s22
    %p26 = pneg %p20
    %p27 = scmp.eq.s32.totalorder %s11, 1
    %p28 = por %p26, %p27
    %p29 = scmp.ne.s32.totalorder %s21, %s24
    %p30 = scmp.eq.s32.totalorder %s11, 0
    %p31 = por %p29, %p30
    %p32 = scmp.ne.s32.totalorder %s21, %s24
    %p33 = scmp.eq.s32.totalorder %s16, 1
    %p34 = por %p32, %p33
    %p35 = scmp.ne.s32.totalorder %s24, %s25
    %p36 = scmp.eq.s32.totalorder %s16, 0
    %p37 = por %p35, %p36
    %p38 = scmp.ne.s32.totalorder %s24, %s25
    %p39 = scmp.eq.s32.totalorder %s17, 1
    %p40 = por %p38, %p39
    %p42 = scmp.ne.s32.totalorder %s25, %s41
    %p43 = scmp.eq.s32.totalorder %s17, 0
    %p44 = por %p42, %p43
    %s46 = sadd.s32 %s45, 1
    %p49 = scmp.eq.s32.totalorder %s11, 1
    %p50 = scmp.ne.s32.totalorder %s45, %s47
    %p51 = scmp.eq.s32.totalorder %s11, 0
    %p52 = por %p50, %p51
    %p53 = scmp.ne.s32.totalorder %s45, %s47
    %p54 = scmp.eq.s32.totalorder %s16, 1
    %p55 = por %p53, %p54
    %p56 = scmp.ne.s32.totalorder %s47, %s48
    %p57 = scmp.eq.s32.totalorder %s16, 0
    %p58 = por %p56, %p57
    %p59 = scmp.ne.s32.totalorder %s47, %s48
    %p60 = scmp.eq.s32.totalorder %s17, 1
    %p61 = por %p59, %p60
    %p63 = scmp.ne.s32.totalorder %s48, %s62
    %p64 = scmp.eq.s32.totalorder %s17, 0
    %p65 = por %p63, %p64
    %s67 = sadd.s32 %s66, 1
    %p70 = scmp.eq.s32.totalorder %s11, 1
    %p71 = scmp.ne.s32.totalorder %s66, %s68
    %p72 = scmp.eq.s32.totalorder %s11, 0
    %p73 = por %p71, %p72
    %p74 = scmp.ne.s32.totalorder %s66, %s68
    %p75 = scmp.eq.s32.totalorder %s16, 1
    %p76 = por %p74, %p75
    %p77 = scmp.ne.s32.totalorder %s68, %s69
    %p78 = scmp.eq.s32.totalorder %s16, 0
    %p79 = por %p77, %p78
    %p80 = scmp.ne.s32.totalorder %s68, %s69
    %p81 = scmp.eq.s32.totalorder %s17, 1
    %p82 = por %p80, %p81
    %p84 = scmp.ne.s32.totalorder %s69, %s83
    %p85 = scmp.eq.s32.totalorder %s17, 0
    %p86 = por %p84, %p85
    %s88 = sadd.s32 %s87, 1
    %p91 = scmp.eq.s32.totalorder %s11, 1
    %p92 = scmp.ne.s32.totalorder %s87, %s89
    %p93 = scmp.eq.s32.totalorder %s11, 0
    %p94 = por %p92, %p93
    %p95 = scmp.ne.s32.totalorder %s87, %s89
    %p96 = scmp.eq.s32.totalorder %s16, 1
    %p97 = por %p95, %p96
    %p98 = scmp.ne.s32.totalorder %s89, %s90
    %p99 = scmp.eq.s32.totalorder %s16, 0
    %p100 = por %p98, %p99
    %p101 = scmp.ne.s32.totalorder %s89, %s90
    %p102 = scmp.eq.s32.totalorder %s17, 1
    %p103 = por %p101, %p102
    %p105 = scmp.ne.s32.totalorder %s90, %s104
    %p106 = scmp.eq.s32.totalorder %s17, 0
    %p107 = por %p105, %p106
    %s108 = ssub.s32 %s11, %s18
    %p109 = scmp.eq.s32.totalorder %s108, 0
    %s111 = sadd.s32 %s110, 1
    %s112 = scalar_select %p109, %s110, %s111
    %p115 = pneg %p109
    %p116 = scmp.eq.s32.totalorder %s11, 1
    %p117 = por %p115, %p116
    %p118 = scmp.ne.s32.totalorder %s110, %s113
    %p119 = scmp.eq.s32.totalorder %s11, 0
    %p120 = por %p118, %p119
    %p121 = scmp.ne.s32.totalorder %s110, %s113
    %p122 = scmp.eq.s32.totalorder %s16, 1
    %p123 = por %p121, %p122
    %p124 = scmp.ne.s32.totalorder %s113, %s114
    %p125 = scmp.eq.s32.totalorder %s16, 0
    %p126 = por %p124, %p125
    %p127 = scmp.ne.s32.totalorder %s113, %s114
    %p128 = scmp.eq.s32.totalorder %s17, 1
    %p129 = por %p127, %p128
    %p131 = scmp.ne.s32.totalorder %s114, %s130
    %p132 = scmp.eq.s32.totalorder %s17, 0
    %p133 = por %p131, %p132
    %s134 = ssub.s32 %s11, %s18
    %p135 = scmp.eq.s32.totalorder %s134, 0
    %s137 = sadd.s32 %s136, 1
    %s138 = scalar_select %p135, %s136, %s137
    %p141 = pneg %p135
    %p142 = scmp.eq.s32.totalorder %s11, 1
    %p143 = por %p141, %p142
    %p144 = scmp.ne.s32.totalorder %s136, %s139
    %p145 = scmp.eq.s32.totalorder %s11, 0
    %p146 = por %p144, %p145
    %p147 = scmp.ne.s32.totalorder %s136, %s139
    %p148 = scmp.eq.s32.totalorder %s16, 1
    %p149 = por %p147, %p148
    %p150 = scmp.ne.s32.totalorder %s139, %s140
    %p151 = scmp.eq.s32.totalorder %s16, 0
    %p152 = por %p150, %p151
    %p153 = scmp.ne.s32.totalorder %s139, %s140
    %p154 = scmp.eq.s32.totalorder %s17, 1
    %p155 = por %p153, %p154
    %p157 = scmp.ne.s32.totalorder %s140, %s156
    %p158 = scmp.eq.s32.totalorder %s17, 0
    %p159 = por %p157, %p158
    %p160 = scmp.le.s32.totalorder 1, %s11
    %p161 = scmp.lt.s32.totalorder %s11, 3
    %p162 = pnand %p160, %p161
    %p163 = pneg %p162
    // Predicated region
    $region9: #{resnet_encoder_forward.7} parent=5 // pred_check
      _
    $region10: #{resnet_encoder_forward.7} parent=5 // pred_check_branch
      %165 = sbr.rel (%p162) target = $region12
    $region11: #{resnet_encoder_forward.7} parent=5 // pred_region
      %s166 = ssub.s32 %s11, 1
      // Predicated region
      $region13: #{resnet_encoder_forward.7} parent=11 // pred_check
        %p167 = pneg %p58
      $region14: #{resnet_encoder_forward.7} parent=11 // pred_check_branch
        %169 = sbr.rel (%p167) target = $region16
      $region15: #{resnet_encoder_forward.7} parent=11 // pred_region
        _
      $region16: #{resnet_encoder_forward.7} parent=11 // pred_fallthru
        _
      // Predicated region
      $region17: #{resnet_encoder_forward.7} parent=11 // pred_check
        %p170 = pneg %p79
      $region18: #{resnet_encoder_forward.7} parent=11 // pred_check_branch
        %172 = sbr.rel (%p170) target = $region20
      $region19: #{resnet_encoder_forward.7} parent=11 // pred_region
        _
      $region20: #{resnet_encoder_forward.7} parent=11 // pred_fallthru
        _
      // Predicated region
      $region21: #{resnet_encoder_forward.7} parent=11 // pred_check
        %p173 = pneg %p100
      $region22: #{resnet_encoder_forward.7} parent=11 // pred_check_branch
        %175 = sbr.rel (%p173) target = $region24
      $region23: #{resnet_encoder_forward.7} parent=11 // pred_region
        _
      $region24: #{resnet_encoder_forward.7} parent=11 // pred_fallthru
        _
    $region12: #{resnet_encoder_forward.7} parent=5 // pred_fallthru
      _
    %p176 = scmp.lt.s32.totalorder %s11, 2
    // Predicated region
    $region25: #{resnet_encoder_forward.7} parent=5 // pred_check
      %p177 = pneg %p176
    $region26: #{resnet_encoder_forward.7} parent=5 // pred_check_branch
      %179 = sbr.rel (%p177) target = $region28
    $region27: #{resnet_encoder_forward.7} parent=5 // pred_region
      // Predicated region
      $region29: #{resnet_encoder_forward.7} parent=27 // pred_check
        %p180 = pneg %p31
      $region30: #{resnet_encoder_forward.7} parent=27 // pred_check_branch
        %182 = sbr.rel (%p180) target = $region32
      $region31: #{resnet_encoder_forward.7} parent=27 // pred_region
        %p183 = scmp.lt.s32.totalorder %s11, 1
        %s184 = scalar_select %p183, %s11, 1
        %s185 = smul.addr %s184, 20
        %s186 = smul.addr %s185, 8
        %s187 = scalar_lea.vmem %s0, %s186
      $region32: #{resnet_encoder_forward.7} parent=27 // pred_fallthru
        _
      // Predicated region
      $region33: #{resnet_encoder_forward.7} parent=27 // pred_check
        %p188 = pneg %p120
      $region34: #{resnet_encoder_forward.7} parent=27 // pred_check_branch
        %190 = sbr.rel (%p188) target = $region36
      $region35: #{resnet_encoder_forward.7} parent=27 // pred_region
        %p191 = scmp.lt.s32.totalorder %s11, 1
        %s192 = scalar_select %p191, %s11, 1
        %s193 = smul.addr %s192, 8
        %s194 = smul.addr %s193, 8
        %s195 = scalar_lea.vmem %s4, %s194
      $region36: #{resnet_encoder_forward.7} parent=27 // pred_fallthru
        _
    $region28: #{resnet_encoder_forward.7} parent=5 // pred_fallthru
      _
    %p196 = scmp.le.s32.totalorder 1, %s11
    %p197 = scmp.lt.s32.totalorder %s11, 3
    %p198 = pnand %p196, %p197
    %p199 = pneg %p198
    // Predicated region
    $region37: #{resnet_encoder_forward.7} parent=5 // pred_check
      _
    $region38: #{resnet_encoder_forward.7} parent=5 // pred_check_branch
      %201 = sbr.rel (%p198) target = $region40
    $region39: #{resnet_encoder_forward.7} parent=5 // pred_region
      %s202 = ssub.s32 %s11, 1
      %p203 = scmp.lt.s32.totalorder %s16, 1
      %s204 = scalar_select %p203, %s16, 1
      %s205 = smul.addr %s204, 20
      %s206 = smul.addr %s205, 8
      %s207 = scalar_lea.vmem %s0, %s206
      %p208 = pneg %p37
      %p209 = pneg %p34
      %p210 = pneg %p58
      %p211 = pneg %p55
      %p212 = pneg %p79
      %p213 = pneg %p76
      %p214 = pneg %p100
      %p215 = pneg %p97
      %p216 = scmp.lt.s32.totalorder %s16, 1
      %s217 = scalar_select %p216, %s16, 1
      %s218 = smul.addr %s217, 8
      %s219 = smul.addr %s218, 8
      %s220 = scalar_lea.vmem %s4, %s219
      %p221 = pneg %p126
      %p222 = pneg %p123
      %p223 = pneg %p152
      %p224 = pneg %p149
      %p225 = scmp.lt.s32.totalorder %s16, 1
      %s226 = scalar_select %p225, %s16, 1
      %s227 = smul.addr %s226, 8
      %s228 = smul.addr %s227, 8
      %s229 = scalar_lea.vmem %s5, %s228
      %p230 = scmp.lt.s32.totalorder %s16, 1
      %s231 = scalar_select %p230, %s16, 1
      %s232 = smul.addr %s231, 20
      %s233 = smul.addr %s232, 8
      %s234 = scalar_lea.vmem %s0, %s233
      %p235 = scmp.lt.s32.totalorder %s16, 1
      %s236 = scalar_select %p235, %s16, 1
      %s237 = smul.addr %s236, 8
      %s238 = smul.addr %s237, 8
      %s239 = scalar_lea.vmem %s4, %s238
      %p240 = scmp.lt.s32.totalorder %s16, 1
      %s241 = scalar_select %p240, %s16, 1
      %s242 = smul.addr %s241, 8
      %s243 = smul.addr %s242, 8
      %s244 = scalar_lea.vmem %s5, %s243
      %v245 = vld [vmem:[%s234] sm:$0xff]
      %v246 = vld [vmem:[%s234 + $0x10] sm:$0xff]
      %v247 = vld [vmem:[%s234 + $0x20] sm:$0xff]
      %v248 = vld [vmem:[%s234 + $0x30] sm:$0xff]
      %v249 = vld [vmem:[%s234 + $0x40] sm:$0xff]
      %v250 = vld [vmem:[%s234 + $0x50] sm:$0xff]
      %v251 = vld [vmem:[%s234 + $0x60] sm:$0xff]
      %v252 = vld [vmem:[%s234 + $0x70] sm:$0xff]
      %v253 = vld [vmem:[%s1] sm:$0xff]
      %v254 = vld [vmem:[%s1 + $0x8] sm:$0xff]
      %v255 = vld [vmem:[%s1 + $0x10] sm:$0xff]
      %v256 = vld [vmem:[%s1 + $0x18] sm:$0xff]
      %v257 = vld [vmem:[%s1 + $0x20] sm:$0xff]
      %v258 = vld [vmem:[%s1 + $0x28] sm:$0xff]
      %v259 = vld [vmem:[%s1 + $0x30] sm:$0xff]
      %v260 = vld [vmem:[%s1 + $0x38] sm:$0xff]
      %v261 = vld [vmem:[%s234 + $0x1] sm:$0xff]
      %v262 = vld [vmem:[%s234 + $0x11] sm:$0xff]
      %v263 = vld [vmem:[%s234 + $0x21] sm:$0xff]
      %v264 = vld [vmem:[%s234 + $0x31] sm:$0xff]
      %v265 = vld [vmem:[%s234 + $0x41] sm:$0xff]
      %v266 = vld [vmem:[%s234 + $0x51] sm:$0xff]
      %v267 = vld [vmem:[%s234 + $0x61] sm:$0xff]
      %v268 = vld [vmem:[%s234 + $0x71] sm:$0xff]
      %s269 = scalar_lea.vmem %s1, 64
      %v270 = vld [vmem:[%s269] sm:$0xff]
      %v271 = vld [vmem:[%s269 + $0x8] sm:$0xff]
      %v272 = vld [vmem:[%s269 + $0x10] sm:$0xff]
      %v273 = vld [vmem:[%s269 + $0x18] sm:$0xff]
      %v274 = vld [vmem:[%s269 + $0x20] sm:$0xff]
      %v275 = vld [vmem:[%s269 + $0x28] sm:$0xff]
      %v276 = vld [vmem:[%s269 + $0x30] sm:$0xff]
      %v277 = vld [vmem:[%s269 + $0x38] sm:$0xff]
      %vm278 = vcmask 523264
      %v280 = vsel %vm278, %v261, 0
      %v283 = vsel %vm278, %v262, 0
      %v286 = vsel %vm278, %v263, 0
      %v289 = vsel %vm278, %v264, 0
      %v292 = vsel %vm278, %v265, 0
      %v295 = vsel %vm278, %v266, 0
      %v298 = vsel %vm278, %v267, 0
      %v301 = vsel %vm278, %v268, 0
      %303 = vmatpush.msra.mxu0 0.0
      %304 = vmatpush.msra.mxu0 0.0
      %305 = vmatpush.msra.mxu0 0.0
      %306 = vmatpush.msra.mxu0 0.0
      %307 = vmatpush.msra.mxu0 0.0
      %308 = vmatpush.msra.mxu0 0.0
      %309 = vmatpush.msra.mxu0 0.0
      %310 = vmatpush.msra.mxu0 0.0
      %311 = vmatpush.msra.mxu0 %v277
      %312 = vmatpush.msra.mxu0 %v276
      %313 = vmatpush.msra.mxu0 %v275
      %314 = vmatpush.msra.mxu0 %v274
      %315 = vmatpush.msra.mxu0 %v273
      %316 = vmatpush.msra.mxu0 %v272
      %317 = vmatpush.msra.mxu0 %v271
      %318 = vmatpush.msra.mxu0 %v270
      %319 = vmatmul.f32.gmra.mxu0 %v280
      %v320 = vpop.f32.mrf.mxu0
      %v321 = vadd.f32 0.0, %v320
      %322 = vmatmul.f32.gmra.mxu0 %v283
      %v323 = vpop.f32.mrf.mxu0
      %v324 = vadd.f32 0.0, %v323
      %325 = vmatmul.f32.gmra.mxu0 %v286
      %v326 = vpop.f32.mrf.mxu0
      %v327 = vadd.f32 0.0, %v326
      %328 = vmatmul.f32.gmra.mxu0 %v289
      %v329 = vpop.f32.mrf.mxu0
      %v330 = vadd.f32 0.0, %v329
      %331 = vmatmul.f32.gmra.mxu0 %v292
      %v332 = vpop.f32.mrf.mxu0
      %v333 = vadd.f32 0.0, %v332
      %334 = vmatmul.f32.gmra.mxu0 %v295
      %v335 = vpop.f32.mrf.mxu0
      %v336 = vadd.f32 0.0, %v335
      %337 = vmatmul.f32.gmra.mxu0 %v298
      %v338 = vpop.f32.mrf.mxu0
      %v339 = vadd.f32 0.0, %v338
      %340 = vmatmul.f32.gmra.mxu0 %v301
      %v341 = vpop.f32.mrf.mxu0
      %v342 = vadd.f32 0.0, %v341
      %343 = vdwg.mxu0
      %v345 = vsel %vm278, %v245, 0
      %v348 = vsel %vm278, %v246, 0
      %v351 = vsel %vm278, %v247, 0
      %v354 = vsel %vm278, %v248, 0
      %v357 = vsel %vm278, %v249, 0
      %v360 = vsel %vm278, %v250, 0
      %v363 = vsel %vm278, %v251, 0
      %v366 = vsel %vm278, %v252, 0
      %368 = vmatpush.msra.mxu0 0.0
      %369 = vmatpush.msra.mxu0 0.0
      %370 = vmatpush.msra.mxu0 0.0
      %371 = vmatpush.msra.mxu0 0.0
      %372 = vmatpush.msra.mxu0 0.0
      %373 = vmatpush.msra.mxu0 0.0
      %374 = vmatpush.msra.mxu0 0.0
      %375 = vmatpush.msra.mxu0 0.0
      %376 = vmatpush.msra.mxu0 %v260
      %377 = vmatpush.msra.mxu0 %v259
      %378 = vmatpush.msra.mxu0 %v258
      %379 = vmatpush.msra.mxu0 %v257
      %380 = vmatpush.msra.mxu0 %v256
      %381 = vmatpush.msra.mxu0 %v255
      %382 = vmatpush.msra.mxu0 %v254
      %383 = vmatpush.msra.mxu0 %v253
      %384 = vmatmul.f32.gmra.mxu0 %v345
      %v385 = vpop.f32.mrf.mxu0
      %v386 = vadd.f32 %v321, %v385
      %387 = vmatmul.f32.gmra.mxu0 %v348
      %v388 = vpop.f32.mrf.mxu0
      %v389 = vadd.f32 %v324, %v388
      %390 = vmatmul.f32.gmra.mxu0 %v351
      %v391 = vpop.f32.mrf.mxu0
      %v392 = vadd.f32 %v327, %v391
      %393 = vmatmul.f32.gmra.mxu0 %v354
      %v394 = vpop.f32.mrf.mxu0
      %v395 = vadd.f32 %v330, %v394
      %396 = vmatmul.f32.gmra.mxu0 %v357
      %v397 = vpop.f32.mrf.mxu0
      %v398 = vadd.f32 %v333, %v397
      %399 = vmatmul.f32.gmra.mxu0 %v360
      %v400 = vpop.f32.mrf.mxu0
      %v401 = vadd.f32 %v336, %v400
      %402 = vmatmul.f32.gmra.mxu0 %v363
      %v403 = vpop.f32.mrf.mxu0
      %v404 = vadd.f32 %v339, %v403
      %405 = vmatmul.f32.gmra.mxu0 %v366
      %v406 = vpop.f32.mrf.mxu0
      %v407 = vadd.f32 %v342, %v406
      %408 = vdwg.mxu0
      %v409 = vld [vmem:[%s234 + $0x2] sm:$0xff]
      %v410 = vld [vmem:[%s234 + $0x12] sm:$0xff]
      %v411 = vld [vmem:[%s234 + $0x22] sm:$0xff]
      %v412 = vld [vmem:[%s234 + $0x32] sm:$0xff]
      %v413 = vld [vmem:[%s234 + $0x42] sm:$0xff]
      %v414 = vld [vmem:[%s234 + $0x52] sm:$0xff]
      %v415 = vld [vmem:[%s234 + $0x62] sm:$0xff]
      %v416 = vld [vmem:[%s234 + $0x72] sm:$0xff]
      %s417 = scalar_lea.vmem %s1, 128
      %v418 = vld [vmem:[%s417] sm:$0xff]
      %v419 = vld [vmem:[%s417 + $0x8] sm:$0xff]
      %v420 = vld [vmem:[%s417 + $0x10] sm:$0xff]
      %v421 = vld [vmem:[%s417 + $0x18] sm:$0xff]
      %v422 = vld [vmem:[%s417 + $0x20] sm:$0xff]
      %v423 = vld [vmem:[%s417 + $0x28] sm:$0xff]
      %v424 = vld [vmem:[%s417 + $0x30] sm:$0xff]
      %v425 = vld [vmem:[%s417 + $0x38] sm:$0xff]
      %v427 = vsel %vm278, %v409, 0
      %v430 = vsel %vm278, %v410, 0
      %v433 = vsel %vm278, %v411, 0
      %v436 = vsel %vm278, %v412, 0
      %v439 = vsel %vm278, %v413, 0
      %v442 = vsel %vm278, %v414, 0
      %v445 = vsel %vm278, %v415, 0
      %v448 = vsel %vm278, %v416, 0
      %450 = vmatpush.msra.mxu0 0.0
      %451 = vmatpush.msra.mxu0 0.0
      %452 = vmatpush.msra.mxu0 0.0
      %453 = vmatpush.msra.mxu0 0.0
      %454 = vmatpush.msra.mxu0 0.0
      %455 = vmatpush.msra.mxu0 0.0
      %456 = vmatpush.msra.mxu0 0.0
      %457 = vmatpush.msra.mxu0 0.0
      %458 = vmatpush.msra.mxu0 %v425
      %459 = vmatpush.msra.mxu0 %v424
      %460 = vmatpush.msra.mxu0 %v423
      %461 = vmatpush.msra.mxu0 %v422
      %462 = vmatpush.msra.mxu0 %v421
      %463 = vmatpush.msra.mxu0 %v420
      %464 = vmatpush.msra.mxu0 %v419
      %465 = vmatpush.msra.mxu0 %v418
      %466 = vmatmul.f32.gmra.mxu0 %v427
      %v467 = vpop.f32.mrf.mxu0
      %v468 = vadd.f32 0.0, %v467
      %469 = vmatmul.f32.gmra.mxu0 %v430
      %v470 = vpop.f32.mrf.mxu0
      %v471 = vadd.f32 0.0, %v470
      %472 = vmatmul.f32.gmra.mxu0 %v433
      %v473 = vpop.f32.mrf.mxu0
      %v474 = vadd.f32 0.0, %v473
      %475 = vmatmul.f32.gmra.mxu0 %v436
      %v476 = vpop.f32.mrf.mxu0
      %v477 = vadd.f32 0.0, %v476
      %478 = vmatmul.f32.gmra.mxu0 %v439
      %v479 = vpop.f32.mrf.mxu0
      %v480 = vadd.f32 0.0, %v479
      %481 = vmatmul.f32.gmra.mxu0 %v442
      %v482 = vpop.f32.mrf.mxu0
      %v483 = vadd.f32 0.0, %v482
      %484 = vmatmul.f32.gmra.mxu0 %v445
      %v485 = vpop.f32.mrf.mxu0
      %v486 = vadd.f32 0.0, %v485
      %487 = vmatmul.f32.gmra.mxu0 %v448
      %v488 = vpop.f32.mrf.mxu0
      %v489 = vadd.f32 0.0, %v488
      %490 = vdwg.mxu0
      %v491 = vadd.f32 %v386, %v468
      %v492 = vadd.f32 %v389, %v471
      %v493 = vadd.f32 %v392, %v474
      %v494 = vadd.f32 %v395, %v477
      %v495 = vadd.f32 %v398, %v480
      %v496 = vadd.f32 %v401, %v483
      %v497 = vadd.f32 %v404, %v486
      %v498 = vadd.f32 %v407, %v489
      %s499 = scalar_lea.vmem %s234, 16
      %v500 = vld [vmem:[%s499] sm:$0xff]
      %v501 = vld [vmem:[%s499 + $0x10] sm:$0xff]
      %v502 = vld [vmem:[%s499 + $0x20] sm:$0xff]
      %v503 = vld [vmem:[%s499 + $0x30] sm:$0xff]
      %v504 = vld [vmem:[%s499 + $0x40] sm:$0xff]
      %v505 = vld [vmem:[%s499 + $0x50] sm:$0xff]
      %v506 = vld [vmem:[%s499 + $0x60] sm:$0xff]
      %v507 = vld [vmem:[%s499 + $0x70] sm:$0xff]
      %s508 = scalar_lea.vmem %s1, 192
      %v509 = vld [vmem:[%s508] sm:$0xff]
      %v510 = vld [vmem:[%s508 + $0x8] sm:$0xff]
      %v511 = vld [vmem:[%s508 + $0x10] sm:$0xff]
      %v512 = vld [vmem:[%s508 + $0x18] sm:$0xff]
      %v513 = vld [vmem:[%s508 + $0x20] sm:$0xff]
      %v514 = vld [vmem:[%s508 + $0x28] sm:$0xff]
      %v515 = vld [vmem:[%s508 + $0x30] sm:$0xff]
      %v516 = vld [vmem:[%s508 + $0x38] sm:$0xff]
      %v518 = vsel %vm278, %v500, 0
      %v521 = vsel %vm278, %v501, 0
      %v524 = vsel %vm278, %v502, 0
      %v527 = vsel %vm278, %v503, 0
      %v530 = vsel %vm278, %v504, 0
      %v533 = vsel %vm278, %v505, 0
      %v536 = vsel %vm278, %v506, 0
      %v539 = vsel %vm278, %v507, 0
      %541 = vmatpush.msra.mxu0 0.0
      %542 = vmatpush.msra.mxu0 0.0
      %543 = vmatpush.msra.mxu0 0.0
      %544 = vmatpush.msra.mxu0 0.0
      %545 = vmatpush.msra.mxu0 0.0
      %546 = vmatpush.msra.mxu0 0.0
      %547 = vmatpush.msra.mxu0 0.0
      %548 = vmatpush.msra.mxu0 0.0
      %549 = vmatpush.msra.mxu0 %v516
      %550 = vmatpush.msra.mxu0 %v515
      %551 = vmatpush.msra.mxu0 %v514
      %552 = vmatpush.msra.mxu0 %v513
      %553 = vmatpush.msra.mxu0 %v512
      %554 = vmatpush.msra.mxu0 %v511
      %555 = vmatpush.msra.mxu0 %v510
      %556 = vmatpush.msra.mxu0 %v509
      %557 = vmatmul.f32.gmra.mxu0 %v518
      %v558 = vpop.f32.mrf.mxu0
      %v559 = vadd.f32 0.0, %v558
      %560 = vmatmul.f32.gmra.mxu0 %v521
      %v561 = vpop.f32.mrf.mxu0
      %v562 = vadd.f32 0.0, %v561
      %563 = vmatmul.f32.gmra.mxu0 %v524
      %v564 = vpop.f32.mrf.mxu0
      %v565 = vadd.f32 0.0, %v564
      %566 = vmatmul.f32.gmra.mxu0 %v527
      %v567 = vpop.f32.mrf.mxu0
      %v568 = vadd.f32 0.0, %v567
      %569 = vmatmul.f32.gmra.mxu0 %v530
      %v570 = vpop.f32.mrf.mxu0
      %v571 = vadd.f32 0.0, %v570
      %572 = vmatmul.f32.gmra.mxu0 %v533
      %v573 = vpop.f32.mrf.mxu0
      %v574 = vadd.f32 0.0, %v573
      %575 = vmatmul.f32.gmra.mxu0 %v536
      %v576 = vpop.f32.mrf.mxu0
      %v577 = vadd.f32 0.0, %v576
      %578 = vmatmul.f32.gmra.mxu0 %v539
      %v579 = vpop.f32.mrf.mxu0
      %v580 = vadd.f32 0.0, %v579
      %581 = vdwg.mxu0
      %v582 = vadd.f32 %v491, %v559
      %v583 = vadd.f32 %v492, %v562
      %v584 = vadd.f32 %v493, %v565
      %v585 = vadd.f32 %v494, %v568
      %v586 = vadd.f32 %v495, %v571
      %v587 = vadd.f32 %v496, %v574
      %v588 = vadd.f32 %v497, %v577
      %v589 = vadd.f32 %v498, %v580
      %v590 = vld [vmem:[%s499 + $0x1] sm:$0xff]
      %v591 = vld [vmem:[%s499 + $0x11] sm:$0xff]
      %v592 = vld [vmem:[%s499 + $0x21] sm:$0xff]
      %v593 = vld [vmem:[%s499 + $0x31] sm:$0xff]
      %v594 = vld [vmem:[%s499 + $0x41] sm:$0xff]
      %v595 = vld [vmem:[%s499 + $0x51] sm:$0xff]
      %v596 = vld [vmem:[%s499 + $0x61] sm:$0xff]
      %v597 = vld [vmem:[%s499 + $0x71] sm:$0xff]
      %s598 = scalar_lea.vmem %s1, 256
      %v599 = vld [vmem:[%s598] sm:$0xff]
      %v600 = vld [vmem:[%s598 + $0x8] sm:$0xff]
      %v601 = vld [vmem:[%s598 + $0x10] sm:$0xff]
      %v602 = vld [vmem:[%s598 + $0x18] sm:$0xff]
      %v603 = vld [vmem:[%s598 + $0x20] sm:$0xff]
      %v604 = vld [vmem:[%s598 + $0x28] sm:$0xff]
      %v605 = vld [vmem:[%s598 + $0x30] sm:$0xff]
      %v606 = vld [vmem:[%s598 + $0x38] sm:$0xff]
      %v608 = vsel %vm278, %v590, 0
      %v611 = vsel %vm278, %v591, 0
      %v614 = vsel %vm278, %v592, 0
      %v617 = vsel %vm278, %v593, 0
      %v620 = vsel %vm278, %v594, 0
      %v623 = vsel %vm278, %v595, 0
      %v626 = vsel %vm278, %v596, 0
      %v629 = vsel %vm278, %v597, 0
      %631 = vmatpush.msra.mxu0 0.0
      %632 = vmatpush.msra.mxu0 0.0
      %633 = vmatpush.msra.mxu0 0.0
      %634 = vmatpush.msra.mxu0 0.0
      %635 = vmatpush.msra.mxu0 0.0
      %636 = vmatpush.msra.mxu0 0.0
      %637 = vmatpush.msra.mxu0 0.0
      %638 = vmatpush.msra.mxu0 0.0
      %639 = vmatpush.msra.mxu0 %v606
      %640 = vmatpush.msra.mxu0 %v605
      %641 = vmatpush.msra.mxu0 %v604
      %642 = vmatpush.msra.mxu0 %v603
      %643 = vmatpush.msra.mxu0 %v602
      %644 = vmatpush.msra.mxu0 %v601
      %645 = vmatpush.msra.mxu0 %v600
      %646 = vmatpush.msra.mxu0 %v599
      %647 = vmatmul.f32.gmra.mxu0 %v608
      %v648 = vpop.f32.mrf.mxu0
      %v649 = vadd.f32 0.0, %v648
      %650 = vmatmul.f32.gmra.mxu0 %v611
      %v651 = vpop.f32.mrf.mxu0
      %v652 = vadd.f32 0.0, %v651
      %653 = vmatmul.f32.gmra.mxu0 %v614
      %v654 = vpop.f32.mrf.mxu0
      %v655 = vadd.f32 0.0, %v654
      %656 = vmatmul.f32.gmra.mxu0 %v617
      %v657 = vpop.f32.mrf.mxu0
      %v658 = vadd.f32 0.0, %v657
      %659 = vmatmul.f32.gmra.mxu0 %v620
      %v660 = vpop.f32.mrf.mxu0
      %v661 = vadd.f32 0.0, %v660
      %662 = vmatmul.f32.gmra.mxu0 %v623
      %v663 = vpop.f32.mrf.mxu0
      %v664 = vadd.f32 0.0, %v663
      %665 = vmatmul.f32.gmra.mxu0 %v626
      %v666 = vpop.f32.mrf.mxu0
      %v667 = vadd.f32 0.0, %v666
      %668 = vmatmul.f32.gmra.mxu0 %v629
      %v669 = vpop.f32.mrf.mxu0
      %v670 = vadd.f32 0.0, %v669
      %671 = vdwg.mxu0
      %v672 = vadd.f32 %v582, %v649
      %v673 = vadd.f32 %v583, %v652
      %v674 = vadd.f32 %v584, %v655
      %v675 = vadd.f32 %v585, %v658
      %v676 = vadd.f32 %v586, %v661
      %v677 = vadd.f32 %v587, %v664
      %v678 = vadd.f32 %v588, %v667
      %v679 = vadd.f32 %v589, %v670
      %v680 = vld [vmem:[%s499 + $0x2] sm:$0xff]
      %v681 = vld [vmem:[%s499 + $0x12] sm:$0xff]
      %v682 = vld [vmem:[%s499 + $0x22] sm:$0xff]
      %v683 = vld [vmem:[%s499 + $0x32] sm:$0xff]
      %v684 = vld [vmem:[%s499 + $0x42] sm:$0xff]
      %v685 = vld [vmem:[%s499 + $0x52] sm:$0xff]
      %v686 = vld [vmem:[%s499 + $0x62] sm:$0xff]
      %v687 = vld [vmem:[%s499 + $0x72] sm:$0xff]
      %s688 = scalar_lea.vmem %s1, 320
      %v689 = vld [vmem:[%s688] sm:$0xff]
      %v690 = vld [vmem:[%s688 + $0x8] sm:$0xff]
      %v691 = vld [vmem:[%s688 + $0x10] sm:$0xff]
      %v692 = vld [vmem:[%s688 + $0x18] sm:$0xff]
      %v693 = vld [vmem:[%s688 + $0x20] sm:$0xff]
      %v694 = vld [vmem:[%s688 + $0x28] sm:$0xff]
      %v695 = vld [vmem:[%s688 + $0x30] sm:$0xff]
      %v696 = vld [vmem:[%s688 + $0x38] sm:$0xff]
      %v698 = vsel %vm278, %v680, 0
      %v701 = vsel %vm278, %v681, 0
      %v704 = vsel %vm278, %v682, 0
      %v707 = vsel %vm278, %v683, 0
      %v710 = vsel %vm278, %v684, 0
      %v713 = vsel %vm278, %v685, 0
      %v716 = vsel %vm278, %v686, 0
      %v719 = vsel %vm278, %v687, 0
      %721 = vmatpush.msra.mxu0 0.0
      %722 = vmatpush.msra.mxu0 0.0
      %723 = vmatpush.msra.mxu0 0.0
      %724 = vmatpush.msra.mxu0 0.0
      %725 = vmatpush.msra.mxu0 0.0
      %726 = vmatpush.msra.mxu0 0.0
      %727 = vmatpush.msra.mxu0 0.0
      %728 = vmatpush.msra.mxu0 0.0
      %729 = vmatpush.msra.mxu0 %v696
      %730 = vmatpush.msra.mxu0 %v695
      %731 = vmatpush.msra.mxu0 %v694
      %732 = vmatpush.msra.mxu0 %v693
      %733 = vmatpush.msra.mxu0 %v692
      %734 = vmatpush.msra.mxu0 %v691
      %735 = vmatpush.msra.mxu0 %v690
      %736 = vmatpush.msra.mxu0 %v689
      %737 = vmatmul.f32.gmra.mxu0 %v698
      %v738 = vpop.f32.mrf.mxu0
      %v739 = vadd.f32 0.0, %v738
      %740 = vmatmul.f32.gmra.mxu0 %v701
      %v741 = vpop.f32.mrf.mxu0
      %v742 = vadd.f32 0.0, %v741
      %743 = vmatmul.f32.gmra.mxu0 %v704
      %v744 = vpop.f32.mrf.mxu0
      %v745 = vadd.f32 0.0, %v744
      %746 = vmatmul.f32.gmra.mxu0 %v707
      %v747 = vpop.f32.mrf.mxu0
      %v748 = vadd.f32 0.0, %v747
      %749 = vmatmul.f32.gmra.mxu0 %v710
      %v750 = vpop.f32.mrf.mxu0
      %v751 = vadd.f32 0.0, %v750
      %752 = vmatmul.f32.gmra.mxu0 %v713
      %v753 = vpop.f32.mrf.mxu0
      %v754 = vadd.f32 0.0, %v753
      %755 = vmatmul.f32.gmra.mxu0 %v716
      %v756 = vpop.f32.mrf.mxu0
      %v757 = vadd.f32 0.0, %v756
      %758 = vmatmul.f32.gmra.mxu0 %v719
      %v759 = vpop.f32.mrf.mxu0
      %v760 = vadd.f32 0.0, %v759
      %761 = vdwg.mxu0
      %v762 = vadd.f32 %v672, %v739
      %v763 = vadd.f32 %v673, %v742
      %v764 = vadd.f32 %v674, %v745
      %v765 = vadd.f32 %v675, %v748
      %v766 = vadd.f32 %v676, %v751
      %v767 = vadd.f32 %v677, %v754
      %v768 = vadd.f32 %v678, %v757
      %v769 = vadd.f32 %v679, %v760
      %s770 = scalar_lea.vmem %s234, 32
      %v771 = vld [vmem:[%s770] sm:$0xff]
      %v772 = vld [vmem:[%s770 + $0x10] sm:$0xff]
      %v773 = vld [vmem:[%s770 + $0x20] sm:$0xff]
      %v774 = vld [vmem:[%s770 + $0x30] sm:$0xff]
      %v775 = vld [vmem:[%s770 + $0x40] sm:$0xff]
      %v776 = vld [vmem:[%s770 + $0x50] sm:$0xff]
      %v777 = vld [vmem:[%s770 + $0x60] sm:$0xff]
      %v778 = vld [vmem:[%s770 + $0x70] sm:$0xff]
      %s779 = scalar_lea.vmem %s1, 384
      %v780 = vld [vmem:[%s779] sm:$0xff]
      %v781 = vld [vmem:[%s779 + $0x8] sm:$0xff]
      %v782 = vld [vmem:[%s779 + $0x10] sm:$0xff]
      %v783 = vld [vmem:[%s779 + $0x18] sm:$0xff]
      %v784 = vld [vmem:[%s779 + $0x20] sm:$0xff]
      %v785 = vld [vmem:[%s779 + $0x28] sm:$0xff]
      %v786 = vld [vmem:[%s779 + $0x30] sm:$0xff]
      %v787 = vld [vmem:[%s779 + $0x38] sm:$0xff]
      %v789 = vsel %vm278, %v771, 0
      %v792 = vsel %vm278, %v772, 0
      %v795 = vsel %vm278, %v773, 0
      %v798 = vsel %vm278, %v774, 0
      %v801 = vsel %vm278, %v775, 0
      %v804 = vsel %vm278, %v776, 0
      %v807 = vsel %vm278, %v777, 0
      %v810 = vsel %vm278, %v778, 0
      %812 = vmatpush.msra.mxu0 0.0
      %813 = vmatpush.msra.mxu0 0.0
      %814 = vmatpush.msra.mxu0 0.0
      %815 = vmatpush.msra.mxu0 0.0
      %816 = vmatpush.msra.mxu0 0.0
      %817 = vmatpush.msra.mxu0 0.0
      %818 = vmatpush.msra.mxu0 0.0
      %819 = vmatpush.msra.mxu0 0.0
      %820 = vmatpush.msra.mxu0 %v787
      %821 = vmatpush.msra.mxu0 %v786
      %822 = vmatpush.msra.mxu0 %v785
      %823 = vmatpush.msra.mxu0 %v784
      %824 = vmatpush.msra.mxu0 %v783
      %825 = vmatpush.msra.mxu0 %v782
      %826 = vmatpush.msra.mxu0 %v781
      %827 = vmatpush.msra.mxu0 %v780
      %828 = vmatmul.f32.gmra.mxu0 %v789
      %v829 = vpop.f32.mrf.mxu0
      %v830 = vadd.f32 0.0, %v829
      %831 = vmatmul.f32.gmra.mxu0 %v792
      %v832 = vpop.f32.mrf.mxu0
      %v833 = vadd.f32 0.0, %v832
      %834 = vmatmul.f32.gmra.mxu0 %v795
      %v835 = vpop.f32.mrf.mxu0
      %v836 = vadd.f32 0.0, %v835
      %837 = vmatmul.f32.gmra.mxu0 %v798
      %v838 = vpop.f32.mrf.mxu0
      %v839 = vadd.f32 0.0, %v838
      %840 = vmatmul.f32.gmra.mxu0 %v801
      %v841 = vpop.f32.mrf.mxu0
      %v842 = vadd.f32 0.0, %v841
      %843 = vmatmul.f32.gmra.mxu0 %v804
      %v844 = vpop.f32.mrf.mxu0
      %v845 = vadd.f32 0.0, %v844
      %846 = vmatmul.f32.gmra.mxu0 %v807
      %v847 = vpop.f32.mrf.mxu0
      %v848 = vadd.f32 0.0, %v847
      %849 = vmatmul.f32.gmra.mxu0 %v810
      %v850 = vpop.f32.mrf.mxu0
      %v851 = vadd.f32 0.0, %v850
      %852 = vdwg.mxu0
      %v853 = vadd.f32 %v762, %v830
      %v854 = vadd.f32 %v763, %v833
      %v855 = vadd.f32 %v764, %v836
      %v856 = vadd.f32 %v765, %v839
      %v857 = vadd.f32 %v766, %v842
      %v858 = vadd.f32 %v767, %v845
      %v859 = vadd.f32 %v768, %v848
      %v860 = vadd.f32 %v769, %v851
      %v861 = vld [vmem:[%s770 + $0x1] sm:$0xff]
      %v862 = vld [vmem:[%s770 + $0x11] sm:$0xff]
      %v863 = vld [vmem:[%s770 + $0x21] sm:$0xff]
      %v864 = vld [vmem:[%s770 + $0x31] sm:$0xff]
      %v865 = vld [vmem:[%s770 + $0x41] sm:$0xff]
      %v866 = vld [vmem:[%s770 + $0x51] sm:$0xff]
      %v867 = vld [vmem:[%s770 + $0x61] sm:$0xff]
      %v868 = vld [vmem:[%s770 + $0x71] sm:$0xff]
      %s869 = scalar_lea.vmem %s1, 448
      %v870 = vld [vmem:[%s869] sm:$0xff]
      %v871 = vld [vmem:[%s869 + $0x8] sm:$0xff]
      %v872 = vld [vmem:[%s869 + $0x10] sm:$0xff]
      %v873 = vld [vmem:[%s869 + $0x18] sm:$0xff]
      %v874 = vld [vmem:[%s869 + $0x20] sm:$0xff]
      %v875 = vld [vmem:[%s869 + $0x28] sm:$0xff]
      %v876 = vld [vmem:[%s869 + $0x30] sm:$0xff]
      %v877 = vld [vmem:[%s869 + $0x38] sm:$0xff]
      %v879 = vsel %vm278, %v861, 0
      %v882 = vsel %vm278, %v862, 0
      %v885 = vsel %vm278, %v863, 0
      %v888 = vsel %vm278, %v864, 0
      %v891 = vsel %vm278, %v865, 0
      %v894 = vsel %vm278, %v866, 0
      %v897 = vsel %vm278, %v867, 0
      %v900 = vsel %vm278, %v868, 0
      %902 = vmatpush.msra.mxu0 0.0
      %903 = vmatpush.msra.mxu0 0.0
      %904 = vmatpush.msra.mxu0 0.0
      %905 = vmatpush.msra.mxu0 0.0
      %906 = vmatpush.msra.mxu0 0.0
      %907 = vmatpush.msra.mxu0 0.0
      %908 = vmatpush.msra.mxu0 0.0
      %909 = vmatpush.msra.mxu0 0.0
      %910 = vmatpush.msra.mxu0 %v877
      %911 = vmatpush.msra.mxu0 %v876
      %912 = vmatpush.msra.mxu0 %v875
      %913 = vmatpush.msra.mxu0 %v874
      %914 = vmatpush.msra.mxu0 %v873
      %915 = vmatpush.msra.mxu0 %v872
      %916 = vmatpush.msra.mxu0 %v871
      %917 = vmatpush.msra.mxu0 %v870
      %918 = vmatmul.f32.gmra.mxu0 %v879
      %v919 = vpop.f32.mrf.mxu0
      %v920 = vadd.f32 0.0, %v919
      %921 = vmatmul.f32.gmra.mxu0 %v882
      %v922 = vpop.f32.mrf.mxu0
      %v923 = vadd.f32 0.0, %v922
      %924 = vmatmul.f32.gmra.mxu0 %v885
      %v925 = vpop.f32.mrf.mxu0
      %v926 = vadd.f32 0.0, %v925
      %927 = vmatmul.f32.gmra.mxu0 %v888
      %v928 = vpop.f32.mrf.mxu0
      %v929 = vadd.f32 0.0, %v928
      %930 = vmatmul.f32.gmra.mxu0 %v891
      %v931 = vpop.f32.mrf.mxu0
      %v932 = vadd.f32 0.0, %v931
      %933 = vmatmul.f32.gmra.mxu0 %v894
      %v934 = vpop.f32.mrf.mxu0
      %v935 = vadd.f32 0.0, %v934
      %936 = vmatmul.f32.gmra.mxu0 %v897
      %v937 = vpop.f32.mrf.mxu0
      %v938 = vadd.f32 0.0, %v937
      %939 = vmatmul.f32.gmra.mxu0 %v900
      %v940 = vpop.f32.mrf.mxu0
      %v941 = vadd.f32 0.0, %v940
      %942 = vdwg.mxu0
      %v943 = vadd.f32 %v853, %v920
      %v944 = vadd.f32 %v854, %v923
      %v945 = vadd.f32 %v855, %v926
      %v946 = vadd.f32 %v856, %v929
      %v947 = vadd.f32 %v857, %v932
      %v948 = vadd.f32 %v858, %v935
      %v949 = vadd.f32 %v859, %v938
      %v950 = vadd.f32 %v860, %v941
      %v951 = vld [vmem:[%s770 + $0x2] sm:$0xff]
      %v952 = vld [vmem:[%s770 + $0x12] sm:$0xff]
      %v953 = vld [vmem:[%s770 + $0x22] sm:$0xff]
      %v954 = vld [vmem:[%s770 + $0x32] sm:$0xff]
      %v955 = vld [vmem:[%s770 + $0x42] sm:$0xff]
      %v956 = vld [vmem:[%s770 + $0x52] sm:$0xff]
      %v957 = vld [vmem:[%s770 + $0x62] sm:$0xff]
      %v958 = vld [vmem:[%s770 + $0x72] sm:$0xff]
      %s959 = scalar_lea.vmem %s1, 512
      %v960 = vld [vmem:[%s959] sm:$0xff]
      %v961 = vld [vmem:[%s959 + $0x8] sm:$0xff]
      %v962 = vld [vmem:[%s959 + $0x10] sm:$0xff]
      %v963 = vld [vmem:[%s959 + $0x18] sm:$0xff]
      %v964 = vld [vmem:[%s959 + $0x20] sm:$0xff]
      %v965 = vld [vmem:[%s959 + $0x28] sm:$0xff]
      %v966 = vld [vmem:[%s959 + $0x30] sm:$0xff]
      %v967 = vld [vmem:[%s959 + $0x38] sm:$0xff]
      %v969 = vsel %vm278, %v951, 0
      %v972 = vsel %vm278, %v952, 0
      %v975 = vsel %vm278, %v953, 0
      %v978 = vsel %vm278, %v954, 0
      %v981 = vsel %vm278, %v955, 0
      %v984 = vsel %vm278, %v956, 0
      %v987 = vsel %vm278, %v957, 0
      %v990 = vsel %vm278, %v958, 0
      %992 = vmatpush.msra.mxu0 0.0
      %993 = vmatpush.msra.mxu0 0.0
      %994 = vmatpush.msra.mxu0 0.0
      %995 = vmatpush.msra.mxu0 0.0
      %996 = vmatpush.msra.mxu0 0.0
      %997 = vmatpush.msra.mxu0 0.0
      %998 = vmatpush.msra.mxu0 0.0
      %999 = vmatpush.msra.mxu0 0.0
      %1000 = vmatpush.msra.mxu0 %v967
      %1001 = vmatpush.msra.mxu0 %v966
      %1002 = vmatpush.msra.mxu0 %v965
      %1003 = vmatpush.msra.mxu0 %v964
      %1004 = vmatpush.msra.mxu0 %v963
      %1005 = vmatpush.msra.mxu0 %v962
      %1006 = vmatpush.msra.mxu0 %v961
      %1007 = vmatpush.msra.mxu0 %v960
      %1008 = vmatmul.f32.gmra.mxu0 %v969
      %v1009 = vpop.f32.mrf.mxu0
      %v1010 = vadd.f32 0.0, %v1009
      %1011 = vmatmul.f32.gmra.mxu0 %v972
      %v1012 = vpop.f32.mrf.mxu0
      %v1013 = vadd.f32 0.0, %v1012
      %1014 = vmatmul.f32.gmra.mxu0 %v975
      %v1015 = vpop.f32.mrf.mxu0
      %v1016 = vadd.f32 0.0, %v1015
      %1017 = vmatmul.f32.gmra.mxu0 %v978
      %v1018 = vpop.f32.mrf.mxu0
      %v1019 = vadd.f32 0.0, %v1018
      %1020 = vmatmul.f32.gmra.mxu0 %v981
      %v1021 = vpop.f32.mrf.mxu0
      %v1022 = vadd.f32 0.0, %v1021
      %1023 = vmatmul.f32.gmra.mxu0 %v984
      %v1024 = vpop.f32.mrf.mxu0
      %v1025 = vadd.f32 0.0, %v1024
      %1026 = vmatmul.f32.gmra.mxu0 %v987
      %v1027 = vpop.f32.mrf.mxu0
      %v1028 = vadd.f32 0.0, %v1027
      %1029 = vmatmul.f32.gmra.mxu0 %v990
      %v1030 = vpop.f32.mrf.mxu0
      %v1031 = vadd.f32 0.0, %v1030
      %1032 = vdwg.mxu0
      %v1033 = vadd.f32 %v943, %v1010
      %v1034 = vadd.f32 %v944, %v1013
      %v1035 = vadd.f32 %v945, %v1016
      %v1036 = vadd.f32 %v946, %v1019
      %v1037 = vadd.f32 %v947, %v1022
      %v1038 = vadd.f32 %v948, %v1025
      %v1039 = vadd.f32 %v949, %v1028
      %v1040 = vadd.f32 %v950, %v1031
      %v1041 = vld [vmem:[%s2] sm:$0x1]
      %v1043 = vperm.slane %v1041, 0
      %v1045 = vmul.f32 %v1033, %v1043
      %v1046 = vmul.f32 %v1034, %v1043
      %v1047 = vmul.f32 %v1035, %v1043
      %v1048 = vmul.f32 %v1036, %v1043
      %v1049 = vmul.f32 %v1037, %v1043
      %v1050 = vmul.f32 %v1038, %v1043
      %v1051 = vmul.f32 %v1039, %v1043
      %v1052 = vmul.f32 %v1040, %v1043
      %v1053 = vld [vmem:[%s3] sm:$0x1]
      %v1055 = vperm.slane %v1053, 0
      %v1057 = vadd.f32 %v1045, %v1055
      %v1058 = vadd.f32 %v1046, %v1055
      %v1059 = vadd.f32 %v1047, %v1055
      %v1060 = vadd.f32 %v1048, %v1055
      %v1061 = vadd.f32 %v1049, %v1055
      %v1062 = vadd.f32 %v1050, %v1055
      %v1063 = vadd.f32 %v1051, %v1055
      %v1064 = vadd.f32 %v1052, %v1055
      %v1065 = vld [vmem:[%s239] sm:$0xff]
      %v1066 = vld [vmem:[%s239 + $0x8] sm:$0xff]
      %v1067 = vld [vmem:[%s239 + $0x10] sm:$0xff]
      %v1068 = vld [vmem:[%s239 + $0x18] sm:$0xff]
      %v1069 = vld [vmem:[%s239 + $0x20] sm:$0xff]
      %v1070 = vld [vmem:[%s239 + $0x28] sm:$0xff]
      %v1071 = vld [vmem:[%s239 + $0x30] sm:$0xff]
      %v1072 = vld [vmem:[%s239 + $0x38] sm:$0xff]
      %v1073 = vadd.f32 %v1057, %v1065
      %v1074 = vadd.f32 %v1058, %v1066
      %v1075 = vadd.f32 %v1059, %v1067
      %v1076 = vadd.f32 %v1060, %v1068
      %v1077 = vadd.f32 %v1061, %v1069
      %v1078 = vadd.f32 %v1062, %v1070
      %v1079 = vadd.f32 %v1063, %v1071
      %v1080 = vadd.f32 %v1064, %v1072
      %v1081 = vmax.f32 %v1073, 0.0
      %v1082 = vmax.f32 %v1074, 0.0
      %v1083 = vmax.f32 %v1075, 0.0
      %v1084 = vmax.f32 %v1076, 0.0
      %v1085 = vmax.f32 %v1077, 0.0
      %v1086 = vmax.f32 %v1078, 0.0
      %v1087 = vmax.f32 %v1079, 0.0
      %v1088 = vmax.f32 %v1080, 0.0
      %1089 = vst.msk [vmem:[%s244] sm:$0xff] %vm278, %v1081
      %1090 = vst.msk [vmem:[%s244 + $0x8] sm:$0xff] %vm278, %v1082
      %1091 = vst.msk [vmem:[%s244 + $0x10] sm:$0xff] %vm278, %v1083
      %1092 = vst.msk [vmem:[%s244 + $0x18] sm:$0xff] %vm278, %v1084
      %1093 = vst.msk [vmem:[%s244 + $0x20] sm:$0xff] %vm278, %v1085
      %1094 = vst.msk [vmem:[%s244 + $0x28] sm:$0xff] %vm278, %v1086
      %1095 = vst.msk [vmem:[%s244 + $0x30] sm:$0xff] %vm278, %v1087
      %1096 = vst.msk [vmem:[%s244 + $0x38] sm:$0xff] %vm278, %v1088
      %p1097 = scmp.lt.s32.totalorder %s16, 1
      %s1098 = scalar_select %p1097, %s16, 1
      %s1099 = smul.addr %s1098, 8
      %s1100 = smul.addr %s1099, 8
      %s1101 = scalar_lea.vmem %s5, %s1100
      // Predicated region
      $region41: #{resnet_encoder_forward.7} parent=39 // pred_check
        %p1102 = pneg %p149
      $region42: #{resnet_encoder_forward.7} parent=39 // pred_check_branch
        %1104 = sbr.rel (%p1102) target = $region44
      $region43: #{resnet_encoder_forward.7} parent=39 // pred_region
        _
      $region44: #{resnet_encoder_forward.7} parent=39 // pred_fallthru
        _
    $region40: #{resnet_encoder_forward.7} parent=5 // pred_fallthru
      _
    %p1105 = scmp.le.s32.totalorder 2, %s11
    // Predicated region
    $region45: #{resnet_encoder_forward.7} parent=5 // pred_check
      %p1106 = pneg %p1105
    $region46: #{resnet_encoder_forward.7} parent=5 // pred_check_branch
      %1108 = sbr.rel (%p1106) target = $region48
    $region47: #{resnet_encoder_forward.7} parent=5 // pred_region
      %s1109 = ssub.s32 %s11, 2
      // Predicated region
      $region49: #{resnet_encoder_forward.7} parent=47 // pred_check
        %p1110 = pneg %p155
      $region50: #{resnet_encoder_forward.7} parent=47 // pred_check_branch
        %1112 = sbr.rel (%p1110) target = $region52
      $region51: #{resnet_encoder_forward.7} parent=47 // pred_region
        %p1113 = scmp.lt.s32.totalorder %s17, 1
        %s1114 = scalar_select %p1113, %s17, 1
        %s1115 = smul.addr %s1114, 8
        %s1116 = smul.addr %s1115, 8
        %s1117 = scalar_lea.vmem %s5, %s1116
      $region52: #{resnet_encoder_forward.7} parent=47 // pred_fallthru
        _
    $region48: #{resnet_encoder_forward.7} parent=5 // pred_fallthru
      _
  $region6: #{resnet_encoder_forward.7} parent=0 // loop_footer
    %s15 = sadd.s32 1, %s11
  $region7: #{resnet_encoder_forward.7} parent=0 // loop_footer_branch
    %10 = sbr.rel target = $region3
  $region8: #{resnet_encoder_forward.7} parent=0 // loop_exit
    _

// kernel: resnet_encoder_forward.9
$region0: #{resnet_encoder_forward.9}
  #allocation0 [shape = 'u32[]', space=smem, size = 0x4, offset = 0x4, fixed_abs, tag = 'smem constant byte address 0x4 - core index']
  #allocation1 [shape = 'u32[72,128]{1,0:T(1,128)}', space=vmem, size = 0x9000, scoped, tag = 'internal scratch']
  %s0 = inlined_call_operand.vmem [shape: f32[2,10,10,64], index: 0, kind: input, shape index: {}]
  %s1 = inlined_call_operand.vmem [shape: f32[9,64,64], index: 1, kind: input, shape index: {}]
  %s2 = inlined_call_operand.vmem [shape: f32[1,64], index: 2, kind: input, shape index: {}]
  %s3 = inlined_call_operand.vmem [shape: f32[1,64], index: 3, kind: input, shape index: {}]
  %s4 = inlined_call_operand.vmem [shape: f32[2,64,64], index: 4, kind: input, shape index: {}]
  %s5 = inlined_call_operand.hbm [shape: f32[2,64,64], index: 5, kind: output, shape index: {}]
  %s6 = sld [smem:[#allocation0]]
  $region53: #{resnet_encoder_forward.9} parent=0
    _
  %s8 = ssub.s32 1, %s6
  %s9 = scalar_select 0, %s8, %s6
  $region1: #{resnet_encoder_forward.9} parent=0
    #allocation2 [shape = 'u8[65536]{0}', space=vmem, size = 0x10000, scoped, tag = 'output window, operand 0']
    #allocation3 [shape = 's32[2]{0}', space=sflag, size = 0x8, scoped, tag = 'scoped memory for resnet_encoder_forward.9']
    %10 = vsyncpa [#allocation3], 0
    %s11 = scalar_lea.sflag [#allocation3], 1
    %12 = vsyncpa %s11, 0
    loop: start=0, step=1, limit=4
    $region2: #{resnet_encoder_forward.9} parent=1 // loop_pre_header
      _
    $region3: #{resnet_encoder_forward.9} parent=1 // loop_header
      %s14 = sphi 0, %s18
      %p15 = scmp.ge.s32.totalorder %s14, 4
      %s24 = sphi 0, %s26
      %s27 = sphi 0, %s24
      %s28 = sphi 0, %s27
      %s44 = sphi 0, %s28
      %s48 = sphi 0, %s48
      %s50 = sphi 0, %s48
      %s51 = sphi 0, %s50
      %s65 = sphi 0, %s51
      %s69 = sphi 0, %s69
      %s71 = sphi 0, %s69
      %s72 = sphi 0, %s71
      %s86 = sphi 0, %s72
      %s90 = sphi 0, %s90
      %s92 = sphi 0, %s90
      %s93 = sphi 0, %s92
      %s107 = sphi 0, %s93
      %s113 = sphi 0, %s115
      %s116 = sphi 0, %s113
      %s117 = sphi 0, %s116
      %s133 = sphi 0, %s117
      %s139 = sphi 0, %s141
      %s142 = sphi 0, %s139
      %s143 = sphi 0, %s142
      %s159 = sphi 0, %s143
    $region4: #{resnet_encoder_forward.9} parent=1 // loop_header_branch
      %17 = sbr.rel (%p15) target = $region8
    $region5: #{resnet_encoder_forward.9} parent=1 // loop_body
      %s19 = ssub.s32 %s14, 1
      %s20 = ssub.s32 %s14, 2
      %s21 = sadd.s32 %s14, 1
      %s22 = ssub.s32 %s14, %s21
      %p23 = scmp.eq.s32.totalorder %s22, 0
      %s25 = sadd.s32 %s24, 1
      %s26 = scalar_select %p23, %s24, %s25
      %p29 = pneg %p23
      %p30 = scmp.eq.s32.totalorder %s14, 1
      %p31 = por %p29, %p30
      %p32 = scmp.ne.s32.totalorder %s24, %s27
      %p33 = scmp.eq.s32.totalorder %s14, 0
      %p34 = por %p32, %p33
      %p35 = scmp.ne.s32.totalorder %s24, %s27
      %p36 = scmp.eq.s32.totalorder %s19, 1
      %p37 = por %p35, %p36
      %p38 = scmp.ne.s32.totalorder %s27, %s28
      %p39 = scmp.eq.s32.totalorder %s19, 0
      %p40 = por %p38, %p39
      %p41 = scmp.ne.s32.totalorder %s27, %s28
      %p42 = scmp.eq.s32.totalorder %s20, 1
      %p43 = por %p41, %p42
      %p45 = scmp.ne.s32.totalorder %s28, %s44
      %p46 = scmp.eq.s32.totalorder %s20, 0
      %p47 = por %p45, %p46
      %s49 = sadd.s32 %s48, 1
      %p52 = scmp.eq.s32.totalorder %s14, 1
      %p53 = scmp.ne.s32.totalorder %s48, %s50
      %p54 = scmp.eq.s32.totalorder %s14, 0
      %p55 = por %p53, %p54
      %p56 = scmp.ne.s32.totalorder %s48, %s50
      %p57 = scmp.eq.s32.totalorder %s19, 1
      %p58 = por %p56, %p57
      %p59 = scmp.ne.s32.totalorder %s50, %s51
      %p60 = scmp.eq.s32.totalorder %s19, 0
      %p61 = por %p59, %p60
      %p62 = scmp.ne.s32.totalorder %s50, %s51
      %p63 = scmp.eq.s32.totalorder %s20, 1
      %p64 = por %p62, %p63
      %p66 = scmp.ne.s32.totalorder %s51, %s65
      %p67 = scmp.eq.s32.totalorder %s20, 0
      %p68 = por %p66, %p67
      %s70 = sadd.s32 %s69, 1
      %p73 = scmp.eq.s32.totalorder %s14, 1
      %p74 = scmp.ne.s32.totalorder %s69, %s71
      %p75 = scmp.eq.s32.totalorder %s14, 0
      %p76 = por %p74, %p75
      %p77 = scmp.ne.s32.totalorder %s69, %s71
      %p78 = scmp.eq.s32.totalorder %s19, 1
      %p79 = por %p77, %p78
      %p80 = scmp.ne.s32.totalorder %s71, %s72
      %p81 = scmp.eq.s32.totalorder %s19, 0
      %p82 = por %p80, %p81
      %p83 = scmp.ne.s32.totalorder %s71, %s72
      %p84 = scmp.eq.s32.totalorder %s20, 1
      %p85 = por %p83, %p84
      %p87 = scmp.ne.s32.totalorder %s72, %s86
      %p88 = scmp.eq.s32.totalorder %s20, 0
      %p89 = por %p87, %p88
      %s91 = sadd.s32 %s90, 1
      %p94 = scmp.eq.s32.totalorder %s14, 1
      %p95 = scmp.ne.s32.totalorder %s90, %s92
      %p96 = scmp.eq.s32.totalorder %s14, 0
      %p97 = por %p95, %p96
      %p98 = scmp.ne.s32.totalorder %s90, %s92
      %p99 = scmp.eq.s32.totalorder %s19, 1
      %p100 = por %p98, %p99
      %p101 = scmp.ne.s32.totalorder %s92, %s93
      %p102 = scmp.eq.s32.totalorder %s19, 0
      %p103 = por %p101, %p102
      %p104 = scmp.ne.s32.totalorder %s92, %s93
      %p105 = scmp.eq.s32.totalorder %s20, 1
      %p106 = por %p104, %p105
      %p108 = scmp.ne.s32.totalorder %s93, %s107
      %p109 = scmp.eq.s32.totalorder %s20, 0
      %p110 = por %p108, %p109
      %s111 = ssub.s32 %s14, %s21
      %p112 = scmp.eq.s32.totalorder %s111, 0
      %s114 = sadd.s32 %s113, 1
      %s115 = scalar_select %p112, %s113, %s114
      %p118 = pneg %p112
      %p119 = scmp.eq.s32.totalorder %s14, 1
      %p120 = por %p118, %p119
      %p121 = scmp.ne.s32.totalorder %s113, %s116
      %p122 = scmp.eq.s32.totalorder %s14, 0
      %p123 = por %p121, %p122
      %p124 = scmp.ne.s32.totalorder %s113, %s116
      %p125 = scmp.eq.s32.totalorder %s19, 1
      %p126 = por %p124, %p125
      %p127 = scmp.ne.s32.totalorder %s116, %s117
      %p128 = scmp.eq.s32.totalorder %s19, 0
      %p129 = por %p127, %p128
      %p130 = scmp.ne.s32.totalorder %s116, %s117
      %p131 = scmp.eq.s32.totalorder %s20, 1
      %p132 = por %p130, %p131
      %p134 = scmp.ne.s32.totalorder %s117, %s133
      %p135 = scmp.eq.s32.totalorder %s20, 0
      %p136 = por %p134, %p135
      %s137 = ssub.s32 %s14, %s21
      %p138 = scmp.eq.s32.totalorder %s137, 0
      %s140 = sadd.s32 %s139, 1
      %s141 = scalar_select %p138, %s139, %s140
      %p144 = pneg %p138
      %p145 = scmp.eq.s32.totalorder %s14, 1
      %p146 = por %p144, %p145
      %p147 = scmp.ne.s32.totalorder %s139, %s142
      %p148 = scmp.eq.s32.totalorder %s14, 0
      %p149 = por %p147, %p148
      %p150 = scmp.ne.s32.totalorder %s139, %s142
      %p151 = scmp.eq.s32.totalorder %s19, 1
      %p152 = por %p150, %p151
      %p153 = scmp.ne.s32.totalorder %s142, %s143
      %p154 = scmp.eq.s32.totalorder %s19, 0
      %p155 = por %p153, %p154
      %p156 = scmp.ne.s32.totalorder %s142, %s143
      %p157 = scmp.eq.s32.totalorder %s20, 1
      %p158 = por %p156, %p157
      %p160 = scmp.ne.s32.totalorder %s143, %s159
      %p161 = scmp.eq.s32.totalorder %s20, 0
      %p162 = por %p160, %p161
      %p163 = scmp.le.s32.totalorder 1, %s14
      %p164 = scmp.lt.s32.totalorder %s14, 3
      %p165 = pnand %p163, %p164
      %p166 = pneg %p165
      // Predicated region
      $region9: #{resnet_encoder_forward.9} parent=5 // pred_check
        _
      $region10: #{resnet_encoder_forward.9} parent=5 // pred_check_branch
        %168 = sbr.rel (%p165) target = $region12
      $region11: #{resnet_encoder_forward.9} parent=5 // pred_region
        %s169 = ssub.s32 %s14, 1
        // Predicated region
        $region13: #{resnet_encoder_forward.9} parent=11 // pred_check
          %p170 = pneg %p61
        $region14: #{resnet_encoder_forward.9} parent=11 // pred_check_branch
          %172 = sbr.rel (%p170) target = $region16
        $region15: #{resnet_encoder_forward.9} parent=11 // pred_region
          _
        $region16: #{resnet_encoder_forward.9} parent=11 // pred_fallthru
          _
        // Predicated region
        $region17: #{resnet_encoder_forward.9} parent=11 // pred_check
          %p173 = pneg %p82
        $region18: #{resnet_encoder_forward.9} parent=11 // pred_check_branch
          %175 = sbr.rel (%p173) target = $region20
        $region19: #{resnet_encoder_forward.9} parent=11 // pred_region
          _
        $region20: #{resnet_encoder_forward.9} parent=11 // pred_fallthru
          _
        // Predicated region
        $region21: #{resnet_encoder_forward.9} parent=11 // pred_check
          %p176 = pneg %p103
        $region22: #{resnet_encoder_forward.9} parent=11 // pred_check_branch
          %178 = sbr.rel (%p176) target = $region24
        $region23: #{resnet_encoder_forward.9} parent=11 // pred_region
          _
        $region24: #{resnet_encoder_forward.9} parent=11 // pred_fallthru
          _
      $region12: #{resnet_encoder_forward.9} parent=5 // pred_fallthru
        _
      %p179 = scmp.lt.s32.totalorder %s14, 2
      // Predicated region
      $region25: #{resnet_encoder_forward.9} parent=5 // pred_check
        %p180 = pneg %p179
      $region26: #{resnet_encoder_forward.9} parent=5 // pred_check_branch
        %182 = sbr.rel (%p180) target = $region28
      $region27: #{resnet_encoder_forward.9} parent=5 // pred_region
        // Predicated region
        $region29: #{resnet_encoder_forward.9} parent=27 // pred_check
          %p183 = pneg %p34
        $region30: #{resnet_encoder_forward.9} parent=27 // pred_check_branch
          %185 = sbr.rel (%p183) target = $region32
        $region31: #{resnet_encoder_forward.9} parent=27 // pred_region
          %p186 = scmp.lt.s32.totalorder %s14, 1
          %s187 = scalar_select %p186, %s14, 1
          %s188 = smul.addr %s187, 20
          %s189 = smul.addr %s188, 8
          %s190 = scalar_lea.vmem %s0, %s189
        $region32: #{resnet_encoder_forward.9} parent=27 // pred_fallthru
          _
        // Predicated region
        $region33: #{resnet_encoder_forward.9} parent=27 // pred_check
          %p191 = pneg %p123
        $region34: #{resnet_encoder_forward.9} parent=27 // pred_check_branch
          %193 = sbr.rel (%p191) target = $region36
        $region35: #{resnet_encoder_forward.9} parent=27 // pred_region
          %p194 = scmp.lt.s32.totalorder %s14, 1
          %s195 = scalar_select %p194, %s14, 1
          %s196 = smul.addr %s195, 8
          %s197 = smul.addr %s196, 8
          %s198 = scalar_lea.vmem %s4, %s197
        $region36: #{resnet_encoder_forward.9} parent=27 // pred_fallthru
          _
      $region28: #{resnet_encoder_forward.9} parent=5 // pred_fallthru
        _
      %p199 = scmp.le.s32.totalorder 1, %s14
      %p200 = scmp.lt.s32.totalorder %s14, 3
      %p201 = pnand %p199, %p200
      %p202 = pneg %p201
      // Predicated region
      $region37: #{resnet_encoder_forward.9} parent=5 // pred_check
        _
      $region38: #{resnet_encoder_forward.9} parent=5 // pred_check_branch
        %204 = sbr.rel (%p201) target = $region40
      $region39: #{resnet_encoder_forward.9} parent=5 // pred_region
        %s205 = ssub.s32 %s14, 1
        %p206 = scmp.lt.s32.totalorder %s19, 1
        %s207 = scalar_select %p206, %s19, 1
        %s208 = smul.addr %s207, 20
        %s209 = smul.addr %s208, 8
        %s210 = scalar_lea.vmem %s0, %s209
        %p211 = pneg %p40
        %p212 = pneg %p37
        %p213 = pneg %p61
        %p214 = pneg %p58
        %p215 = pneg %p82
        %p216 = pneg %p79
        %p217 = pneg %p103
        %p218 = pneg %p100
        %p219 = scmp.lt.s32.totalorder %s19, 1
        %s220 = scalar_select %p219, %s19, 1
        %s221 = smul.addr %s220, 8
        %s222 = smul.addr %s221, 8
        %s223 = scalar_lea.vmem %s4, %s222
        %p224 = pneg %p129
        %p225 = pneg %p126
        %p226 = pneg %p155
        %p227 = pneg %p152
        %s228 = sand.u32 %s142, 1
        %s229 = scalar_lea.sflag [#allocation3], %s228
        %s230 = sand.u32 %s142, 1
        %s231 = smul.addr %s230, 64
        %s232 = scalar_lea.vmem [#allocation2], %s231
        %p233 = scmp.lt.s32.totalorder %s19, 1
        %s234 = scalar_select %p233, %s19, 1
        %s235 = smul.addr %s234, 20
        %s236 = smul.addr %s235, 8
        %s237 = scalar_lea.vmem %s0, %s236
        %p238 = scmp.lt.s32.totalorder %s19, 1
        %s239 = scalar_select %p238, %s19, 1
        %s240 = smul.addr %s239, 8
        %s241 = smul.addr %s240, 8
        %s242 = scalar_lea.vmem %s4, %s241
        %v243 = vld [vmem:[%s237] sm:$0xff]
        %v244 = vld [vmem:[%s237 + $0x10] sm:$0xff]
        %v245 = vld [vmem:[%s237 + $0x20] sm:$0xff]
        %v246 = vld [vmem:[%s237 + $0x30] sm:$0xff]
        %v247 = vld [vmem:[%s237 + $0x40] sm:$0xff]
        %v248 = vld [vmem:[%s237 + $0x50] sm:$0xff]
        %v249 = vld [vmem:[%s237 + $0x60] sm:$0xff]
        %v250 = vld [vmem:[%s237 + $0x70] sm:$0xff]
        %v251 = vld [vmem:[%s1] sm:$0xff]
        %v252 = vld [vmem:[%s1 + $0x8] sm:$0xff]
        %v253 = vld [vmem:[%s1 + $0x10] sm:$0xff]
        %v254 = vld [vmem:[%s1 + $0x18] sm:$0xff]
        %v255 = vld [vmem:[%s1 + $0x20] sm:$0xff]
        %v256 = vld [vmem:[%s1 + $0x28] sm:$0xff]
        %v257 = vld [vmem:[%s1 + $0x30] sm:$0xff]
        %v258 = vld [vmem:[%s1 + $0x38] sm:$0xff]
        %v259 = vld [vmem:[%s237 + $0x1] sm:$0xff]
        %v260 = vld [vmem:[%s237 + $0x11] sm:$0xff]
        %v261 = vld [vmem:[%s237 + $0x21] sm:$0xff]
        %v262 = vld [vmem:[%s237 + $0x31] sm:$0xff]
        %v263 = vld [vmem:[%s237 + $0x41] sm:$0xff]
        %v264 = vld [vmem:[%s237 + $0x51] sm:$0xff]
        %v265 = vld [vmem:[%s237 + $0x61] sm:$0xff]
        %v266 = vld [vmem:[%s237 + $0x71] sm:$0xff]
        %s267 = scalar_lea.vmem %s1, 64
        %v268 = vld [vmem:[%s267] sm:$0xff]
        %v269 = vld [vmem:[%s267 + $0x8] sm:$0xff]
        %v270 = vld [vmem:[%s267 + $0x10] sm:$0xff]
        %v271 = vld [vmem:[%s267 + $0x18] sm:$0xff]
        %v272 = vld [vmem:[%s267 + $0x20] sm:$0xff]
        %v273 = vld [vmem:[%s267 + $0x28] sm:$0xff]
        %v274 = vld [vmem:[%s267 + $0x30] sm:$0xff]
        %v275 = vld [vmem:[%s267 + $0x38] sm:$0xff]
        %vm276 = vcmask 523264
        %v278 = vsel %vm276, %v259, 0
        %v281 = vsel %vm276, %v260, 0
        %v284 = vsel %vm276, %v261, 0
        %v287 = vsel %vm276, %v262, 0
        %v290 = vsel %vm276, %v263, 0
        %v293 = vsel %vm276, %v264, 0
        %v296 = vsel %vm276, %v265, 0
        %v299 = vsel %vm276, %v266, 0
        %301 = vmatpush.msra.mxu0 0.0
        %302 = vmatpush.msra.mxu0 0.0
        %303 = vmatpush.msra.mxu0 0.0
        %304 = vmatpush.msra.mxu0 0.0
        %305 = vmatpush.msra.mxu0 0.0
        %306 = vmatpush.msra.mxu0 0.0
        %307 = vmatpush.msra.mxu0 0.0
        %308 = vmatpush.msra.mxu0 0.0
        %309 = vmatpush.msra.mxu0 %v275
        %310 = vmatpush.msra.mxu0 %v274
        %311 = vmatpush.msra.mxu0 %v273
        %312 = vmatpush.msra.mxu0 %v272
        %313 = vmatpush.msra.mxu0 %v271
        %314 = vmatpush.msra.mxu0 %v270
        %315 = vmatpush.msra.mxu0 %v269
        %316 = vmatpush.msra.mxu0 %v268
        %317 = vmatmul.f32.gmra.mxu0 %v278
        %v318 = vpop.f32.mrf.mxu0
        %v319 = vadd.f32 0.0, %v318
        %320 = vmatmul.f32.gmra.mxu0 %v281
        %v321 = vpop.f32.mrf.mxu0
        %v322 = vadd.f32 0.0, %v321
        %323 = vmatmul.f32.gmra.mxu0 %v284
        %v324 = vpop.f32.mrf.mxu0
        %v325 = vadd.f32 0.0, %v324
        %326 = vmatmul.f32.gmra.mxu0 %v287
        %v327 = vpop.f32.mrf.mxu0
        %v328 = vadd.f32 0.0, %v327
        %329 = vmatmul.f32.gmra.mxu0 %v290
        %v330 = vpop.f32.mrf.mxu0
        %v331 = vadd.f32 0.0, %v330
        %332 = vmatmul.f32.gmra.mxu0 %v293
        %v333 = vpop.f32.mrf.mxu0
        %v334 = vadd.f32 0.0, %v333
        %335 = vmatmul.f32.gmra.mxu0 %v296
        %v336 = vpop.f32.mrf.mxu0
        %v337 = vadd.f32 0.0, %v336
        %338 = vmatmul.f32.gmra.mxu0 %v299
        %v339 = vpop.f32.mrf.mxu0
        %v340 = vadd.f32 0.0, %v339
        %341 = vdwg.mxu0
        %v343 = vsel %vm276, %v243, 0
        %v346 = vsel %vm276, %v244, 0
        %v349 = vsel %vm276, %v245, 0
        %v352 = vsel %vm276, %v246, 0
        %v355 = vsel %vm276, %v247, 0
        %v358 = vsel %vm276, %v248, 0
        %v361 = vsel %vm276, %v249, 0
        %v364 = vsel %vm276, %v250, 0
        %366 = vmatpush.msra.mxu0 0.0
        %367 = vmatpush.msra.mxu0 0.0
        %368 = vmatpush.msra.mxu0 0.0
        %369 = vmatpush.msra.mxu0 0.0
        %370 = vmatpush.msra.mxu0 0.0
        %371 = vmatpush.msra.mxu0 0.0
        %372 = vmatpush.msra.mxu0 0.0
        %373 = vmatpush.msra.mxu0 0.0
        %374 = vmatpush.msra.mxu0 %v258
        %375 = vmatpush.msra.mxu0 %v257
        %376 = vmatpush.msra.mxu0 %v256
        %377 = vmatpush.msra.mxu0 %v255
        %378 = vmatpush.msra.mxu0 %v254
        %379 = vmatpush.msra.mxu0 %v253
        %380 = vmatpush.msra.mxu0 %v252
        %381 = vmatpush.msra.mxu0 %v251
        %382 = vmatmul.f32.gmra.mxu0 %v343
        %v383 = vpop.f32.mrf.mxu0
        %v384 = vadd.f32 %v319, %v383
        %385 = vmatmul.f32.gmra.mxu0 %v346
        %v386 = vpop.f32.mrf.mxu0
        %v387 = vadd.f32 %v322, %v386
        %388 = vmatmul.f32.gmra.mxu0 %v349
        %v389 = vpop.f32.mrf.mxu0
        %v390 = vadd.f32 %v325, %v389
        %391 = vmatmul.f32.gmra.mxu0 %v352
        %v392 = vpop.f32.mrf.mxu0
        %v393 = vadd.f32 %v328, %v392
        %394 = vmatmul.f32.gmra.mxu0 %v355
        %v395 = vpop.f32.mrf.mxu0
        %v396 = vadd.f32 %v331, %v395
        %397 = vmatmul.f32.gmra.mxu0 %v358
        %v398 = vpop.f32.mrf.mxu0
        %v399 = vadd.f32 %v334, %v398
        %400 = vmatmul.f32.gmra.mxu0 %v361
        %v401 = vpop.f32.mrf.mxu0
        %v402 = vadd.f32 %v337, %v401
        %403 = vmatmul.f32.gmra.mxu0 %v364
        %v404 = vpop.f32.mrf.mxu0
        %v405 = vadd.f32 %v340, %v404
        %406 = vdwg.mxu0
        %v407 = vld [vmem:[%s237 + $0x2] sm:$0xff]
        %v408 = vld [vmem:[%s237 + $0x12] sm:$0xff]
        %v409 = vld [vmem:[%s237 + $0x22] sm:$0xff]
        %v410 = vld [vmem:[%s237 + $0x32] sm:$0xff]
        %v411 = vld [vmem:[%s237 + $0x42] sm:$0xff]
        %v412 = vld [vmem:[%s237 + $0x52] sm:$0xff]
        %v413 = vld [vmem:[%s237 + $0x62] sm:$0xff]
        %v414 = vld [vmem:[%s237 + $0x72] sm:$0xff]
        %s415 = scalar_lea.vmem %s1, 128
        %v416 = vld [vmem:[%s415] sm:$0xff]
        %v417 = vld [vmem:[%s415 + $0x8] sm:$0xff]
        %v418 = vld [vmem:[%s415 + $0x10] sm:$0xff]
        %v419 = vld [vmem:[%s415 + $0x18] sm:$0xff]
        %v420 = vld [vmem:[%s415 + $0x20] sm:$0xff]
        %v421 = vld [vmem:[%s415 + $0x28] sm:$0xff]
        %v422 = vld [vmem:[%s415 + $0x30] sm:$0xff]
        %v423 = vld [vmem:[%s415 + $0x38] sm:$0xff]
        %v425 = vsel %vm276, %v407, 0
        %v428 = vsel %vm276, %v408, 0
        %v431 = vsel %vm276, %v409, 0
        %v434 = vsel %vm276, %v410, 0
        %v437 = vsel %vm276, %v411, 0
        %v440 = vsel %vm276, %v412, 0
        %v443 = vsel %vm276, %v413, 0
        %v446 = vsel %vm276, %v414, 0
        %448 = vmatpush.msra.mxu0 0.0
        %449 = vmatpush.msra.mxu0 0.0
        %450 = vmatpush.msra.mxu0 0.0
        %451 = vmatpush.msra.mxu0 0.0
        %452 = vmatpush.msra.mxu0 0.0
        %453 = vmatpush.msra.mxu0 0.0
        %454 = vmatpush.msra.mxu0 0.0
        %455 = vmatpush.msra.mxu0 0.0
        %456 = vmatpush.msra.mxu0 %v423
        %457 = vmatpush.msra.mxu0 %v422
        %458 = vmatpush.msra.mxu0 %v421
        %459 = vmatpush.msra.mxu0 %v420
        %460 = vmatpush.msra.mxu0 %v419
        %461 = vmatpush.msra.mxu0 %v418
        %462 = vmatpush.msra.mxu0 %v417
        %463 = vmatpush.msra.mxu0 %v416
        %464 = vmatmul.f32.gmra.mxu0 %v425
        %v465 = vpop.f32.mrf.mxu0
        %v466 = vadd.f32 0.0, %v465
        %467 = vmatmul.f32.gmra.mxu0 %v428
        %v468 = vpop.f32.mrf.mxu0
        %v469 = vadd.f32 0.0, %v468
        %470 = vmatmul.f32.gmra.mxu0 %v431
        %v471 = vpop.f32.mrf.mxu0
        %v472 = vadd.f32 0.0, %v471
        %473 = vmatmul.f32.gmra.mxu0 %v434
        %v474 = vpop.f32.mrf.mxu0
        %v475 = vadd.f32 0.0, %v474
        %476 = vmatmul.f32.gmra.mxu0 %v437
        %v477 = vpop.f32.mrf.mxu0
        %v478 = vadd.f32 0.0, %v477
        %479 = vmatmul.f32.gmra.mxu0 %v440
        %v480 = vpop.f32.mrf.mxu0
        %v481 = vadd.f32 0.0, %v480
        %482 = vmatmul.f32.gmra.mxu0 %v443
        %v483 = vpop.f32.mrf.mxu0
        %v484 = vadd.f32 0.0, %v483
        %485 = vmatmul.f32.gmra.mxu0 %v446
        %v486 = vpop.f32.mrf.mxu0
        %v487 = vadd.f32 0.0, %v486
        %488 = vdwg.mxu0
        %v489 = vadd.f32 %v384, %v466
        %v490 = vadd.f32 %v387, %v469
        %v491 = vadd.f32 %v390, %v472
        %v492 = vadd.f32 %v393, %v475
        %v493 = vadd.f32 %v396, %v478
        %v494 = vadd.f32 %v399, %v481
        %v495 = vadd.f32 %v402, %v484
        %v496 = vadd.f32 %v405, %v487
        %s497 = scalar_lea.vmem %s237, 16
        %v498 = vld [vmem:[%s497] sm:$0xff]
        %v499 = vld [vmem:[%s497 + $0x10] sm:$0xff]
        %v500 = vld [vmem:[%s497 + $0x20] sm:$0xff]
        %v501 = vld [vmem:[%s497 + $0x30] sm:$0xff]
        %v502 = vld [vmem:[%s497 + $0x40] sm:$0xff]
        %v503 = vld [vmem:[%s497 + $0x50] sm:$0xff]
        %v504 = vld [vmem:[%s497 + $0x60] sm:$0xff]
        %v505 = vld [vmem:[%s497 + $0x70] sm:$0xff]
        %s506 = scalar_lea.vmem %s1, 192
        %v507 = vld [vmem:[%s506] sm:$0xff]
        %v508 = vld [vmem:[%s506 + $0x8] sm:$0xff]
        %v509 = vld [vmem:[%s506 + $0x10] sm:$0xff]
        %v510 = vld [vmem:[%s506 + $0x18] sm:$0xff]
        %v511 = vld [vmem:[%s506 + $0x20] sm:$0xff]
        %v512 = vld [vmem:[%s506 + $0x28] sm:$0xff]
        %v513 = vld [vmem:[%s506 + $0x30] sm:$0xff]
        %v514 = vld [vmem:[%s506 + $0x38] sm:$0xff]
        %v516 = vsel %vm276, %v498, 0
        %v519 = vsel %vm276, %v499, 0
        %v522 = vsel %vm276, %v500, 0
        %v525 = vsel %vm276, %v501, 0
        %v528 = vsel %vm276, %v502, 0
        %v531 = vsel %vm276, %v503, 0
        %v534 = vsel %vm276, %v504, 0
        %v537 = vsel %vm276, %v505, 0
        %539 = vmatpush.msra.mxu0 0.0
        %540 = vmatpush.msra.mxu0 0.0
        %541 = vmatpush.msra.mxu0 0.0
        %542 = vmatpush.msra.mxu0 0.0
        %543 = vmatpush.msra.mxu0 0.0
        %544 = vmatpush.msra.mxu0 0.0
        %545 = vmatpush.msra.mxu0 0.0
        %546 = vmatpush.msra.mxu0 0.0
        %547 = vmatpush.msra.mxu0 %v514
        %548 = vmatpush.msra.mxu0 %v513
        %549 = vmatpush.msra.mxu0 %v512
        %550 = vmatpush.msra.mxu0 %v511
        %551 = vmatpush.msra.mxu0 %v510
        %552 = vmatpush.msra.mxu0 %v509
        %553 = vmatpush.msra.mxu0 %v508
        %554 = vmatpush.msra.mxu0 %v507
        %555 = vmatmul.f32.gmra.mxu0 %v516
        %v556 = vpop.f32.mrf.mxu0
        %v557 = vadd.f32 0.0, %v556
        %558 = vmatmul.f32.gmra.mxu0 %v519
        %v559 = vpop.f32.mrf.mxu0
        %v560 = vadd.f32 0.0, %v559
        %561 = vmatmul.f32.gmra.mxu0 %v522
        %v562 = vpop.f32.mrf.mxu0
        %v563 = vadd.f32 0.0, %v562
        %564 = vmatmul.f32.gmra.mxu0 %v525
        %v565 = vpop.f32.mrf.mxu0
        %v566 = vadd.f32 0.0, %v565
        %567 = vmatmul.f32.gmra.mxu0 %v528
        %v568 = vpop.f32.mrf.mxu0
        %v569 = vadd.f32 0.0, %v568
        %570 = vmatmul.f32.gmra.mxu0 %v531
        %v571 = vpop.f32.mrf.mxu0
        %v572 = vadd.f32 0.0, %v571
        %573 = vmatmul.f32.gmra.mxu0 %v534
        %v574 = vpop.f32.mrf.mxu0
        %v575 = vadd.f32 0.0, %v574
        %576 = vmatmul.f32.gmra.mxu0 %v537
        %v577 = vpop.f32.mrf.mxu0
        %v578 = vadd.f32 0.0, %v577
        %579 = vdwg.mxu0
        %v580 = vadd.f32 %v489, %v557
        %v581 = vadd.f32 %v490, %v560
        %v582 = vadd.f32 %v491, %v563
        %v583 = vadd.f32 %v492, %v566
        %v584 = vadd.f32 %v493, %v569
        %v585 = vadd.f32 %v494, %v572
        %v586 = vadd.f32 %v495, %v575
        %v587 = vadd.f32 %v496, %v578
        %v588 = vld [vmem:[%s497 + $0x1] sm:$0xff]
        %v589 = vld [vmem:[%s497 + $0x11] sm:$0xff]
        %v590 = vld [vmem:[%s497 + $0x21] sm:$0xff]
        %v591 = vld [vmem:[%s497 + $0x31] sm:$0xff]
        %v592 = vld [vmem:[%s497 + $0x41] sm:$0xff]
        %v593 = vld [vmem:[%s497 + $0x51] sm:$0xff]
        %v594 = vld [vmem:[%s497 + $0x61] sm:$0xff]
        %v595 = vld [vmem:[%s497 + $0x71] sm:$0xff]
        %s596 = scalar_lea.vmem %s1, 256
        %v597 = vld [vmem:[%s596] sm:$0xff]
        %v598 = vld [vmem:[%s596 + $0x8] sm:$0xff]
        %v599 = vld [vmem:[%s596 + $0x10] sm:$0xff]
        %v600 = vld [vmem:[%s596 + $0x18] sm:$0xff]
        %v601 = vld [vmem:[%s596 + $0x20] sm:$0xff]
        %v602 = vld [vmem:[%s596 + $0x28] sm:$0xff]
        %v603 = vld [vmem:[%s596 + $0x30] sm:$0xff]
        %v604 = vld [vmem:[%s596 + $0x38] sm:$0xff]
        %v606 = vsel %vm276, %v588, 0
        %v609 = vsel %vm276, %v589, 0
        %v612 = vsel %vm276, %v590, 0
        %v615 = vsel %vm276, %v591, 0
        %v618 = vsel %vm276, %v592, 0
        %v621 = vsel %vm276, %v593, 0
        %v624 = vsel %vm276, %v594, 0
        %v627 = vsel %vm276, %v595, 0
        %629 = vmatpush.msra.mxu0 0.0
        %630 = vmatpush.msra.mxu0 0.0
        %631 = vmatpush.msra.mxu0 0.0
        %632 = vmatpush.msra.mxu0 0.0
        %633 = vmatpush.msra.mxu0 0.0
        %634 = vmatpush.msra.mxu0 0.0
        %635 = vmatpush.msra.mxu0 0.0
        %636 = vmatpush.msra.mxu0 0.0
        %637 = vmatpush.msra.mxu0 %v604
        %638 = vmatpush.msra.mxu0 %v603
        %639 = vmatpush.msra.mxu0 %v602
        %640 = vmatpush.msra.mxu0 %v601
        %641 = vmatpush.msra.mxu0 %v600
        %642 = vmatpush.msra.mxu0 %v599
        %643 = vmatpush.msra.mxu0 %v598
        %644 = vmatpush.msra.mxu0 %v597
        %645 = vmatmul.f32.gmra.mxu0 %v606
        %v646 = vpop.f32.mrf.mxu0
        %v647 = vadd.f32 0.0, %v646
        %648 = vmatmul.f32.gmra.mxu0 %v609
        %v649 = vpop.f32.mrf.mxu0
        %v650 = vadd.f32 0.0, %v649
        %651 = vmatmul.f32.gmra.mxu0 %v612
        %v652 = vpop.f32.mrf.mxu0
        %v653 = vadd.f32 0.0, %v652
        %654 = vmatmul.f32.gmra.mxu0 %v615
        %v655 = vpop.f32.mrf.mxu0
        %v656 = vadd.f32 0.0, %v655
        %657 = vmatmul.f32.gmra.mxu0 %v618
        %v658 = vpop.f32.mrf.mxu0
        %v659 = vadd.f32 0.0, %v658
        %660 = vmatmul.f32.gmra.mxu0 %v621
        %v661 = vpop.f32.mrf.mxu0
        %v662 = vadd.f32 0.0, %v661
        %663 = vmatmul.f32.gmra.mxu0 %v624
        %v664 = vpop.f32.mrf.mxu0
        %v665 = vadd.f32 0.0, %v664
        %666 = vmatmul.f32.gmra.mxu0 %v627
        %v667 = vpop.f32.mrf.mxu0
        %v668 = vadd.f32 0.0, %v667
        %669 = vdwg.mxu0
        %v670 = vadd.f32 %v580, %v647
        %v671 = vadd.f32 %v581, %v650
        %v672 = vadd.f32 %v582, %v653
        %v673 = vadd.f32 %v583, %v656
        %v674 = vadd.f32 %v584, %v659
        %v675 = vadd.f32 %v585, %v662
        %v676 = vadd.f32 %v586, %v665
        %v677 = vadd.f32 %v587, %v668
        %v678 = vld [vmem:[%s497 + $0x2] sm:$0xff]
        %v679 = vld [vmem:[%s497 + $0x12] sm:$0xff]
        %v680 = vld [vmem:[%s497 + $0x22] sm:$0xff]
        %v681 = vld [vmem:[%s497 + $0x32] sm:$0xff]
        %v682 = vld [vmem:[%s497 + $0x42] sm:$0xff]
        %v683 = vld [vmem:[%s497 + $0x52] sm:$0xff]
        %v684 = vld [vmem:[%s497 + $0x62] sm:$0xff]
        %v685 = vld [vmem:[%s497 + $0x72] sm:$0xff]
        %s686 = scalar_lea.vmem %s1, 320
        %v687 = vld [vmem:[%s686] sm:$0xff]
        %v688 = vld [vmem:[%s686 + $0x8] sm:$0xff]
        %v689 = vld [vmem:[%s686 + $0x10] sm:$0xff]
        %v690 = vld [vmem:[%s686 + $0x18] sm:$0xff]
        %v691 = vld [vmem:[%s686 + $0x20] sm:$0xff]
        %v692 = vld [vmem:[%s686 + $0x28] sm:$0xff]
        %v693 = vld [vmem:[%s686 + $0x30] sm:$0xff]
        %v694 = vld [vmem:[%s686 + $0x38] sm:$0xff]
        %v696 = vsel %vm276, %v678, 0
        %v699 = vsel %vm276, %v679, 0
        %v702 = vsel %vm276, %v680, 0
        %v705 = vsel %vm276, %v681, 0
        %v708 = vsel %vm276, %v682, 0
        %v711 = vsel %vm276, %v683, 0
        %v714 = vsel %vm276, %v684, 0
        %v717 = vsel %vm276, %v685, 0
        %719 = vmatpush.msra.mxu0 0.0
        %720 = vmatpush.msra.mxu0 0.0
        %721 = vmatpush.msra.mxu0 0.0
        %722 = vmatpush.msra.mxu0 0.0
        %723 = vmatpush.msra.mxu0 0.0
        %724 = vmatpush.msra.mxu0 0.0
        %725 = vmatpush.msra.mxu0 0.0
        %726 = vmatpush.msra.mxu0 0.0
        %727 = vmatpush.msra.mxu0 %v694
        %728 = vmatpush.msra.mxu0 %v693
        %729 = vmatpush.msra.mxu0 %v692
        %730 = vmatpush.msra.mxu0 %v691
        %731 = vmatpush.msra.mxu0 %v690
        %732 = vmatpush.msra.mxu0 %v689
        %733 = vmatpush.msra.mxu0 %v688
        %734 = vmatpush.msra.mxu0 %v687
        %735 = vmatmul.f32.gmra.mxu0 %v696
        %v736 = vpop.f32.mrf.mxu0
        %v737 = vadd.f32 0.0, %v736
        %738 = vmatmul.f32.gmra.mxu0 %v699
        %v739 = vpop.f32.mrf.mxu0
        %v740 = vadd.f32 0.0, %v739
        %741 = vmatmul.f32.gmra.mxu0 %v702
        %v742 = vpop.f32.mrf.mxu0
        %v743 = vadd.f32 0.0, %v742
        %744 = vmatmul.f32.gmra.mxu0 %v705
        %v745 = vpop.f32.mrf.mxu0
        %v746 = vadd.f32 0.0, %v745
        %747 = vmatmul.f32.gmra.mxu0 %v708
        %v748 = vpop.f32.mrf.mxu0
        %v749 = vadd.f32 0.0, %v748
        %750 = vmatmul.f32.gmra.mxu0 %v711
        %v751 = vpop.f32.mrf.mxu0
        %v752 = vadd.f32 0.0, %v751
        %753 = vmatmul.f32.gmra.mxu0 %v714
        %v754 = vpop.f32.mrf.mxu0
        %v755 = vadd.f32 0.0, %v754
        %756 = vmatmul.f32.gmra.mxu0 %v717
        %v757 = vpop.f32.mrf.mxu0
        %v758 = vadd.f32 0.0, %v757
        %759 = vdwg.mxu0
        %v760 = vadd.f32 %v670, %v737
        %v761 = vadd.f32 %v671, %v740
        %v762 = vadd.f32 %v672, %v743
        %v763 = vadd.f32 %v673, %v746
        %v764 = vadd.f32 %v674, %v749
        %v765 = vadd.f32 %v675, %v752
        %v766 = vadd.f32 %v676, %v755
        %v767 = vadd.f32 %v677, %v758
        %s768 = scalar_lea.vmem %s237, 32
        %v769 = vld [vmem:[%s768] sm:$0xff]
        %v770 = vld [vmem:[%s768 + $0x10] sm:$0xff]
        %v771 = vld [vmem:[%s768 + $0x20] sm:$0xff]
        %v772 = vld [vmem:[%s768 + $0x30] sm:$0xff]
        %v773 = vld [vmem:[%s768 + $0x40] sm:$0xff]
        %v774 = vld [vmem:[%s768 + $0x50] sm:$0xff]
        %v775 = vld [vmem:[%s768 + $0x60] sm:$0xff]
        %v776 = vld [vmem:[%s768 + $0x70] sm:$0xff]
        %s777 = scalar_lea.vmem %s1, 384
        %v778 = vld [vmem:[%s777] sm:$0xff]
        %v779 = vld [vmem:[%s777 + $0x8] sm:$0xff]
        %v780 = vld [vmem:[%s777 + $0x10] sm:$0xff]
        %v781 = vld [vmem:[%s777 + $0x18] sm:$0xff]
        %v782 = vld [vmem:[%s777 + $0x20] sm:$0xff]
        %v783 = vld [vmem:[%s777 + $0x28] sm:$0xff]
        %v784 = vld [vmem:[%s777 + $0x30] sm:$0xff]
        %v785 = vld [vmem:[%s777 + $0x38] sm:$0xff]
        %v787 = vsel %vm276, %v769, 0
        %v790 = vsel %vm276, %v770, 0
        %v793 = vsel %vm276, %v771, 0
        %v796 = vsel %vm276, %v772, 0
        %v799 = vsel %vm276, %v773, 0
        %v802 = vsel %vm276, %v774, 0
        %v805 = vsel %vm276, %v775, 0
        %v808 = vsel %vm276, %v776, 0
        %810 = vmatpush.msra.mxu0 0.0
        %811 = vmatpush.msra.mxu0 0.0
        %812 = vmatpush.msra.mxu0 0.0
        %813 = vmatpush.msra.mxu0 0.0
        %814 = vmatpush.msra.mxu0 0.0
        %815 = vmatpush.msra.mxu0 0.0
        %816 = vmatpush.msra.mxu0 0.0
        %817 = vmatpush.msra.mxu0 0.0
        %818 = vmatpush.msra.mxu0 %v785
        %819 = vmatpush.msra.mxu0 %v784
        %820 = vmatpush.msra.mxu0 %v783
        %821 = vmatpush.msra.mxu0 %v782
        %822 = vmatpush.msra.mxu0 %v781
        %823 = vmatpush.msra.mxu0 %v780
        %824 = vmatpush.msra.mxu0 %v779
        %825 = vmatpush.msra.mxu0 %v778
        %826 = vmatmul.f32.gmra.mxu0 %v787
        %v827 = vpop.f32.mrf.mxu0
        %v828 = vadd.f32 0.0, %v827
        %829 = vmatmul.f32.gmra.mxu0 %v790
        %v830 = vpop.f32.mrf.mxu0
        %v831 = vadd.f32 0.0, %v830
        %832 = vmatmul.f32.gmra.mxu0 %v793
        %v833 = vpop.f32.mrf.mxu0
        %v834 = vadd.f32 0.0, %v833
        %835 = vmatmul.f32.gmra.mxu0 %v796
        %v836 = vpop.f32.mrf.mxu0
        %v837 = vadd.f32 0.0, %v836
        %838 = vmatmul.f32.gmra.mxu0 %v799
        %v839 = vpop.f32.mrf.mxu0
        %v840 = vadd.f32 0.0, %v839
        %841 = vmatmul.f32.gmra.mxu0 %v802
        %v842 = vpop.f32.mrf.mxu0
        %v843 = vadd.f32 0.0, %v842
        %844 = vmatmul.f32.gmra.mxu0 %v805
        %v845 = vpop.f32.mrf.mxu0
        %v846 = vadd.f32 0.0, %v845
        %847 = vmatmul.f32.gmra.mxu0 %v808
        %v848 = vpop.f32.mrf.mxu0
        %v849 = vadd.f32 0.0, %v848
        %850 = vdwg.mxu0
        %v851 = vadd.f32 %v760, %v828
        %v852 = vadd.f32 %v761, %v831
        %v853 = vadd.f32 %v762, %v834
        %v854 = vadd.f32 %v763, %v837
        %v855 = vadd.f32 %v764, %v840
        %v856 = vadd.f32 %v765, %v843
        %v857 = vadd.f32 %v766, %v846
        %v858 = vadd.f32 %v767, %v849
        %v859 = vld [vmem:[%s768 + $0x1] sm:$0xff]
        %v860 = vld [vmem:[%s768 + $0x11] sm:$0xff]
        %v861 = vld [vmem:[%s768 + $0x21] sm:$0xff]
        %v862 = vld [vmem:[%s768 + $0x31] sm:$0xff]
        %v863 = vld [vmem:[%s768 + $0x41] sm:$0xff]
        %v864 = vld [vmem:[%s768 + $0x51] sm:$0xff]
        %v865 = vld [vmem:[%s768 + $0x61] sm:$0xff]
        %v866 = vld [vmem:[%s768 + $0x71] sm:$0xff]
        %s867 = scalar_lea.vmem %s1, 448
        %v868 = vld [vmem:[%s867] sm:$0xff]
        %v869 = vld [vmem:[%s867 + $0x8] sm:$0xff]
        %v870 = vld [vmem:[%s867 + $0x10] sm:$0xff]
        %v871 = vld [vmem:[%s867 + $0x18] sm:$0xff]
        %v872 = vld [vmem:[%s867 + $0x20] sm:$0xff]
        %v873 = vld [vmem:[%s867 + $0x28] sm:$0xff]
        %v874 = vld [vmem:[%s867 + $0x30] sm:$0xff]
        %v875 = vld [vmem:[%s867 + $0x38] sm:$0xff]
        %v877 = vsel %vm276, %v859, 0
        %v880 = vsel %vm276, %v860, 0
        %v883 = vsel %vm276, %v861, 0
        %v886 = vsel %vm276, %v862, 0
        %v889 = vsel %vm276, %v863, 0
        %v892 = vsel %vm276, %v864, 0
        %v895 = vsel %vm276, %v865, 0
        %v898 = vsel %vm276, %v866, 0
        %900 = vmatpush.msra.mxu0 0.0
        %901 = vmatpush.msra.mxu0 0.0
        %902 = vmatpush.msra.mxu0 0.0
        %903 = vmatpush.msra.mxu0 0.0
        %904 = vmatpush.msra.mxu0 0.0
        %905 = vmatpush.msra.mxu0 0.0
        %906 = vmatpush.msra.mxu0 0.0
        %907 = vmatpush.msra.mxu0 0.0
        %908 = vmatpush.msra.mxu0 %v875
        %909 = vmatpush.msra.mxu0 %v874
        %910 = vmatpush.msra.mxu0 %v873
        %911 = vmatpush.msra.mxu0 %v872
        %912 = vmatpush.msra.mxu0 %v871
        %913 = vmatpush.msra.mxu0 %v870
        %914 = vmatpush.msra.mxu0 %v869
        %915 = vmatpush.msra.mxu0 %v868
        %916 = vmatmul.f32.gmra.mxu0 %v877
        %v917 = vpop.f32.mrf.mxu0
        %v918 = vadd.f32 0.0, %v917
        %919 = vmatmul.f32.gmra.mxu0 %v880
        %v920 = vpop.f32.mrf.mxu0
        %v921 = vadd.f32 0.0, %v920
        %922 = vmatmul.f32.gmra.mxu0 %v883
        %v923 = vpop.f32.mrf.mxu0
        %v924 = vadd.f32 0.0, %v923
        %925 = vmatmul.f32.gmra.mxu0 %v886
        %v926 = vpop.f32.mrf.mxu0
        %v927 = vadd.f32 0.0, %v926
        %928 = vmatmul.f32.gmra.mxu0 %v889
        %v929 = vpop.f32.mrf.mxu0
        %v930 = vadd.f32 0.0, %v929
        %931 = vmatmul.f32.gmra.mxu0 %v892
        %v932 = vpop.f32.mrf.mxu0
        %v933 = vadd.f32 0.0, %v932
        %934 = vmatmul.f32.gmra.mxu0 %v895
        %v935 = vpop.f32.mrf.mxu0
        %v936 = vadd.f32 0.0, %v935
        %937 = vmatmul.f32.gmra.mxu0 %v898
        %v938 = vpop.f32.mrf.mxu0
        %v939 = vadd.f32 0.0, %v938
        %940 = vdwg.mxu0
        %v941 = vadd.f32 %v851, %v918
        %v942 = vadd.f32 %v852, %v921
        %v943 = vadd.f32 %v853, %v924
        %v944 = vadd.f32 %v854, %v927
        %v945 = vadd.f32 %v855, %v930
        %v946 = vadd.f32 %v856, %v933
        %v947 = vadd.f32 %v857, %v936
        %v948 = vadd.f32 %v858, %v939
        %v949 = vld [vmem:[%s768 + $0x2] sm:$0xff]
        %v950 = vld [vmem:[%s768 + $0x12] sm:$0xff]
        %v951 = vld [vmem:[%s768 + $0x22] sm:$0xff]
        %v952 = vld [vmem:[%s768 + $0x32] sm:$0xff]
        %v953 = vld [vmem:[%s768 + $0x42] sm:$0xff]
        %v954 = vld [vmem:[%s768 + $0x52] sm:$0xff]
        %v955 = vld [vmem:[%s768 + $0x62] sm:$0xff]
        %v956 = vld [vmem:[%s768 + $0x72] sm:$0xff]
        %s957 = scalar_lea.vmem %s1, 512
        %v958 = vld [vmem:[%s957] sm:$0xff]
        %v959 = vld [vmem:[%s957 + $0x8] sm:$0xff]
        %v960 = vld [vmem:[%s957 + $0x10] sm:$0xff]
        %v961 = vld [vmem:[%s957 + $0x18] sm:$0xff]
        %v962 = vld [vmem:[%s957 + $0x20] sm:$0xff]
        %v963 = vld [vmem:[%s957 + $0x28] sm:$0xff]
        %v964 = vld [vmem:[%s957 + $0x30] sm:$0xff]
        %v965 = vld [vmem:[%s957 + $0x38] sm:$0xff]
        %v967 = vsel %vm276, %v949, 0
        %v970 = vsel %vm276, %v950, 0
        %v973 = vsel %vm276, %v951, 0
        %v976 = vsel %vm276, %v952, 0
        %v979 = vsel %vm276, %v953, 0
        %v982 = vsel %vm276, %v954, 0
        %v985 = vsel %vm276, %v955, 0
        %v988 = vsel %vm276, %v956, 0
        %990 = vmatpush.msra.mxu0 0.0
        %991 = vmatpush.msra.mxu0 0.0
        %992 = vmatpush.msra.mxu0 0.0
        %993 = vmatpush.msra.mxu0 0.0
        %994 = vmatpush.msra.mxu0 0.0
        %995 = vmatpush.msra.mxu0 0.0
        %996 = vmatpush.msra.mxu0 0.0
        %997 = vmatpush.msra.mxu0 0.0
        %998 = vmatpush.msra.mxu0 %v965
        %999 = vmatpush.msra.mxu0 %v964
        %1000 = vmatpush.msra.mxu0 %v963
        %1001 = vmatpush.msra.mxu0 %v962
        %1002 = vmatpush.msra.mxu0 %v961
        %1003 = vmatpush.msra.mxu0 %v960
        %1004 = vmatpush.msra.mxu0 %v959
        %1005 = vmatpush.msra.mxu0 %v958
        %1006 = vmatmul.f32.gmra.mxu0 %v967
        %v1007 = vpop.f32.mrf.mxu0
        %v1008 = vadd.f32 0.0, %v1007
        %1009 = vmatmul.f32.gmra.mxu0 %v970
        %v1010 = vpop.f32.mrf.mxu0
        %v1011 = vadd.f32 0.0, %v1010
        %1012 = vmatmul.f32.gmra.mxu0 %v973
        %v1013 = vpop.f32.mrf.mxu0
        %v1014 = vadd.f32 0.0, %v1013
        %1015 = vmatmul.f32.gmra.mxu0 %v976
        %v1016 = vpop.f32.mrf.mxu0
        %v1017 = vadd.f32 0.0, %v1016
        %1018 = vmatmul.f32.gmra.mxu0 %v979
        %v1019 = vpop.f32.mrf.mxu0
        %v1020 = vadd.f32 0.0, %v1019
        %1021 = vmatmul.f32.gmra.mxu0 %v982
        %v1022 = vpop.f32.mrf.mxu0
        %v1023 = vadd.f32 0.0, %v1022
        %1024 = vmatmul.f32.gmra.mxu0 %v985
        %v1025 = vpop.f32.mrf.mxu0
        %v1026 = vadd.f32 0.0, %v1025
        %1027 = vmatmul.f32.gmra.mxu0 %v988
        %v1028 = vpop.f32.mrf.mxu0
        %v1029 = vadd.f32 0.0, %v1028
        %1030 = vdwg.mxu0
        %v1031 = vadd.f32 %v941, %v1008
        %v1032 = vadd.f32 %v942, %v1011
        %v1033 = vadd.f32 %v943, %v1014
        %v1034 = vadd.f32 %v944, %v1017
        %v1035 = vadd.f32 %v945, %v1020
        %v1036 = vadd.f32 %v946, %v1023
        %v1037 = vadd.f32 %v947, %v1026
        %v1038 = vadd.f32 %v948, %v1029
        %v1039 = vld [vmem:[%s2] sm:$0x1]
        %v1041 = vperm.slane %v1039, 0
        %v1043 = vmul.f32 %v1031, %v1041
        %v1044 = vmul.f32 %v1032, %v1041
        %v1045 = vmul.f32 %v1033, %v1041
        %v1046 = vmul.f32 %v1034, %v1041
        %v1047 = vmul.f32 %v1035, %v1041
        %v1048 = vmul.f32 %v1036, %v1041
        %v1049 = vmul.f32 %v1037, %v1041
        %v1050 = vmul.f32 %v1038, %v1041
        %v1051 = vld [vmem:[%s3] sm:$0x1]
        %v1053 = vperm.slane %v1051, 0
        %v1055 = vadd.f32 %v1043, %v1053
        %v1056 = vadd.f32 %v1044, %v1053
        %v1057 = vadd.f32 %v1045, %v1053
        %v1058 = vadd.f32 %v1046, %v1053
        %v1059 = vadd.f32 %v1047, %v1053
        %v1060 = vadd.f32 %v1048, %v1053
        %v1061 = vadd.f32 %v1049, %v1053
        %v1062 = vadd.f32 %v1050, %v1053
        %v1063 = vld [vmem:[%s242] sm:$0xff]
        %v1064 = vld [vmem:[%s242 + $0x8] sm:$0xff]
        %v1065 = vld [vmem:[%s242 + $0x10] sm:$0xff]
        %v1066 = vld [vmem:[%s242 + $0x18] sm:$0xff]
        %v1067 = vld [vmem:[%s242 + $0x20] sm:$0xff]
        %v1068 = vld [vmem:[%s242 + $0x28] sm:$0xff]
        %v1069 = vld [vmem:[%s242 + $0x30] sm:$0xff]
        %v1070 = vld [vmem:[%s242 + $0x38] sm:$0xff]
        %v1071 = vadd.f32 %v1055, %v1063
        %v1072 = vadd.f32 %v1056, %v1064
        %v1073 = vadd.f32 %v1057, %v1065
        %v1074 = vadd.f32 %v1058, %v1066
        %v1075 = vadd.f32 %v1059, %v1067
        %v1076 = vadd.f32 %v1060, %v1068
        %v1077 = vadd.f32 %v1061, %v1069
        %v1078 = vadd.f32 %v1062, %v1070
        %v1079 = vmax.f32 %v1071, 0.0
        %v1080 = vmax.f32 %v1072, 0.0
        %v1081 = vmax.f32 %v1073, 0.0
        %v1082 = vmax.f32 %v1074, 0.0
        %v1083 = vmax.f32 %v1075, 0.0
        %v1084 = vmax.f32 %v1076, 0.0
        %v1085 = vmax.f32 %v1077, 0.0
        %v1086 = vmax.f32 %v1078, 0.0
        %1087 = vst.msk [vmem:[%s232] sm:$0xff] %vm276, %v1079
        %1088 = vst.msk [vmem:[%s232 + $0x8] sm:$0xff] %vm276, %v1080
        %1089 = vst.msk [vmem:[%s232 + $0x10] sm:$0xff] %vm276, %v1081
        %1090 = vst.msk [vmem:[%s232 + $0x18] sm:$0xff] %vm276, %v1082
        %1091 = vst.msk [vmem:[%s232 + $0x20] sm:$0xff] %vm276, %v1083
        %1092 = vst.msk [vmem:[%s232 + $0x28] sm:$0xff] %vm276, %v1084
        %1093 = vst.msk [vmem:[%s232 + $0x30] sm:$0xff] %vm276, %v1085
        %1094 = vst.msk [vmem:[%s232 + $0x38] sm:$0xff] %vm276, %v1086
        %s1095 = sand.u32 %s142, 1
        %s1096 = scalar_lea.sflag [#allocation3], %s1095
        %s1097 = sand.u32 %s142, 1
        %s1098 = smul.addr %s1097, 64
        %s1099 = scalar_lea.vmem [#allocation2], %s1098
        // Predicated region
        $region41: #{resnet_encoder_forward.9} parent=39 // pred_check
          %p1100 = pneg %p152
        $region42: #{resnet_encoder_forward.9} parent=39 // pred_check_branch
          %1102 = sbr.rel (%p1100) target = $region44
        $region43: #{resnet_encoder_forward.9} parent=39 // pred_region
          %1104 = vsyncadd %s1096, 0
          %s1105 = smul.addr %s19, 8
          %s1106 = smul.addr %s1105, 8
          %s1107 = scalar_lea.hbm %s5, %s1106
          %s1108 = sshll.u32 %s1099, 4
          %s1109 = int_to_ptr.vmem [resolvable:$true] %s1108
          %s1110 = sshll.u32 %s1107, 4
          %s1111 = int_to_ptr.hbm [resolvable:$true] %s1110
          %1116 = dma.vmem_to_hbm [thread:$0]  %s1109, 1024, %s1111, %s1096, 128, 128, 8
        $region44: #{resnet_encoder_forward.9} parent=39 // pred_fallthru
          _
      $region40: #{resnet_encoder_forward.9} parent=5 // pred_fallthru
        _
      %p1117 = scmp.le.s32.totalorder 2, %s14
      // Predicated region
      $region45: #{resnet_encoder_forward.9} parent=5 // pred_check
        %p1118 = pneg %p1117
      $region46: #{resnet_encoder_forward.9} parent=5 // pred_check_branch
        %1120 = sbr.rel (%p1118) target = $region48
      $region47: #{resnet_encoder_forward.9} parent=5 // pred_region
        %s1121 = ssub.s32 %s14, 2
        // Predicated region
        $region49: #{resnet_encoder_forward.9} parent=47 // pred_check
          %p1122 = pneg %p158
        $region50: #{resnet_encoder_forward.9} parent=47 // pred_check_branch
          %1124 = sbr.rel (%p1122) target = $region52
        $region51: #{resnet_encoder_forward.9} parent=47 // pred_region
          %s1125 = sand.u32 %s143, 1
          %s1126 = scalar_lea.sflag [#allocation3], %s1125
          %s1127 = sand.u32 %s143, 1
          %s1128 = smul.addr %s1127, 64
          %s1129 = scalar_lea.vmem [#allocation2], %s1128
          %1131 = dma.done %s1126, 1024
        $region52: #{resnet_encoder_forward.9} parent=47 // pred_fallthru
          _
      $region48: #{resnet_encoder_forward.9} parent=5 // pred_fallthru
        _
    $region6: #{resnet_encoder_forward.9} parent=1 // loop_footer
      %s18 = sadd.s32 1, %s14
    $region7: #{resnet_encoder_forward.9} parent=1 // loop_footer_branch
      %13 = sbr.rel target = $region3
    $region8: #{resnet_encoder_forward.9} parent=1 // loop_exit
      _
    %1132 = vsyncpa [#allocation3], 1
    %s1133 = scalar_lea.sflag [#allocation3], 1
    %1134 = vsyncpa %s1133, 1

</llo_original>
